<compile_context>
chip_gen: v5e
topology: v5e:2x2
jax: 0.10.0
libtpu: 0.0.40
codegen_flags: <defaults>
</compile_context>

<pallas_src>
import functools
import math

import jax
import jax.numpy as jnp
from jax import lax
from jax.experimental import pallas as pl
from jax.experimental.pallas import tpu as pltpu


PARAM_ORDER = [
    "wqkv", "bqkv", "wo_s", "bo_s",
    "wq_c", "bq_c", "wkv_c", "bkv_c", "wo_c", "bo_c",
    "w1", "b1", "w2", "b2",
    "ln_g", "ln_b",
]
# weights that feed the MXU -> fed as bf16 (accumulation stays f32)
MATMUL_WEIGHTS = ("wqkv", "wo_s", "wq_c", "wkv_c", "wo_c", "w1", "w2")
MM_DT = jnp.bfloat16


def _layernorm(y, g, b, eps=1e-5):
    mu = jnp.mean(y, axis=-1, keepdims=True)
    var = jnp.mean(jnp.square(y - mu), axis=-1, keepdims=True)
    return (y - mu) * lax.rsqrt(var + eps) * g + b


def _softmax(s):
    # rows already masked with -1e30; everything here stays f32
    s = s - jnp.max(s, axis=-1, keepdims=True)
    p = jnp.exp(s)
    return p * pl.reciprocal(jnp.sum(p, axis=-1, keepdims=True), approx=True)


def _split_heads(x2d, num_heads, dh):
    # (rows, H*dh) -> (H, rows, dh): head-batched layout for batched einsums
    rows = x2d.shape[0]
    return pltpu.einshape("shd->hsd", x2d.reshape(rows, num_heads, dh))


def _merge_heads(x3d):
    # (H, rows, dh) -> (rows, H*dh)
    h, rows, dh = x3d.shape
    return pltpu.einshape("hsd->shd", x3d).reshape(rows, h * dh)


def _mha(q2d, k2d, v2d, mask, num_heads, dh, scale):
    """q2d: (S, D); k2d/v2d: (T, D); mask: (S, T).  One head-batched matmul per
    stage (no per-head loops, no transposed operands, no lane concatenate)."""
    qh = _split_heads(q2d, num_heads, dh).astype(MM_DT)      # (H, S, dh)
    kh = _split_heads(k2d, num_heads, dh).astype(MM_DT)      # (H, T, dh)
    vh = _split_heads(v2d, num_heads, dh).astype(MM_DT)      # (H, T, dh)
    s = jnp.einsum("hqd,hkd->hqk", qh, kh,
                   preferred_element_type=jnp.float32) * scale   # (H, S, T) f32
    s = jnp.where(mask[None], s, -1e30)
    p = _softmax(s)
    ctx = jnp.einsum("hqk,hkd->hqd", p.astype(MM_DT), vh,
                     preferred_element_type=jnp.float32)          # (H, S, dh)
    return _merge_heads(ctx)                                      # (S, D)


def fused_decoder_kernel(x_ref, mem_ref,
                         wqkv_ref, bqkv_ref, wo_s_ref, bo_s_ref,
                         wq_c_ref, bq_c_ref, wkv_c_ref, bkv_c_ref,
                         wo_c_ref, bo_c_ref,
                         w1_ref, b1_ref, w2_ref, b2_ref,
                         ln_g_ref, ln_b_ref,
                         out_ref, act_ref,
                         *, num_heads, seq_length, memory_len):
    layer = pl.program_id(1)

    # layer 0: pull the activation block into the VMEM-resident accumulator
    @pl.when(layer == 0)
    def _():
        act_ref[...] = x_ref[...].astype(jnp.float32)

    Bt, S, D = act_ref.shape
    M = mem_ref.shape[1]
    H = num_heads
    dh = D // H
    scale = 1.0 / math.sqrt(dh)

    x = act_ref[...].reshape(Bt * S, D)          # (Bt*S, D) f32
    mem = mem_ref[...]                           # (Bt, M, D) f32

    ln_g = ln_g_ref[0]                           # (3, D)
    ln_b = ln_b_ref[0]

    # masks: built once per grid step, shared by all heads / batch elements
    row = lax.broadcasted_iota(jnp.int32, (S, S), 0)
    col = lax.broadcasted_iota(jnp.int32, (S, S), 1)
    self_mask = (col <= row) & (col < seq_length)
    mcol = lax.broadcasted_iota(jnp.int32, (S, M), 1)
    mem_mask = mcol < memory_len

    # ---------------- causal self-attention ----------------
    qkv = (jnp.dot(x.astype(MM_DT), wqkv_ref[0],
                   preferred_element_type=jnp.float32) + bqkv_ref[0])  # (Bt*S, 3D)
    q = qkv[:, :D].reshape(Bt, S, D)
    k = qkv[:, D:2 * D].reshape(Bt, S, D)
    v = qkv[:, 2 * D:].reshape(Bt, S, D)

    ctx = [_mha(q[b], k[b], v[b], self_mask, H, dh, scale) for b in range(Bt)]
    ctx = jnp.concatenate(ctx, axis=0) if Bt > 1 else ctx[0]           # (Bt*S, D)
    sa = (jnp.dot(ctx.astype(MM_DT), wo_s_ref[0],
                  preferred_element_type=jnp.float32) + bo_s_ref[0])
    x = _layernorm(x + sa, ln_g[0:1], ln_b[0:1])

    # ---------------- cross-attention over memory ----------------
    qc = (jnp.dot(x.astype(MM_DT), wq_c_ref[0],
                  preferred_element_type=jnp.float32) + bq_c_ref[0])   # (Bt*S, D)
    kvc = (jnp.dot(mem.reshape(Bt * M, D).astype(MM_DT), wkv_c_ref[0],
                   preferred_element_type=jnp.float32) + bkv_c_ref[0])  # (Bt*M, 2D)
    qc = qc.reshape(Bt, S, D)
    kc = kvc[:, :D].reshape(Bt, M, D)
    vc = kvc[:, D:].reshape(Bt, M, D)

    ctx = [_mha(qc[b], kc[b], vc[b], mem_mask, H, dh, scale) for b in range(Bt)]
    ctx = jnp.concatenate(ctx, axis=0) if Bt > 1 else ctx[0]
    ca = (jnp.dot(ctx.astype(MM_DT), wo_c_ref[0],
                  preferred_element_type=jnp.float32) + bo_c_ref[0])
    x = _layernorm(x + ca, ln_g[1:2], ln_b[1:2])

    # ---------------- feed-forward (ReLU) ----------------
    h1 = (jnp.dot(x.astype(MM_DT), w1_ref[0],
                  preferred_element_type=jnp.float32) + b1_ref[0])
    h1 = jnp.maximum(h1, 0.0)
    ff = (jnp.dot(h1.astype(MM_DT), w2_ref[0],
                  preferred_element_type=jnp.float32) + b2_ref[0])
    x = _layernorm(x + ff, ln_g[2:3], ln_b[2:3])

    x = x.reshape(Bt, S, D)
    act_ref[...] = x                               # stays resident for layer l+1

    # last layer: flush the resident activation to the output block
    @pl.when(layer == pl.num_programs(1) - 1)
    def _():
        out_ref[...] = x.astype(out_ref.dtype)


def transformer_decoder_forward(src, seq_length, memory, memory_len, params,
                                *, num_heads, block_b=None):
    # TODO(synk): memory=None (decoder-only) path would skip cross-attention;
    # this kernel always consumes `memory` (masked to memory_len).
    B, S, D = src.shape
    M = memory.shape[1]
    L = len(params)
    if block_b is None:
        block_b = min(B, max(1, 256 // max(S, 1)))   # aim for >=256 matmul rows
    assert B % block_b == 0, "block_b must divide batch"
    Bt = block_b

    # stack per-layer params along a leading L axis; matmul weights -> bf16
    stacked = {}
    for name in PARAM_ORDER:
        w = jnp.stack([p[name] for p in params])
        if name in MATMUL_WEIGHTS:
            w = w.astype(MM_DT)
        stacked[name] = w
    weights = [stacked[name] for name in PARAM_ORDER]

    def w_spec(arr):
        nd = arr.ndim
        return pl.BlockSpec((1,) + arr.shape[1:],
                            lambda b, l, _nd=nd: (l,) + (0,) * (_nd - 1))

    kern = functools.partial(fused_decoder_kernel, num_heads=num_heads,
                             seq_length=seq_length, memory_len=memory_len)

    in_specs = ([pl.BlockSpec((Bt, S, D), lambda b, l: (b, 0, 0)),
                 pl.BlockSpec((Bt, M, D), lambda b, l: (b, 0, 0))]
                + [w_spec(w) for w in weights])

    return pl.pallas_call(
        kern,
        out_shape=jax.ShapeDtypeStruct((B, S, D), jnp.float32),
        grid_spec=pltpu.PrefetchScalarGridSpec(
            num_scalar_prefetch=0,
            grid=(B // Bt, L),
            in_specs=in_specs,
            out_specs=pl.BlockSpec((Bt, S, D), lambda b, l: (b, 0, 0)),
            scratch_shapes=[pltpu.VMEM((Bt, S, D), jnp.float32)],
        ),
        compiler_params=pltpu.CompilerParams(
            dimension_semantics=("parallel", "arbitrary"),
            vmem_limit_bytes=48 * 1024 * 1024,
        ),
    )(src, memory, *weights)


# ---------------- pure-JAX reference (f32, for correctness check) ----------------
def _decoder_layer_ref(x, mem, p, num_heads, seq_length, memory_len):
    S, D = x.shape[1], x.shape[2]
    M = mem.shape[1]
    H = num_heads
    dh = D // H
    scale = 1.0 / math.sqrt(dh)

    def mha(q, k, v, mask):
        qh = q.reshape(q.shape[0], -1, H, dh)
        kh = k.reshape(k.shape[0], -1, H, dh)
        vh = v.reshape(v.shape[0], -1, H, dh)
        s = jnp.einsum("bqhd,bkhd->bhqk", qh, kh) * scale
        s = jnp.where(mask[None, None], s, -1e30)
        p_ = jax.nn.softmax(s, axis=-1)
        o = jnp.einsum("bhqk,bkhd->bqhd", p_, vh)
        return o.reshape(o.shape[0], o.shape[1], D)

    def ln(y, g, b):
        mu = jnp.mean(y, -1, keepdims=True)
        var = jnp.mean(jnp.square(y - mu), -1, keepdims=True)
        return (y - mu) * lax.rsqrt(var + 1e-5) * g + b

    qkv = x @ p["wqkv"] + p["bqkv"]
    q, k, v = qkv[..., :D], qkv[..., D:2 * D], qkv[..., 2 * D:]
    row = lax.broadcasted_iota(jnp.int32, (S, S), 0)
    col = lax.broadcasted_iota(jnp.int32, (S, S), 1)
    sa = mha(q, k, v, (col <= row) & (col < seq_length))
    sa = sa @ p["wo_s"] + p["bo_s"]
    x = ln(x + sa, p["ln_g"][0], p["ln_b"][0])

    qc = x @ p["wq_c"] + p["bq_c"]
    kvc = mem @ p["wkv_c"] + p["bkv_c"]
    kc, vc = kvc[..., :D], kvc[..., D:]
    mcol = lax.broadcasted_iota(jnp.int32, (S, M), 1)
    ca = mha(qc, kc, vc, mcol < memory_len)
    ca = ca @ p["wo_c"] + p["bo_c"]
    x = ln(x + ca, p["ln_g"][1], p["ln_b"][1])

    ff = jnp.maximum(x @ p["w1"] + p["b1"], 0.0) @ p["w2"] + p["b2"]
    return ln(x + ff, p["ln_g"][2], p["ln_b"][2])


def transformer_decoder_ref(src, seq_length, memory, memory_len, params, *, num_heads):
    out = src
    for p in params:
        out = _decoder_layer_ref(out, memory, p, num_heads, seq_length, memory_len)
    return out


# ---------------- deterministic parameter init ----------------
def init_decoder_params(key, num_layers, d_model, d_ff):
    layers = []
    for i in range(num_layers):
        keys = jax.random.split(jax.random.fold_in(key, i), 14)

        def nrm(k, shape, scale=0.02):
            return scale * jax.random.normal(k, shape, jnp.float32)

        p = dict(
            wqkv=nrm(keys[0], (d_model, 3 * d_model)),
            bqkv=nrm(keys[1], (1, 3 * d_model)),
            wo_s=nrm(keys[2], (d_model, d_model)),
            bo_s=nrm(keys[3], (1, d_model)),
            wq_c=nrm(keys[4], (d_model, d_model)),
            bq_c=nrm(keys[5], (1, d_model)),
            wkv_c=nrm(keys[6], (d_model, 2 * d_model)),
            bkv_c=nrm(keys[7], (1, 2 * d_model)),
            wo_c=nrm(keys[8], (d_model, d_model)),
            bo_c=nrm(keys[9], (1, d_model)),
            w1=nrm(keys[10], (d_model, d_ff)),
            b1=nrm(keys[11], (1, d_ff)),
            w2=nrm(keys[12], (d_ff, d_model)),
            b2=nrm(keys[13], (1, d_model)),
            ln_g=jnp.ones((3, d_model), jnp.float32),
            ln_b=jnp.zeros((3, d_model), jnp.float32),
        )
        layers.append(p)
    return layers


if __name__ == "__main__":
    # batch, seq, mem-seq, d_model (lane-dense), heads, ffn, layers
    B, S, M, D, H, F, L = 4, 8, 8, 128, 4, 256, 2
    key = jax.random.PRNGKey(0)
    kx, km, kp = jax.random.split(key, 3)
    src = jax.random.normal(kx, (B, S, D), jnp.float32)
    memory = jax.random.normal(km, (B, M, D), jnp.float32)
    params = init_decoder_params(kp, L, D, F)

    out = transformer_decoder_forward(src, seq_length=S, memory=memory,
                                      memory_len=M, params=params,
                                      num_heads=H, block_b=2)
    out = jax.block_until_ready(out)

    ref = transformer_decoder_ref(src, seq_length=S, memory=memory,
                                  memory_len=M, params=params, num_heads=H)
    ref = jax.block_until_ready(ref)

    assert out.shape == (B, S, D)
    err = float(jnp.max(jnp.abs(out - ref)))
    # bf16 matmul operands (f32 accumulation) vs. pure-f32 reference
    assert bool(jnp.allclose(out, ref, atol=5e-2, rtol=5e-2)), f"max abs diff {err}"
    print("KERNEL_OK")
</pallas_src>

<mosaic_0001>
module attributes {stable_mosaic.version = 11 : i64} {
  func.func @fused_decoder_kernel(%arg0: i32, %arg1: i32, %arg2: memref<2x8x128xf32, #tpu.memory_space<vmem>>, %arg3: memref<2x8x128xf32, #tpu.memory_space<vmem>>, %arg4: memref<1x128x384xbf16, #tpu.memory_space<vmem>>, %arg5: memref<1x1x384xf32, #tpu.memory_space<vmem>>, %arg6: memref<1x128x128xbf16, #tpu.memory_space<vmem>>, %arg7: memref<1x1x128xf32, #tpu.memory_space<vmem>>, %arg8: memref<1x128x128xbf16, #tpu.memory_space<vmem>>, %arg9: memref<1x1x128xf32, #tpu.memory_space<vmem>>, %arg10: memref<1x128x256xbf16, #tpu.memory_space<vmem>>, %arg11: memref<1x1x256xf32, #tpu.memory_space<vmem>>, %arg12: memref<1x128x128xbf16, #tpu.memory_space<vmem>>, %arg13: memref<1x1x128xf32, #tpu.memory_space<vmem>>, %arg14: memref<1x128x256xbf16, #tpu.memory_space<vmem>>, %arg15: memref<1x1x256xf32, #tpu.memory_space<vmem>>, %arg16: memref<1x256x128xbf16, #tpu.memory_space<vmem>>, %arg17: memref<1x1x128xf32, #tpu.memory_space<vmem>>, %arg18: memref<1x3x128xf32, #tpu.memory_space<vmem>>, %arg19: memref<1x3x128xf32, #tpu.memory_space<vmem>>, %arg20: memref<2x8x128xf32, #tpu.memory_space<vmem>>, %arg21: memref<2x8x128xf32, #tpu.memory_space<vmem>>) attributes {dimension_semantics = [#tpu.dimension_semantics<parallel>, #tpu.dimension_semantics<arbitrary>], iteration_bounds = array<i64: 2, 2>, scalar_prefetch = 0 : i64, scratch_operands = 1 : i64, tpu.core_type = #tpu.core_type<tc>, window_params = [{transform_indices = @transform_0, window_bounds = array<i64: 2, 8, 128>}, {transform_indices = @transform_1, window_bounds = array<i64: 2, 8, 128>}, {transform_indices = @transform_2, window_bounds = array<i64: 1, 128, 384>}, {transform_indices = @transform_3, window_bounds = array<i64: 1, 1, 384>}, {transform_indices = @transform_4, window_bounds = array<i64: 1, 128, 128>}, {transform_indices = @transform_5, window_bounds = array<i64: 1, 1, 128>}, {transform_indices = @transform_6, window_bounds = array<i64: 1, 128, 128>}, {transform_indices = @transform_7, window_bounds = array<i64: 1, 1, 128>}, {transform_indices = @transform_8, window_bounds = array<i64: 1, 128, 256>}, {transform_indices = @transform_9, window_bounds = array<i64: 1, 1, 256>}, {transform_indices = @transform_10, window_bounds = array<i64: 1, 128, 128>}, {transform_indices = @transform_11, window_bounds = array<i64: 1, 1, 128>}, {transform_indices = @transform_12, window_bounds = array<i64: 1, 128, 256>}, {transform_indices = @transform_13, window_bounds = array<i64: 1, 1, 256>}, {transform_indices = @transform_14, window_bounds = array<i64: 1, 256, 128>}, {transform_indices = @transform_15, window_bounds = array<i64: 1, 1, 128>}, {transform_indices = @transform_16, window_bounds = array<i64: 1, 3, 128>}, {transform_indices = @transform_17, window_bounds = array<i64: 1, 3, 128>}, {transform_indices = @transform_18, window_bounds = array<i64: 2, 8, 128>}]} {
    %c0_i32 = arith.constant 0 : i32
    %0 = arith.cmpi eq, %arg1, %c0_i32 : i32
    %1 = arith.extui %0 : i1 to i32
    %c0_i32_0 = arith.constant 0 : i32
    %2 = arith.cmpi ne, %1, %c0_i32_0 : i32
    scf.if %2 {
      %c0_105 = arith.constant 0 : index
      %c0_106 = arith.constant 0 : index
      %c0_107 = arith.constant 0 : index
      %319 = vector.load %arg2[%c0_105, %c0_106, %c0_107] : memref<2x8x128xf32, #tpu.memory_space<vmem>>, vector<2x8x128xf32>
      %c0_108 = arith.constant 0 : index
      %c0_109 = arith.constant 0 : index
      %c0_110 = arith.constant 0 : index
      %320 = vector.load %arg21[%c0_108, %c0_109, %c0_110] : memref<2x8x128xf32, #tpu.memory_space<vmem>>, vector<2x8x128xf32>
      tpu.vector_store %arg21[%c0_108, %c0_109, %c0_110], %319 {strides = array<i32>} : memref<2x8x128xf32, #tpu.memory_space<vmem>>, vector<2x8x128xf32>,
    } else {
    }
    %c0 = arith.constant 0 : index
    %c0_1 = arith.constant 0 : index
    %c0_2 = arith.constant 0 : index
    %3 = vector.load %arg21[%c0, %c0_1, %c0_2] : memref<2x8x128xf32, #tpu.memory_space<vmem>>, vector<2x8x128xf32>
    %4 = vector.shape_cast %3 : vector<2x8x128xf32> to vector<16x128xf32>
    %c0_3 = arith.constant 0 : index
    %c0_4 = arith.constant 0 : index
    %c0_5 = arith.constant 0 : index
    %5 = vector.load %arg3[%c0_3, %c0_4, %c0_5] : memref<2x8x128xf32, #tpu.memory_space<vmem>>, vector<2x8x128xf32>
    %c0_6 = arith.constant 0 : index
    %c0_7 = arith.constant 0 : index
    %c0_8 = arith.constant 0 : index
    %6 = vector.load %arg18[%c0_6, %c0_7, %c0_8] : memref<1x3x128xf32, #tpu.memory_space<vmem>>, vector<1x3x128xf32>
    %7 = vector.shape_cast %6 : vector<1x3x128xf32> to vector<3x128xf32>
    %c0_9 = arith.constant 0 : index
    %c0_10 = arith.constant 0 : index
    %c0_11 = arith.constant 0 : index
    %8 = vector.load %arg19[%c0_9, %c0_10, %c0_11] : memref<1x3x128xf32, #tpu.memory_space<vmem>>, vector<1x3x128xf32>
    %9 = vector.shape_cast %8 : vector<1x3x128xf32> to vector<3x128xf32>
    %10 = tpu.iota {dimensions = array<i32: 0>} : vector<8x8xi32>
    %11 = tpu.iota {dimensions = array<i32: 1>} : vector<8x8xi32>
    %12 = arith.cmpi sle, %11, %10 : vector<8x8xi32>
    %c8_i32 = arith.constant 8 : i32
    %13 = vector.broadcast %c8_i32 : i32 to vector<8x8xi32>
    %14 = arith.cmpi slt, %11, %13 : vector<8x8xi32>
    %15 = arith.andi %12, %14 : vector<8x8xi1>
    %16 = tpu.iota {dimensions = array<i32: 1>} : vector<8x8xi32>
    %c8_i32_12 = arith.constant 8 : i32
    %17 = vector.broadcast %c8_i32_12 : i32 to vector<8x8xi32>
    %18 = arith.cmpi slt, %16, %17 : vector<8x8xi32>
    %19 = arith.truncf %4 : vector<16x128xf32> to vector<16x128xbf16>
    %c0_13 = arith.constant 0 : index
    %c0_14 = arith.constant 0 : index
    %c0_15 = arith.constant 0 : index
    %20 = vector.load %arg4[%c0_13, %c0_14, %c0_15] : memref<1x128x384xbf16, #tpu.memory_space<vmem>>, vector<1x128x384xbf16>
    %21 = vector.shape_cast %20 : vector<1x128x384xbf16> to vector<128x384xbf16>
    %cst = arith.constant dense<0.000000e+00> : vector<16x384xf32>
    %22 = tpu.matmul %19, %21, %cst {dimension_numbers = #tpu.dot_dimension_numbers<[1], [0], [0], [1], [0, 0, 1, 1], [], []>} : vector<16x128xbf16>, vector<128x384xbf16>, vector<16x384xf32> -> vector<16x384xf32>
    %c0_16 = arith.constant 0 : index
    %c0_17 = arith.constant 0 : index
    %c0_18 = arith.constant 0 : index
    %23 = vector.load %arg5[%c0_16, %c0_17, %c0_18] : memref<1x1x384xf32, #tpu.memory_space<vmem>>, vector<1x1x384xf32>
    %24 = vector.shape_cast %23 : vector<1x1x384xf32> to vector<1x384xf32>
    %25 = vector.broadcast %24 : vector<1x384xf32> to vector<16x384xf32>
    %26 = arith.addf %22, %25 : vector<16x384xf32>
    %27 = vector.extract_strided_slice %26 {offsets = [0, 0], sizes = [16, 128], strides = [1, 1]} : vector<16x384xf32> to vector<16x128xf32>
    %28 = vector.shape_cast %27 : vector<16x128xf32> to vector<2x8x128xf32>
    %29 = vector.extract_strided_slice %26 {offsets = [0, 128], sizes = [16, 128], strides = [1, 1]} : vector<16x384xf32> to vector<16x128xf32>
    %30 = vector.shape_cast %29 : vector<16x128xf32> to vector<2x8x128xf32>
    %31 = vector.extract_strided_slice %26 {offsets = [0, 256], sizes = [16, 128], strides = [1, 1]} : vector<16x384xf32> to vector<16x128xf32>
    %32 = vector.shape_cast %31 : vector<16x128xf32> to vector<2x8x128xf32>
    %33 = vector.extract_strided_slice %28 {offsets = [0, 0, 0], sizes = [1, 8, 128], strides = [1, 1, 1]} : vector<2x8x128xf32> to vector<1x8x128xf32>
    %34 = vector.shape_cast %33 : vector<1x8x128xf32> to vector<8x128xf32>
    %35 = vector.extract_strided_slice %30 {offsets = [0, 0, 0], sizes = [1, 8, 128], strides = [1, 1, 1]} : vector<2x8x128xf32> to vector<1x8x128xf32>
    %36 = vector.shape_cast %35 : vector<1x8x128xf32> to vector<8x128xf32>
    %37 = vector.extract_strided_slice %32 {offsets = [0, 0, 0], sizes = [1, 8, 128], strides = [1, 1, 1]} : vector<2x8x128xf32> to vector<1x8x128xf32>
    %38 = vector.shape_cast %37 : vector<1x8x128xf32> to vector<8x128xf32>
    %39 = vector.shape_cast %34 : vector<8x128xf32> to vector<8x4x32xf32>
    %40 = tpu.transpose %39, [1, 0, 2] : vector<8x4x32xf32> -> vector<4x8x32xf32>
    %41 = arith.truncf %40 : vector<4x8x32xf32> to vector<4x8x32xbf16>
    %42 = vector.shape_cast %36 : vector<8x128xf32> to vector<8x4x32xf32>
    %43 = tpu.transpose %42, [1, 0, 2] : vector<8x4x32xf32> -> vector<4x8x32xf32>
    %44 = arith.truncf %43 : vector<4x8x32xf32> to vector<4x8x32xbf16>
    %45 = vector.shape_cast %38 : vector<8x128xf32> to vector<8x4x32xf32>
    %46 = tpu.transpose %45, [1, 0, 2] : vector<8x4x32xf32> -> vector<4x8x32xf32>
    %47 = arith.truncf %46 : vector<4x8x32xf32> to vector<4x8x32xbf16>
    "tpu.trace_start"() <{level = 10 : i32, message = "hqd,hkd->hqk"}> : () -> ()
    %cst_19 = arith.constant dense<0.000000e+00> : vector<4x8x8xf32>
    %48 = tpu.matmul %41, %44, %cst_19 {dimension_numbers = #tpu.dot_dimension_numbers<[2], [2], [1], [1], [0, 0, 0, 1, 1, 1], [0], [0]>} : vector<4x8x32xbf16>, vector<4x8x32xbf16>, vector<4x8x8xf32> -> vector<4x8x8xf32>
    "tpu.trace_stop"() : () -> ()
    %cst_20 = arith.constant 0.176776692 : f32
    %49 = vector.broadcast %cst_20 : f32 to vector<4x8x8xf32>
    %50 = arith.mulf %48, %49 : vector<4x8x8xf32>
    %51 = vector.shape_cast %15 : vector<8x8xi1> to vector<1x8x8xi1>
    %cst_21 = arith.constant -1.000000e+30 : f32
    %52 = vector.shape_cast %51 : vector<1x8x8xi1> to vector<1x8x8xi1>
    %53 = vector.broadcast %52 : vector<1x8x8xi1> to vector<4x8x8xi1>
    %54 = vector.broadcast %cst_21 : f32 to vector<4x8x8xf32>
    %55 = arith.select %53, %50, %54 : vector<4x8x8xi1>, vector<4x8x8xf32>
    %cst_22 = arith.constant dense<0xFF800000> : vector<4x8xf32>
    %56 = vector.multi_reduction <maximumf>, %55, %cst_22 [2] : vector<4x8x8xf32> to vector<4x8xf32>
    %57 = vector.shape_cast %56 : vector<4x8xf32> to vector<4x8x1xf32>
    %58 = vector.broadcast %57 : vector<4x8x1xf32> to vector<4x8x8xf32>
    %59 = arith.subf %55, %58 : vector<4x8x8xf32>
    %60 = math.exp %59 : vector<4x8x8xf32>
    %cst_23 = arith.constant dense<0.000000e+00> : vector<4x8xf32>
    %61 = vector.multi_reduction <add>, %60, %cst_23 [2] : vector<4x8x8xf32> to vector<4x8xf32>
    %62 = vector.shape_cast %61 : vector<4x8xf32> to vector<4x8x1xf32>
    %63 = tpu.reciprocal %62 {approx = true} : vector<4x8x1xf32> -> vector<4x8x1xf32>
    %64 = vector.broadcast %63 : vector<4x8x1xf32> to vector<4x8x8xf32>
    %65 = arith.mulf %60, %64 : vector<4x8x8xf32>
    %66 = arith.truncf %65 : vector<4x8x8xf32> to vector<4x8x8xbf16>
    "tpu.trace_start"() <{level = 10 : i32, message = "hqk,hkd->hqd"}> : () -> ()
    %cst_24 = arith.constant dense<0.000000e+00> : vector<4x8x32xf32>
    %67 = tpu.matmul %66, %47, %cst_24 {dimension_numbers = #tpu.dot_dimension_numbers<[2], [1], [1], [2], [0, 0, 0, 1, 1, 2], [0], [0]>} : vector<4x8x8xbf16>, vector<4x8x32xbf16>, vector<4x8x32xf32> -> vector<4x8x32xf32>
    "tpu.trace_stop"() : () -> ()
    %68 = tpu.transpose %67, [1, 0, 2] : vector<4x8x32xf32> -> vector<8x4x32xf32>
    %69 = vector.shape_cast %68 : vector<8x4x32xf32> to vector<8x128xf32>
    %70 = vector.extract_strided_slice %28 {offsets = [1, 0, 0], sizes = [1, 8, 128], strides = [1, 1, 1]} : vector<2x8x128xf32> to vector<1x8x128xf32>
    %71 = vector.shape_cast %70 : vector<1x8x128xf32> to vector<8x128xf32>
    %72 = vector.extract_strided_slice %30 {offsets = [1, 0, 0], sizes = [1, 8, 128], strides = [1, 1, 1]} : vector<2x8x128xf32> to vector<1x8x128xf32>
    %73 = vector.shape_cast %72 : vector<1x8x128xf32> to vector<8x128xf32>
    %74 = vector.extract_strided_slice %32 {offsets = [1, 0, 0], sizes = [1, 8, 128], strides = [1, 1, 1]} : vector<2x8x128xf32> to vector<1x8x128xf32>
    %75 = vector.shape_cast %74 : vector<1x8x128xf32> to vector<8x128xf32>
    %76 = vector.shape_cast %71 : vector<8x128xf32> to vector<8x4x32xf32>
    %77 = tpu.transpose %76, [1, 0, 2] : vector<8x4x32xf32> -> vector<4x8x32xf32>
    %78 = arith.truncf %77 : vector<4x8x32xf32> to vector<4x8x32xbf16>
    %79 = vector.shape_cast %73 : vector<8x128xf32> to vector<8x4x32xf32>
    %80 = tpu.transpose %79, [1, 0, 2] : vector<8x4x32xf32> -> vector<4x8x32xf32>
    %81 = arith.truncf %80 : vector<4x8x32xf32> to vector<4x8x32xbf16>
    %82 = vector.shape_cast %75 : vector<8x128xf32> to vector<8x4x32xf32>
    %83 = tpu.transpose %82, [1, 0, 2] : vector<8x4x32xf32> -> vector<4x8x32xf32>
    %84 = arith.truncf %83 : vector<4x8x32xf32> to vector<4x8x32xbf16>
    "tpu.trace_start"() <{level = 10 : i32, message = "hqd,hkd->hqk"}> : () -> ()
    %cst_25 = arith.constant dense<0.000000e+00> : vector<4x8x8xf32>
    %85 = tpu.matmul %78, %81, %cst_25 {dimension_numbers = #tpu.dot_dimension_numbers<[2], [2], [1], [1], [0, 0, 0, 1, 1, 1], [0], [0]>} : vector<4x8x32xbf16>, vector<4x8x32xbf16>, vector<4x8x8xf32> -> vector<4x8x8xf32>
    "tpu.trace_stop"() : () -> ()
    %cst_26 = arith.constant 0.176776692 : f32
    %86 = vector.broadcast %cst_26 : f32 to vector<4x8x8xf32>
    %87 = arith.mulf %85, %86 : vector<4x8x8xf32>
    %88 = vector.shape_cast %15 : vector<8x8xi1> to vector<1x8x8xi1>
    %cst_27 = arith.constant -1.000000e+30 : f32
    %89 = vector.shape_cast %88 : vector<1x8x8xi1> to vector<1x8x8xi1>
    %90 = vector.broadcast %89 : vector<1x8x8xi1> to vector<4x8x8xi1>
    %91 = vector.broadcast %cst_27 : f32 to vector<4x8x8xf32>
    %92 = arith.select %90, %87, %91 : vector<4x8x8xi1>, vector<4x8x8xf32>
    %cst_28 = arith.constant dense<0xFF800000> : vector<4x8xf32>
    %93 = vector.multi_reduction <maximumf>, %92, %cst_28 [2] : vector<4x8x8xf32> to vector<4x8xf32>
    %94 = vector.shape_cast %93 : vector<4x8xf32> to vector<4x8x1xf32>
    %95 = vector.broadcast %94 : vector<4x8x1xf32> to vector<4x8x8xf32>
    %96 = arith.subf %92, %95 : vector<4x8x8xf32>
    %97 = math.exp %96 : vector<4x8x8xf32>
    %cst_29 = arith.constant dense<0.000000e+00> : vector<4x8xf32>
    %98 = vector.multi_reduction <add>, %97, %cst_29 [2] : vector<4x8x8xf32> to vector<4x8xf32>
    %99 = vector.shape_cast %98 : vector<4x8xf32> to vector<4x8x1xf32>
    %100 = tpu.reciprocal %99 {approx = true} : vector<4x8x1xf32> -> vector<4x8x1xf32>
    %101 = vector.broadcast %100 : vector<4x8x1xf32> to vector<4x8x8xf32>
    %102 = arith.mulf %97, %101 : vector<4x8x8xf32>
    %103 = arith.truncf %102 : vector<4x8x8xf32> to vector<4x8x8xbf16>
    "tpu.trace_start"() <{level = 10 : i32, message = "hqk,hkd->hqd"}> : () -> ()
    %cst_30 = arith.constant dense<0.000000e+00> : vector<4x8x32xf32>
    %104 = tpu.matmul %103, %84, %cst_30 {dimension_numbers = #tpu.dot_dimension_numbers<[2], [1], [1], [2], [0, 0, 0, 1, 1, 2], [0], [0]>} : vector<4x8x8xbf16>, vector<4x8x32xbf16>, vector<4x8x32xf32> -> vector<4x8x32xf32>
    "tpu.trace_stop"() : () -> ()
    %105 = tpu.transpose %104, [1, 0, 2] : vector<4x8x32xf32> -> vector<8x4x32xf32>
    %106 = vector.shape_cast %105 : vector<8x4x32xf32> to vector<8x128xf32>
    %107 = tpu.concatenate %69, %106 in 0 : vector<8x128xf32>, vector<8x128xf32> -> vector<16x128xf32>
    %108 = arith.truncf %107 : vector<16x128xf32> to vector<16x128xbf16>
    %c0_31 = arith.constant 0 : index
    %c0_32 = arith.constant 0 : index
    %c0_33 = arith.constant 0 : index
    %109 = vector.load %arg6[%c0_31, %c0_32, %c0_33] : memref<1x128x128xbf16, #tpu.memory_space<vmem>>, vector<1x128x128xbf16>
    %110 = vector.shape_cast %109 : vector<1x128x128xbf16> to vector<128x128xbf16>
    %cst_34 = arith.constant dense<0.000000e+00> : vector<16x128xf32>
    %111 = tpu.matmul %108, %110, %cst_34 {dimension_numbers = #tpu.dot_dimension_numbers<[1], [0], [0], [1], [0, 0, 1, 1], [], []>} : vector<16x128xbf16>, vector<128x128xbf16>, vector<16x128xf32> -> vector<16x128xf32>
    %c0_35 = arith.constant 0 : index
    %c0_36 = arith.constant 0 : index
    %c0_37 = arith.constant 0 : index
    %112 = vector.load %arg7[%c0_35, %c0_36, %c0_37] : memref<1x1x128xf32, #tpu.memory_space<vmem>>, vector<1x1x128xf32>
    %113 = vector.shape_cast %112 : vector<1x1x128xf32> to vector<1x128xf32>
    %114 = vector.broadcast %113 : vector<1x128xf32> to vector<16x128xf32>
    %115 = arith.addf %111, %114 : vector<16x128xf32>
    %116 = arith.addf %4, %115 : vector<16x128xf32>
    %117 = vector.extract_strided_slice %7 {offsets = [0, 0], sizes = [1, 128], strides = [1, 1]} : vector<3x128xf32> to vector<1x128xf32>
    %118 = vector.extract_strided_slice %9 {offsets = [0, 0], sizes = [1, 128], strides = [1, 1]} : vector<3x128xf32> to vector<1x128xf32>
    %cst_38 = arith.constant dense<0.000000e+00> : vector<16xf32>
    %119 = vector.multi_reduction <add>, %116, %cst_38 [1] : vector<16x128xf32> to vector<16xf32>
    %120 = vector.shape_cast %119 : vector<16xf32> to vector<16x1xf32>
    %cst_39 = arith.constant 1.280000e+02 : f32
    %121 = vector.broadcast %cst_39 : f32 to vector<16x1xf32>
    %122 = arith.divf %120, %121 : vector<16x1xf32>
    %123 = vector.broadcast %122 : vector<16x1xf32> to vector<16x128xf32>
    %124 = arith.subf %116, %123 : vector<16x128xf32>
    %125 = arith.mulf %124, %124 : vector<16x128xf32>
    %cst_40 = arith.constant dense<0.000000e+00> : vector<16xf32>
    %126 = vector.multi_reduction <add>, %125, %cst_40 [1] : vector<16x128xf32> to vector<16xf32>
    %127 = vector.shape_cast %126 : vector<16xf32> to vector<16x1xf32>
    %cst_41 = arith.constant 1.280000e+02 : f32
    %128 = vector.broadcast %cst_41 : f32 to vector<16x1xf32>
    %129 = arith.divf %127, %128 : vector<16x1xf32>
    %130 = vector.broadcast %122 : vector<16x1xf32> to vector<16x128xf32>
    %131 = arith.subf %116, %130 : vector<16x128xf32>
    %cst_42 = arith.constant 9.99999974E-6 : f32
    %132 = vector.broadcast %cst_42 : f32 to vector<16x1xf32>
    %133 = arith.addf %129, %132 : vector<16x1xf32>
    %134 = math.rsqrt %133 : vector<16x1xf32>
    %135 = vector.broadcast %134 : vector<16x1xf32> to vector<16x128xf32>
    %136 = arith.mulf %131, %135 : vector<16x128xf32>
    %137 = vector.broadcast %117 : vector<1x128xf32> to vector<16x128xf32>
    %138 = arith.mulf %136, %137 : vector<16x128xf32>
    %139 = vector.broadcast %118 : vector<1x128xf32> to vector<16x128xf32>
    %140 = arith.addf %138, %139 : vector<16x128xf32>
    %141 = arith.truncf %140 : vector<16x128xf32> to vector<16x128xbf16>
    %c0_43 = arith.constant 0 : index
    %c0_44 = arith.constant 0 : index
    %c0_45 = arith.constant 0 : index
    %142 = vector.load %arg8[%c0_43, %c0_44, %c0_45] : memref<1x128x128xbf16, #tpu.memory_space<vmem>>, vector<1x128x128xbf16>
    %143 = vector.shape_cast %142 : vector<1x128x128xbf16> to vector<128x128xbf16>
    %cst_46 = arith.constant dense<0.000000e+00> : vector<16x128xf32>
    %144 = tpu.matmul %141, %143, %cst_46 {dimension_numbers = #tpu.dot_dimension_numbers<[1], [0], [0], [1], [0, 0, 1, 1], [], []>} : vector<16x128xbf16>, vector<128x128xbf16>, vector<16x128xf32> -> vector<16x128xf32>
    %c0_47 = arith.constant 0 : index
    %c0_48 = arith.constant 0 : index
    %c0_49 = arith.constant 0 : index
    %145 = vector.load %arg9[%c0_47, %c0_48, %c0_49] : memref<1x1x128xf32, #tpu.memory_space<vmem>>, vector<1x1x128xf32>
    %146 = vector.shape_cast %145 : vector<1x1x128xf32> to vector<1x128xf32>
    %147 = vector.broadcast %146 : vector<1x128xf32> to vector<16x128xf32>
    %148 = arith.addf %144, %147 : vector<16x128xf32>
    %149 = vector.shape_cast %5 : vector<2x8x128xf32> to vector<16x128xf32>
    %150 = arith.truncf %149 : vector<16x128xf32> to vector<16x128xbf16>
    %c0_50 = arith.constant 0 : index
    %c0_51 = arith.constant 0 : index
    %c0_52 = arith.constant 0 : index
    %151 = vector.load %arg10[%c0_50, %c0_51, %c0_52] : memref<1x128x256xbf16, #tpu.memory_space<vmem>>, vector<1x128x256xbf16>
    %152 = vector.shape_cast %151 : vector<1x128x256xbf16> to vector<128x256xbf16>
    %cst_53 = arith.constant dense<0.000000e+00> : vector<16x256xf32>
    %153 = tpu.matmul %150, %152, %cst_53 {dimension_numbers = #tpu.dot_dimension_numbers<[1], [0], [0], [1], [0, 0, 1, 1], [], []>} : vector<16x128xbf16>, vector<128x256xbf16>, vector<16x256xf32> -> vector<16x256xf32>
    %c0_54 = arith.constant 0 : index
    %c0_55 = arith.constant 0 : index
    %c0_56 = arith.constant 0 : index
    %154 = vector.load %arg11[%c0_54, %c0_55, %c0_56] : memref<1x1x256xf32, #tpu.memory_space<vmem>>, vector<1x1x256xf32>
    %155 = vector.shape_cast %154 : vector<1x1x256xf32> to vector<1x256xf32>
    %156 = vector.broadcast %155 : vector<1x256xf32> to vector<16x256xf32>
    %157 = arith.addf %153, %156 : vector<16x256xf32>
    %158 = vector.shape_cast %148 : vector<16x128xf32> to vector<2x8x128xf32>
    %159 = vector.extract_strided_slice %157 {offsets = [0, 0], sizes = [16, 128], strides = [1, 1]} : vector<16x256xf32> to vector<16x128xf32>
    %160 = vector.shape_cast %159 : vector<16x128xf32> to vector<2x8x128xf32>
    %161 = vector.extract_strided_slice %157 {offsets = [0, 128], sizes = [16, 128], strides = [1, 1]} : vector<16x256xf32> to vector<16x128xf32>
    %162 = vector.shape_cast %161 : vector<16x128xf32> to vector<2x8x128xf32>
    %163 = vector.extract_strided_slice %158 {offsets = [0, 0, 0], sizes = [1, 8, 128], strides = [1, 1, 1]} : vector<2x8x128xf32> to vector<1x8x128xf32>
    %164 = vector.shape_cast %163 : vector<1x8x128xf32> to vector<8x128xf32>
    %165 = vector.extract_strided_slice %160 {offsets = [0, 0, 0], sizes = [1, 8, 128], strides = [1, 1, 1]} : vector<2x8x128xf32> to vector<1x8x128xf32>
    %166 = vector.shape_cast %165 : vector<1x8x128xf32> to vector<8x128xf32>
    %167 = vector.extract_strided_slice %162 {offsets = [0, 0, 0], sizes = [1, 8, 128], strides = [1, 1, 1]} : vector<2x8x128xf32> to vector<1x8x128xf32>
    %168 = vector.shape_cast %167 : vector<1x8x128xf32> to vector<8x128xf32>
    %169 = vector.shape_cast %164 : vector<8x128xf32> to vector<8x4x32xf32>
    %170 = tpu.transpose %169, [1, 0, 2] : vector<8x4x32xf32> -> vector<4x8x32xf32>
    %171 = arith.truncf %170 : vector<4x8x32xf32> to vector<4x8x32xbf16>
    %172 = vector.shape_cast %166 : vector<8x128xf32> to vector<8x4x32xf32>
    %173 = tpu.transpose %172, [1, 0, 2] : vector<8x4x32xf32> -> vector<4x8x32xf32>
    %174 = arith.truncf %173 : vector<4x8x32xf32> to vector<4x8x32xbf16>
    %175 = vector.shape_cast %168 : vector<8x128xf32> to vector<8x4x32xf32>
    %176 = tpu.transpose %175, [1, 0, 2] : vector<8x4x32xf32> -> vector<4x8x32xf32>
    %177 = arith.truncf %176 : vector<4x8x32xf32> to vector<4x8x32xbf16>
    "tpu.trace_start"() <{level = 10 : i32, message = "hqd,hkd->hqk"}> : () -> ()
    %cst_57 = arith.constant dense<0.000000e+00> : vector<4x8x8xf32>
    %178 = tpu.matmul %171, %174, %cst_57 {dimension_numbers = #tpu.dot_dimension_numbers<[2], [2], [1], [1], [0, 0, 0, 1, 1, 1], [0], [0]>} : vector<4x8x32xbf16>, vector<4x8x32xbf16>, vector<4x8x8xf32> -> vector<4x8x8xf32>
    "tpu.trace_stop"() : () -> ()
    %cst_58 = arith.constant 0.176776692 : f32
    %179 = vector.broadcast %cst_58 : f32 to vector<4x8x8xf32>
    %180 = arith.mulf %178, %179 : vector<4x8x8xf32>
    %181 = vector.shape_cast %18 : vector<8x8xi1> to vector<1x8x8xi1>
    %cst_59 = arith.constant -1.000000e+30 : f32
    %182 = vector.shape_cast %181 : vector<1x8x8xi1> to vector<1x8x8xi1>
    %183 = vector.broadcast %182 : vector<1x8x8xi1> to vector<4x8x8xi1>
    %184 = vector.broadcast %cst_59 : f32 to vector<4x8x8xf32>
    %185 = arith.select %183, %180, %184 : vector<4x8x8xi1>, vector<4x8x8xf32>
    %cst_60 = arith.constant dense<0xFF800000> : vector<4x8xf32>
    %186 = vector.multi_reduction <maximumf>, %185, %cst_60 [2] : vector<4x8x8xf32> to vector<4x8xf32>
    %187 = vector.shape_cast %186 : vector<4x8xf32> to vector<4x8x1xf32>
    %188 = vector.broadcast %187 : vector<4x8x1xf32> to vector<4x8x8xf32>
    %189 = arith.subf %185, %188 : vector<4x8x8xf32>
    %190 = math.exp %189 : vector<4x8x8xf32>
    %cst_61 = arith.constant dense<0.000000e+00> : vector<4x8xf32>
    %191 = vector.multi_reduction <add>, %190, %cst_61 [2] : vector<4x8x8xf32> to vector<4x8xf32>
    %192 = vector.shape_cast %191 : vector<4x8xf32> to vector<4x8x1xf32>
    %193 = tpu.reciprocal %192 {approx = true} : vector<4x8x1xf32> -> vector<4x8x1xf32>
    %194 = vector.broadcast %193 : vector<4x8x1xf32> to vector<4x8x8xf32>
    %195 = arith.mulf %190, %194 : vector<4x8x8xf32>
    %196 = arith.truncf %195 : vector<4x8x8xf32> to vector<4x8x8xbf16>
    "tpu.trace_start"() <{level = 10 : i32, message = "hqk,hkd->hqd"}> : () -> ()
    %cst_62 = arith.constant dense<0.000000e+00> : vector<4x8x32xf32>
    %197 = tpu.matmul %196, %177, %cst_62 {dimension_numbers = #tpu.dot_dimension_numbers<[2], [1], [1], [2], [0, 0, 0, 1, 1, 2], [0], [0]>} : vector<4x8x8xbf16>, vector<4x8x32xbf16>, vector<4x8x32xf32> -> vector<4x8x32xf32>
    "tpu.trace_stop"() : () -> ()
    %198 = tpu.transpose %197, [1, 0, 2] : vector<4x8x32xf32> -> vector<8x4x32xf32>
    %199 = vector.shape_cast %198 : vector<8x4x32xf32> to vector<8x128xf32>
    %200 = vector.extract_strided_slice %158 {offsets = [1, 0, 0], sizes = [1, 8, 128], strides = [1, 1, 1]} : vector<2x8x128xf32> to vector<1x8x128xf32>
    %201 = vector.shape_cast %200 : vector<1x8x128xf32> to vector<8x128xf32>
    %202 = vector.extract_strided_slice %160 {offsets = [1, 0, 0], sizes = [1, 8, 128], strides = [1, 1, 1]} : vector<2x8x128xf32> to vector<1x8x128xf32>
    %203 = vector.shape_cast %202 : vector<1x8x128xf32> to vector<8x128xf32>
    %204 = vector.extract_strided_slice %162 {offsets = [1, 0, 0], sizes = [1, 8, 128], strides = [1, 1, 1]} : vector<2x8x128xf32> to vector<1x8x128xf32>
    %205 = vector.shape_cast %204 : vector<1x8x128xf32> to vector<8x128xf32>
    %206 = vector.shape_cast %201 : vector<8x128xf32> to vector<8x4x32xf32>
    %207 = tpu.transpose %206, [1, 0, 2] : vector<8x4x32xf32> -> vector<4x8x32xf32>
    %208 = arith.truncf %207 : vector<4x8x32xf32> to vector<4x8x32xbf16>
    %209 = vector.shape_cast %203 : vector<8x128xf32> to vector<8x4x32xf32>
    %210 = tpu.transpose %209, [1, 0, 2] : vector<8x4x32xf32> -> vector<4x8x32xf32>
    %211 = arith.truncf %210 : vector<4x8x32xf32> to vector<4x8x32xbf16>
    %212 = vector.shape_cast %205 : vector<8x128xf32> to vector<8x4x32xf32>
    %213 = tpu.transpose %212, [1, 0, 2] : vector<8x4x32xf32> -> vector<4x8x32xf32>
    %214 = arith.truncf %213 : vector<4x8x32xf32> to vector<4x8x32xbf16>
    "tpu.trace_start"() <{level = 10 : i32, message = "hqd,hkd->hqk"}> : () -> ()
    %cst_63 = arith.constant dense<0.000000e+00> : vector<4x8x8xf32>
    %215 = tpu.matmul %208, %211, %cst_63 {dimension_numbers = #tpu.dot_dimension_numbers<[2], [2], [1], [1], [0, 0, 0, 1, 1, 1], [0], [0]>} : vector<4x8x32xbf16>, vector<4x8x32xbf16>, vector<4x8x8xf32> -> vector<4x8x8xf32>
    "tpu.trace_stop"() : () -> ()
    %cst_64 = arith.constant 0.176776692 : f32
    %216 = vector.broadcast %cst_64 : f32 to vector<4x8x8xf32>
    %217 = arith.mulf %215, %216 : vector<4x8x8xf32>
    %218 = vector.shape_cast %18 : vector<8x8xi1> to vector<1x8x8xi1>
    %cst_65 = arith.constant -1.000000e+30 : f32
    %219 = vector.shape_cast %218 : vector<1x8x8xi1> to vector<1x8x8xi1>
    %220 = vector.broadcast %219 : vector<1x8x8xi1> to vector<4x8x8xi1>
    %221 = vector.broadcast %cst_65 : f32 to vector<4x8x8xf32>
    %222 = arith.select %220, %217, %221 : vector<4x8x8xi1>, vector<4x8x8xf32>
    %cst_66 = arith.constant dense<0xFF800000> : vector<4x8xf32>
    %223 = vector.multi_reduction <maximumf>, %222, %cst_66 [2] : vector<4x8x8xf32> to vector<4x8xf32>
    %224 = vector.shape_cast %223 : vector<4x8xf32> to vector<4x8x1xf32>
    %225 = vector.broadcast %224 : vector<4x8x1xf32> to vector<4x8x8xf32>
    %226 = arith.subf %222, %225 : vector<4x8x8xf32>
    %227 = math.exp %226 : vector<4x8x8xf32>
    %cst_67 = arith.constant dense<0.000000e+00> : vector<4x8xf32>
    %228 = vector.multi_reduction <add>, %227, %cst_67 [2] : vector<4x8x8xf32> to vector<4x8xf32>
    %229 = vector.shape_cast %228 : vector<4x8xf32> to vector<4x8x1xf32>
    %230 = tpu.reciprocal %229 {approx = true} : vector<4x8x1xf32> -> vector<4x8x1xf32>
    %231 = vector.broadcast %230 : vector<4x8x1xf32> to vector<4x8x8xf32>
    %232 = arith.mulf %227, %231 : vector<4x8x8xf32>
    %233 = arith.truncf %232 : vector<4x8x8xf32> to vector<4x8x8xbf16>
    "tpu.trace_start"() <{level = 10 : i32, message = "hqk,hkd->hqd"}> : () -> ()
    %cst_68 = arith.constant dense<0.000000e+00> : vector<4x8x32xf32>
    %234 = tpu.matmul %233, %214, %cst_68 {dimension_numbers = #tpu.dot_dimension_numbers<[2], [1], [1], [2], [0, 0, 0, 1, 1, 2], [0], [0]>} : vector<4x8x8xbf16>, vector<4x8x32xbf16>, vector<4x8x32xf32> -> vector<4x8x32xf32>
    "tpu.trace_stop"() : () -> ()
    %235 = tpu.transpose %234, [1, 0, 2] : vector<4x8x32xf32> -> vector<8x4x32xf32>
    %236 = vector.shape_cast %235 : vector<8x4x32xf32> to vector<8x128xf32>
    %237 = tpu.concatenate %199, %236 in 0 : vector<8x128xf32>, vector<8x128xf32> -> vector<16x128xf32>
    %238 = arith.truncf %237 : vector<16x128xf32> to vector<16x128xbf16>
    %c0_69 = arith.constant 0 : index
    %c0_70 = arith.constant 0 : index
    %c0_71 = arith.constant 0 : index
    %239 = vector.load %arg12[%c0_69, %c0_70, %c0_71] : memref<1x128x128xbf16, #tpu.memory_space<vmem>>, vector<1x128x128xbf16>
    %240 = vector.shape_cast %239 : vector<1x128x128xbf16> to vector<128x128xbf16>
    %cst_72 = arith.constant dense<0.000000e+00> : vector<16x128xf32>
    %241 = tpu.matmul %238, %240, %cst_72 {dimension_numbers = #tpu.dot_dimension_numbers<[1], [0], [0], [1], [0, 0, 1, 1], [], []>} : vector<16x128xbf16>, vector<128x128xbf16>, vector<16x128xf32> -> vector<16x128xf32>
    %c0_73 = arith.constant 0 : index
    %c0_74 = arith.constant 0 : index
    %c0_75 = arith.constant 0 : index
    %242 = vector.load %arg13[%c0_73, %c0_74, %c0_75] : memref<1x1x128xf32, #tpu.memory_space<vmem>>, vector<1x1x128xf32>
    %243 = vector.shape_cast %242 : vector<1x1x128xf32> to vector<1x128xf32>
    %244 = vector.broadcast %243 : vector<1x128xf32> to vector<16x128xf32>
    %245 = arith.addf %241, %244 : vector<16x128xf32>
    %246 = arith.addf %140, %245 : vector<16x128xf32>
    %247 = vector.extract_strided_slice %7 {offsets = [1, 0], sizes = [1, 128], strides = [1, 1]} : vector<3x128xf32> to vector<1x128xf32>
    %248 = vector.extract_strided_slice %9 {offsets = [1, 0], sizes = [1, 128], strides = [1, 1]} : vector<3x128xf32> to vector<1x128xf32>
    %cst_76 = arith.constant dense<0.000000e+00> : vector<16xf32>
    %249 = vector.multi_reduction <add>, %246, %cst_76 [1] : vector<16x128xf32> to vector<16xf32>
    %250 = vector.shape_cast %249 : vector<16xf32> to vector<16x1xf32>
    %cst_77 = arith.constant 1.280000e+02 : f32
    %251 = vector.broadcast %cst_77 : f32 to vector<16x1xf32>
    %252 = arith.divf %250, %251 : vector<16x1xf32>
    %253 = vector.broadcast %252 : vector<16x1xf32> to vector<16x128xf32>
    %254 = arith.subf %246, %253 : vector<16x128xf32>
    %255 = arith.mulf %254, %254 : vector<16x128xf32>
    %cst_78 = arith.constant dense<0.000000e+00> : vector<16xf32>
    %256 = vector.multi_reduction <add>, %255, %cst_78 [1] : vector<16x128xf32> to vector<16xf32>
    %257 = vector.shape_cast %256 : vector<16xf32> to vector<16x1xf32>
    %cst_79 = arith.constant 1.280000e+02 : f32
    %258 = vector.broadcast %cst_79 : f32 to vector<16x1xf32>
    %259 = arith.divf %257, %258 : vector<16x1xf32>
    %260 = vector.broadcast %252 : vector<16x1xf32> to vector<16x128xf32>
    %261 = arith.subf %246, %260 : vector<16x128xf32>
    %cst_80 = arith.constant 9.99999974E-6 : f32
    %262 = vector.broadcast %cst_80 : f32 to vector<16x1xf32>
    %263 = arith.addf %259, %262 : vector<16x1xf32>
    %264 = math.rsqrt %263 : vector<16x1xf32>
    %265 = vector.broadcast %264 : vector<16x1xf32> to vector<16x128xf32>
    %266 = arith.mulf %261, %265 : vector<16x128xf32>
    %267 = vector.broadcast %247 : vector<1x128xf32> to vector<16x128xf32>
    %268 = arith.mulf %266, %267 : vector<16x128xf32>
    %269 = vector.broadcast %248 : vector<1x128xf32> to vector<16x128xf32>
    %270 = arith.addf %268, %269 : vector<16x128xf32>
    %271 = arith.truncf %270 : vector<16x128xf32> to vector<16x128xbf16>
    %c0_81 = arith.constant 0 : index
    %c0_82 = arith.constant 0 : index
    %c0_83 = arith.constant 0 : index
    %272 = vector.load %arg14[%c0_81, %c0_82, %c0_83] : memref<1x128x256xbf16, #tpu.memory_space<vmem>>, vector<1x128x256xbf16>
    %273 = vector.shape_cast %272 : vector<1x128x256xbf16> to vector<128x256xbf16>
    %cst_84 = arith.constant dense<0.000000e+00> : vector<16x256xf32>
    %274 = tpu.matmul %271, %273, %cst_84 {dimension_numbers = #tpu.dot_dimension_numbers<[1], [0], [0], [1], [0, 0, 1, 1], [], []>} : vector<16x128xbf16>, vector<128x256xbf16>, vector<16x256xf32> -> vector<16x256xf32>
    %c0_85 = arith.constant 0 : index
    %c0_86 = arith.constant 0 : index
    %c0_87 = arith.constant 0 : index
    %275 = vector.load %arg15[%c0_85, %c0_86, %c0_87] : memref<1x1x256xf32, #tpu.memory_space<vmem>>, vector<1x1x256xf32>
    %276 = vector.shape_cast %275 : vector<1x1x256xf32> to vector<1x256xf32>
    %277 = vector.broadcast %276 : vector<1x256xf32> to vector<16x256xf32>
    %278 = arith.addf %274, %277 : vector<16x256xf32>
    %cst_88 = arith.constant 0.000000e+00 : f32
    %279 = vector.broadcast %cst_88 : f32 to vector<16x256xf32>
    %280 = arith.maximumf %278, %279 : vector<16x256xf32>
    %281 = arith.truncf %280 : vector<16x256xf32> to vector<16x256xbf16>
    %c0_89 = arith.constant 0 : index
    %c0_90 = arith.constant 0 : index
    %c0_91 = arith.constant 0 : index
    %282 = vector.load %arg16[%c0_89, %c0_90, %c0_91] : memref<1x256x128xbf16, #tpu.memory_space<vmem>>, vector<1x256x128xbf16>
    %283 = vector.shape_cast %282 : vector<1x256x128xbf16> to vector<256x128xbf16>
    %cst_92 = arith.constant dense<0.000000e+00> : vector<16x128xf32>
    %284 = tpu.matmul %281, %283, %cst_92 {dimension_numbers = #tpu.dot_dimension_numbers<[1], [0], [0], [1], [0, 0, 1, 1], [], []>} : vector<16x256xbf16>, vector<256x128xbf16>, vector<16x128xf32> -> vector<16x128xf32>
    %c0_93 = arith.constant 0 : index
    %c0_94 = arith.constant 0 : index
    %c0_95 = arith.constant 0 : index
    %285 = vector.load %arg17[%c0_93, %c0_94, %c0_95] : memref<1x1x128xf32, #tpu.memory_space<vmem>>, vector<1x1x128xf32>
    %286 = vector.shape_cast %285 : vector<1x1x128xf32> to vector<1x128xf32>
    %287 = vector.broadcast %286 : vector<1x128xf32> to vector<16x128xf32>
    %288 = arith.addf %284, %287 : vector<16x128xf32>
    %289 = arith.addf %270, %288 : vector<16x128xf32>
    %290 = vector.extract_strided_slice %7 {offsets = [2, 0], sizes = [1, 128], strides = [1, 1]} : vector<3x128xf32> to vector<1x128xf32>
    %291 = vector.extract_strided_slice %9 {offsets = [2, 0], sizes = [1, 128], strides = [1, 1]} : vector<3x128xf32> to vector<1x128xf32>
    %cst_96 = arith.constant dense<0.000000e+00> : vector<16xf32>
    %292 = vector.multi_reduction <add>, %289, %cst_96 [1] : vector<16x128xf32> to vector<16xf32>
    %293 = vector.shape_cast %292 : vector<16xf32> to vector<16x1xf32>
    %cst_97 = arith.constant 1.280000e+02 : f32
    %294 = vector.broadcast %cst_97 : f32 to vector<16x1xf32>
    %295 = arith.divf %293, %294 : vector<16x1xf32>
    %296 = vector.broadcast %295 : vector<16x1xf32> to vector<16x128xf32>
    %297 = arith.subf %289, %296 : vector<16x128xf32>
    %298 = arith.mulf %297, %297 : vector<16x128xf32>
    %cst_98 = arith.constant dense<0.000000e+00> : vector<16xf32>
    %299 = vector.multi_reduction <add>, %298, %cst_98 [1] : vector<16x128xf32> to vector<16xf32>
    %300 = vector.shape_cast %299 : vector<16xf32> to vector<16x1xf32>
    %cst_99 = arith.constant 1.280000e+02 : f32
    %301 = vector.broadcast %cst_99 : f32 to vector<16x1xf32>
    %302 = arith.divf %300, %301 : vector<16x1xf32>
    %303 = vector.broadcast %295 : vector<16x1xf32> to vector<16x128xf32>
    %304 = arith.subf %289, %303 : vector<16x128xf32>
    %cst_100 = arith.constant 9.99999974E-6 : f32
    %305 = vector.broadcast %cst_100 : f32 to vector<16x1xf32>
    %306 = arith.addf %302, %305 : vector<16x1xf32>
    %307 = math.rsqrt %306 : vector<16x1xf32>
    %308 = vector.broadcast %307 : vector<16x1xf32> to vector<16x128xf32>
    %309 = arith.mulf %304, %308 : vector<16x128xf32>
    %310 = vector.broadcast %290 : vector<1x128xf32> to vector<16x128xf32>
    %311 = arith.mulf %309, %310 : vector<16x128xf32>
    %312 = vector.broadcast %291 : vector<1x128xf32> to vector<16x128xf32>
    %313 = arith.addf %311, %312 : vector<16x128xf32>
    %314 = vector.shape_cast %313 : vector<16x128xf32> to vector<2x8x128xf32>
    %c0_101 = arith.constant 0 : index
    %c0_102 = arith.constant 0 : index
    %c0_103 = arith.constant 0 : index
    %315 = vector.load %arg21[%c0_101, %c0_102, %c0_103] : memref<2x8x128xf32, #tpu.memory_space<vmem>>, vector<2x8x128xf32>
    tpu.vector_store %arg21[%c0_101, %c0_102, %c0_103], %314 {strides = array<i32>} : memref<2x8x128xf32, #tpu.memory_space<vmem>>, vector<2x8x128xf32>,
    %c1_i32 = arith.constant 1 : i32
    %316 = arith.cmpi eq, %arg1, %c1_i32 : i32
    %317 = arith.extui %316 : i1 to i32
    %c0_i32_104 = arith.constant 0 : i32
    %318 = arith.cmpi ne, %317, %c0_i32_104 : i32
    scf.if %318 {
      %c0_105 = arith.constant 0 : index
      %c0_106 = arith.constant 0 : index
      %c0_107 = arith.constant 0 : index
      %319 = vector.load %arg20[%c0_105, %c0_106, %c0_107] : memref<2x8x128xf32, #tpu.memory_space<vmem>>, vector<2x8x128xf32>
      tpu.vector_store %arg20[%c0_105, %c0_106, %c0_107], %314 {strides = array<i32>} : memref<2x8x128xf32, #tpu.memory_space<vmem>>, vector<2x8x128xf32>,
    } else {
    }
    return
  }
  func.func @transform_0(%arg0: i32, %arg1: i32) -> (i32, i32, i32) {
    %c0_i32 = arith.constant 0 : i32
    %c0_i32_0 = arith.constant 0 : i32
    %c0_i32_1 = arith.constant 0 : i32
    return %arg0, %c0_i32, %c0_i32_0 : i32, i32, i32
  }
  func.func @transform_1(%arg0: i32, %arg1: i32) -> (i32, i32, i32) {
    %c0_i32 = arith.constant 0 : i32
    %c0_i32_0 = arith.constant 0 : i32
    %c0_i32_1 = arith.constant 0 : i32
    return %arg0, %c0_i32, %c0_i32_0 : i32, i32, i32
  }
  func.func @transform_2(%arg0: i32, %arg1: i32) -> (i32, i32, i32) {
    %c0_i32 = arith.constant 0 : i32
    %c0_i32_0 = arith.constant 0 : i32
    %c0_i32_1 = arith.constant 0 : i32
    return %arg1, %c0_i32, %c0_i32_0 : i32, i32, i32
  }
  func.func @transform_3(%arg0: i32, %arg1: i32) -> (i32, i32, i32) {
    %c0_i32 = arith.constant 0 : i32
    %c0_i32_0 = arith.constant 0 : i32
    %c0_i32_1 = arith.constant 0 : i32
    return %arg1, %c0_i32, %c0_i32_0 : i32, i32, i32
  }
  func.func @transform_4(%arg0: i32, %arg1: i32) -> (i32, i32, i32) {
    %c0_i32 = arith.constant 0 : i32
    %c0_i32_0 = arith.constant 0 : i32
    %c0_i32_1 = arith.constant 0 : i32
    return %arg1, %c0_i32, %c0_i32_0 : i32, i32, i32
  }
  func.func @transform_5(%arg0: i32, %arg1: i32) -> (i32, i32, i32) {
    %c0_i32 = arith.constant 0 : i32
    %c0_i32_0 = arith.constant 0 : i32
    %c0_i32_1 = arith.constant 0 : i32
    return %arg1, %c0_i32, %c0_i32_0 : i32, i32, i32
  }
  func.func @transform_6(%arg0: i32, %arg1: i32) -> (i32, i32, i32) {
    %c0_i32 = arith.constant 0 : i32
    %c0_i32_0 = arith.constant 0 : i32
    %c0_i32_1 = arith.constant 0 : i32
    return %arg1, %c0_i32, %c0_i32_0 : i32, i32, i32
  }
  func.func @transform_7(%arg0: i32, %arg1: i32) -> (i32, i32, i32) {
    %c0_i32 = arith.constant 0 : i32
    %c0_i32_0 = arith.constant 0 : i32
    %c0_i32_1 = arith.constant 0 : i32
    return %arg1, %c0_i32, %c0_i32_0 : i32, i32, i32
  }
  func.func @transform_8(%arg0: i32, %arg1: i32) -> (i32, i32, i32) {
    %c0_i32 = arith.constant 0 : i32
    %c0_i32_0 = arith.constant 0 : i32
    %c0_i32_1 = arith.constant 0 : i32
    return %arg1, %c0_i32, %c0_i32_0 : i32, i32, i32
  }
  func.func @transform_9(%arg0: i32, %arg1: i32) -> (i32, i32, i32) {
    %c0_i32 = arith.constant 0 : i32
    %c0_i32_0 = arith.constant 0 : i32
    %c0_i32_1 = arith.constant 0 : i32
    return %arg1, %c0_i32, %c0_i32_0 : i32, i32, i32
  }
  func.func @transform_10(%arg0: i32, %arg1: i32) -> (i32, i32, i32) {
    %c0_i32 = arith.constant 0 : i32
    %c0_i32_0 = arith.constant 0 : i32
    %c0_i32_1 = arith.constant 0 : i32
    return %arg1, %c0_i32, %c0_i32_0 : i32, i32, i32
  }
  func.func @transform_11(%arg0: i32, %arg1: i32) -> (i32, i32, i32) {
    %c0_i32 = arith.constant 0 : i32
    %c0_i32_0 = arith.constant 0 : i32
    %c0_i32_1 = arith.constant 0 : i32
    return %arg1, %c0_i32, %c0_i32_0 : i32, i32, i32
  }
  func.func @transform_12(%arg0: i32, %arg1: i32) -> (i32, i32, i32) {
    %c0_i32 = arith.constant 0 : i32
    %c0_i32_0 = arith.constant 0 : i32
    %c0_i32_1 = arith.constant 0 : i32
    return %arg1, %c0_i32, %c0_i32_0 : i32, i32, i32
  }
  func.func @transform_13(%arg0: i32, %arg1: i32) -> (i32, i32, i32) {
    %c0_i32 = arith.constant 0 : i32
    %c0_i32_0 = arith.constant 0 : i32
    %c0_i32_1 = arith.constant 0 : i32
    return %arg1, %c0_i32, %c0_i32_0 : i32, i32, i32
  }
  func.func @transform_14(%arg0: i32, %arg1: i32) -> (i32, i32, i32) {
    %c0_i32 = arith.constant 0 : i32
    %c0_i32_0 = arith.constant 0 : i32
    %c0_i32_1 = arith.constant 0 : i32
    return %arg1, %c0_i32, %c0_i32_0 : i32, i32, i32
  }
  func.func @transform_15(%arg0: i32, %arg1: i32) -> (i32, i32, i32) {
    %c0_i32 = arith.constant 0 : i32
    %c0_i32_0 = arith.constant 0 : i32
    %c0_i32_1 = arith.constant 0 : i32
    return %arg1, %c0_i32, %c0_i32_0 : i32, i32, i32
  }
  func.func @transform_16(%arg0: i32, %arg1: i32) -> (i32, i32, i32) {
    %c0_i32 = arith.constant 0 : i32
    %c0_i32_0 = arith.constant 0 : i32
    %c0_i32_1 = arith.constant 0 : i32
    return %arg1, %c0_i32, %c0_i32_0 : i32, i32, i32
  }
  func.func @transform_17(%arg0: i32, %arg1: i32) -> (i32, i32, i32) {
    %c0_i32 = arith.constant 0 : i32
    %c0_i32_0 = arith.constant 0 : i32
    %c0_i32_1 = arith.constant 0 : i32
    return %arg1, %c0_i32, %c0_i32_0 : i32, i32, i32
  }
  func.func @transform_18(%arg0: i32, %arg1: i32) -> (i32, i32, i32) {
    %c0_i32 = arith.constant 0 : i32
    %c0_i32_0 = arith.constant 0 : i32
    %c0_i32_1 = arith.constant 0 : i32
    return %arg0, %c0_i32, %c0_i32_0 : i32, i32, i32
  }
}

</mosaic_0001>

<llo_original>
// kernel: tpu_custom_call.1
$region0: #{tpu_custom_call.1}
  #allocation0 [shape = 'u32[]', space=smem, size = 0x4, offset = 0x4, fixed_abs, tag = 'smem constant byte address 0x4 - core index']
  #allocation1 [shape = 'u32[72,128]{1,0:T(1,128)}', space=vmem, size = 0x9000, scoped, tag = 'internal scratch']
  #allocation2 [shape = 'f32[2,8,128]{2,1,0:T(8,128)}', space=vmem, size = 0x2000, scoped, tag = 'scratch operand']
  %s0 = inlined_call_operand.hbm [shape: f32[4,8,128], index: 0, kind: input, shape index: {}]
  %s1 = inlined_call_operand.hbm [shape: f32[4,8,128], index: 1, kind: input, shape index: {}]
  %s2 = inlined_call_operand.hbm [shape: bf16[2,128,384], index: 2, kind: input, shape index: {}]
  %s3 = inlined_call_operand.vmem [shape: f32[2,1,384], index: 3, kind: input, shape index: {}]
  %s4 = inlined_call_operand.hbm [shape: bf16[2,128,128], index: 4, kind: input, shape index: {}]
  %s5 = inlined_call_operand.vmem [shape: f32[2,1,128], index: 5, kind: input, shape index: {}]
  %s6 = inlined_call_operand.hbm [shape: bf16[2,128,128], index: 6, kind: input, shape index: {}]
  %s7 = inlined_call_operand.vmem [shape: f32[2,1,128], index: 7, kind: input, shape index: {}]
  %s8 = inlined_call_operand.hbm [shape: bf16[2,128,256], index: 8, kind: input, shape index: {}]
  %s9 = inlined_call_operand.vmem [shape: f32[2,1,256], index: 9, kind: input, shape index: {}]
  %s10 = inlined_call_operand.hbm [shape: bf16[2,128,128], index: 10, kind: input, shape index: {}]
  %s11 = inlined_call_operand.vmem [shape: f32[2,1,128], index: 11, kind: input, shape index: {}]
  %s12 = inlined_call_operand.hbm [shape: bf16[2,128,256], index: 12, kind: input, shape index: {}]
  %s13 = inlined_call_operand.vmem [shape: f32[2,1,256], index: 13, kind: input, shape index: {}]
  %s14 = inlined_call_operand.hbm [shape: bf16[2,256,128], index: 14, kind: input, shape index: {}]
  %s15 = inlined_call_operand.vmem [shape: f32[2,1,128], index: 15, kind: input, shape index: {}]
  %s16 = inlined_call_operand.vmem [shape: f32[2,3,128], index: 16, kind: input, shape index: {}]
  %s17 = inlined_call_operand.vmem [shape: f32[2,3,128], index: 17, kind: input, shape index: {}]
  %s18 = inlined_call_operand.hbm [shape: f32[4,8,128], index: 18, kind: output, shape index: {}]
  %s19 = sld [smem:[#allocation0]]
  $region149: #{tpu_custom_call.1} parent=0
    _
  %s21 = ssub.s32 1, %s19
  %s22 = scalar_select 0, %s21, %s19
  $region1: #{tpu_custom_call.1} parent=0
    #allocation3 [shape = 'u8[16384]{0}', space=vmem, size = 0x4000, scoped, tag = 'input window, operand 0']
    #allocation4 [shape = 's32[2]{0}', space=sflag, size = 0x8, scoped, tag = 'scoped memory for tpu_custom_call.1']
    #allocation5 [shape = 's32[2]{0}', space=sflag, size = 0x8, scoped, tag = 'scoped memory for tpu_custom_call.1']
    #allocation6 [shape = 'u8[16384]{0}', space=vmem, size = 0x4000, scoped, tag = 'input window, operand 1']
    #allocation7 [shape = 's32[2]{0}', space=sflag, size = 0x8, scoped, tag = 'scoped memory for tpu_custom_call.1']
    #allocation8 [shape = 'u8[196608]{0}', space=vmem, size = 0x30000, scoped, tag = 'input window, operand 2']
    #allocation9 [shape = 'u8[65536]{0}', space=vmem, size = 0x10000, scoped, tag = 'input window, operand 4']
    #allocation10 [shape = 's32[2]{0}', space=sflag, size = 0x8, scoped, tag = 'scoped memory for tpu_custom_call.1']
    #allocation11 [shape = 'u8[65536]{0}', space=vmem, size = 0x10000, scoped, tag = 'input window, operand 6']
    #allocation12 [shape = 'u8[131072]{0}', space=vmem, size = 0x20000, scoped, tag = 'input window, operand 8']
    #allocation13 [shape = 's32[2]{0}', space=sflag, size = 0x8, scoped, tag = 'scoped memory for tpu_custom_call.1']
    #allocation14 [shape = 'u8[65536]{0}', space=vmem, size = 0x10000, scoped, tag = 'input window, operand 10']
    #allocation15 [shape = 'u8[131072]{0}', space=vmem, size = 0x20000, scoped, tag = 'input window, operand 12']
    #allocation16 [shape = 's32[2]{0}', space=sflag, size = 0x8, scoped, tag = 'scoped memory for tpu_custom_call.1']
    #allocation17 [shape = 'u8[131072]{0}', space=vmem, size = 0x20000, scoped, tag = 'input window, operand 14']
    #allocation18 [shape = 'u8[16384]{0}', space=vmem, size = 0x4000, scoped, tag = 'output window, operand 0']
    %23 = vsyncpa [#allocation4], 0
    %s24 = scalar_lea.sflag [#allocation4], 1
    %25 = vsyncpa %s24, 0
    %26 = vsyncpa [#allocation7], 0
    %s27 = scalar_lea.sflag [#allocation7], 1
    %28 = vsyncpa %s27, 0
    %29 = vsyncpa [#allocation10], 0
    %s30 = scalar_lea.sflag [#allocation10], 1
    %31 = vsyncpa %s30, 0
    %32 = vsyncpa [#allocation13], 0
    %s33 = scalar_lea.sflag [#allocation13], 1
    %34 = vsyncpa %s33, 0
    %35 = vsyncpa [#allocation16], 0
    %s36 = scalar_lea.sflag [#allocation16], 1
    %37 = vsyncpa %s36, 0
    %38 = vsyncpa [#allocation5], 0
    %s39 = scalar_lea.sflag [#allocation5], 1
    %40 = vsyncpa %s39, 0
    loop: start=0, step=1, limit=6
    $region2: #{tpu_custom_call.1} parent=1 // loop_pre_header
      _
    $region3: #{tpu_custom_call.1} parent=1 // loop_header
      %s42 = sphi 0, %s46
      %p43 = scmp.ge.s32.totalorder %s42, 6
      %s49 = sphi 0, %s61
      %s50 = sphi 0, %s57
      %s51 = sphi 0, %s49
      %s52 = sphi 0, %s50
      %s53 = sphi 0, %s51
      %s54 = sphi 0, %s52
      %s64 = sphi 0, %s66
      %s67 = sphi 0, %s64
      %s68 = sphi 0, %s67
      %s84 = sphi 0, %s68
      %s90 = sphi 0, %s92
      %s93 = sphi 0, %s90
      %s94 = sphi 0, %s93
      %s110 = sphi 0, %s94
      %s116 = sphi 0, %s118
      %s119 = sphi 0, %s116
      %s120 = sphi 0, %s119
      %s136 = sphi 0, %s120
      %s142 = sphi 0, %s144
      %s145 = sphi 0, %s142
      %s146 = sphi 0, %s145
      %s162 = sphi 0, %s146
      %s168 = sphi 0, %s170
      %s171 = sphi 0, %s168
      %s172 = sphi 0, %s171
      %s188 = sphi 0, %s172
      %s194 = sphi 0, %s196
      %s197 = sphi 0, %s194
      %s198 = sphi 0, %s197
      %s214 = sphi 0, %s198
      %s220 = sphi 0, %s222
      %s223 = sphi 0, %s220
      %s224 = sphi 0, %s223
      %s240 = sphi 0, %s224
      %s246 = sphi 0, %s248
      %s249 = sphi 0, %s246
      %s250 = sphi 0, %s249
      %s266 = sphi 0, %s250
      %s272 = sphi 0, %s274
      %s275 = sphi 0, %s272
      %s276 = sphi 0, %s275
      %s292 = sphi 0, %s276
      %s298 = sphi 0, %s300
      %s301 = sphi 0, %s298
      %s302 = sphi 0, %s301
      %s318 = sphi 0, %s302
      %s324 = sphi 0, %s326
      %s327 = sphi 0, %s324
      %s328 = sphi 0, %s327
      %s344 = sphi 0, %s328
      %s350 = sphi 0, %s352
      %s353 = sphi 0, %s350
      %s354 = sphi 0, %s353
      %s370 = sphi 0, %s354
      %s376 = sphi 0, %s378
      %s379 = sphi 0, %s376
      %s380 = sphi 0, %s379
      %s396 = sphi 0, %s380
      %s402 = sphi 0, %s404
      %s405 = sphi 0, %s402
      %s406 = sphi 0, %s405
      %s422 = sphi 0, %s406
      %s428 = sphi 0, %s430
      %s431 = sphi 0, %s428
      %s432 = sphi 0, %s431
      %s448 = sphi 0, %s432
      %s454 = sphi 0, %s456
      %s457 = sphi 0, %s454
      %s458 = sphi 0, %s457
      %s474 = sphi 0, %s458
      %s480 = sphi 0, %s482
      %s483 = sphi 0, %s480
      %s484 = sphi 0, %s483
      %s500 = sphi 0, %s484
      %s506 = sphi 0, %s508
      %s509 = sphi 0, %s506
      %s510 = sphi 0, %s509
      %s526 = sphi 0, %s510
      %s532 = sphi 0, %s534
      %s535 = sphi 0, %s532
      %s536 = sphi 0, %s535
      %s552 = sphi 0, %s536
    $region4: #{tpu_custom_call.1} parent=1 // loop_header_branch
      %45 = sbr.rel (%p43) target = $region8
    $region5: #{tpu_custom_call.1} parent=1 // loop_body
      %s47 = ssub.s32 %s42, 1
      %s48 = ssub.s32 %s42, 2
      %s55 = sadd.s32 1, %s50
      %p56 = scmp.ge.s32.totalorder %s55, 2
      %s57 = scalar_select %p56, 0, %s55
      %s58 = sadd.s32 1, %s49
      %s59 = scalar_select %p56, %s58, %s49
      %p60 = scmp.ge.s32.totalorder %s59, 2
      %s61 = scalar_select %p60, 0, %s59
      %s62 = ssub.s32 %s49, %s61
      %p63 = scmp.eq.s32.totalorder %s62, 0
      %s65 = sadd.s32 %s64, 1
      %s66 = scalar_select %p63, %s64, %s65
      %p69 = pneg %p63
      %p70 = scmp.eq.s32.totalorder %s42, 3
      %p71 = por %p69, %p70
      %p72 = scmp.ne.s32.totalorder %s64, %s67
      %p73 = scmp.eq.s32.totalorder %s42, 0
      %p74 = por %p72, %p73
      %p75 = scmp.ne.s32.totalorder %s64, %s67
      %p76 = scmp.eq.s32.totalorder %s47, 3
      %p77 = por %p75, %p76
      %p78 = scmp.ne.s32.totalorder %s67, %s68
      %p79 = scmp.eq.s32.totalorder %s47, 0
      %p80 = por %p78, %p79
      %p81 = scmp.ne.s32.totalorder %s67, %s68
      %p82 = scmp.eq.s32.totalorder %s48, 3
      %p83 = por %p81, %p82
      %p85 = scmp.ne.s32.totalorder %s68, %s84
      %p86 = scmp.eq.s32.totalorder %s48, 0
      %p87 = por %p85, %p86
      %s88 = ssub.s32 %s49, %s61
      %p89 = scmp.eq.s32.totalorder %s88, 0
      %s91 = sadd.s32 %s90, 1
      %s92 = scalar_select %p89, %s90, %s91
      %p95 = pneg %p89
      %p96 = scmp.eq.s32.totalorder %s42, 3
      %p97 = por %p95, %p96
      %p98 = scmp.ne.s32.totalorder %s90, %s93
      %p99 = scmp.eq.s32.totalorder %s42, 0
      %p100 = por %p98, %p99
      %p101 = scmp.ne.s32.totalorder %s90, %s93
      %p102 = scmp.eq.s32.totalorder %s47, 3
      %p103 = por %p101, %p102
      %p104 = scmp.ne.s32.totalorder %s93, %s94
      %p105 = scmp.eq.s32.totalorder %s47, 0
      %p106 = por %p104, %p105
      %p107 = scmp.ne.s32.totalorder %s93, %s94
      %p108 = scmp.eq.s32.totalorder %s48, 3
      %p109 = por %p107, %p108
      %p111 = scmp.ne.s32.totalorder %s94, %s110
      %p112 = scmp.eq.s32.totalorder %s48, 0
      %p113 = por %p111, %p112
      %s114 = ssub.s32 %s50, %s57
      %p115 = scmp.eq.s32.totalorder %s114, 0
      %s117 = sadd.s32 %s116, 1
      %s118 = scalar_select %p115, %s116, %s117
      %p121 = pneg %p115
      %p122 = scmp.eq.s32.totalorder %s42, 3
      %p123 = por %p121, %p122
      %p124 = scmp.ne.s32.totalorder %s116, %s119
      %p125 = scmp.eq.s32.totalorder %s42, 0
      %p126 = por %p124, %p125
      %p127 = scmp.ne.s32.totalorder %s116, %s119
      %p128 = scmp.eq.s32.totalorder %s47, 3
      %p129 = por %p127, %p128
      %p130 = scmp.ne.s32.totalorder %s119, %s120
      %p131 = scmp.eq.s32.totalorder %s47, 0
      %p132 = por %p130, %p131
      %p133 = scmp.ne.s32.totalorder %s119, %s120
      %p134 = scmp.eq.s32.totalorder %s48, 3
      %p135 = por %p133, %p134
      %p137 = scmp.ne.s32.totalorder %s120, %s136
      %p138 = scmp.eq.s32.totalorder %s48, 0
      %p139 = por %p137, %p138
      %s140 = ssub.s32 %s50, %s57
      %p141 = scmp.eq.s32.totalorder %s140, 0
      %s143 = sadd.s32 %s142, 1
      %s144 = scalar_select %p141, %s142, %s143
      %p147 = pneg %p141
      %p148 = scmp.eq.s32.totalorder %s42, 3
      %p149 = por %p147, %p148
      %p150 = scmp.ne.s32.totalorder %s142, %s145
      %p151 = scmp.eq.s32.totalorder %s42, 0
      %p152 = por %p150, %p151
      %p153 = scmp.ne.s32.totalorder %s142, %s145
      %p154 = scmp.eq.s32.totalorder %s47, 3
      %p155 = por %p153, %p154
      %p156 = scmp.ne.s32.totalorder %s145, %s146
      %p157 = scmp.eq.s32.totalorder %s47, 0
      %p158 = por %p156, %p157
      %p159 = scmp.ne.s32.totalorder %s145, %s146
      %p160 = scmp.eq.s32.totalorder %s48, 3
      %p161 = por %p159, %p160
      %p163 = scmp.ne.s32.totalorder %s146, %s162
      %p164 = scmp.eq.s32.totalorder %s48, 0
      %p165 = por %p163, %p164
      %s166 = ssub.s32 %s50, %s57
      %p167 = scmp.eq.s32.totalorder %s166, 0
      %s169 = sadd.s32 %s168, 1
      %s170 = scalar_select %p167, %s168, %s169
      %p173 = pneg %p167
      %p174 = scmp.eq.s32.totalorder %s42, 3
      %p175 = por %p173, %p174
      %p176 = scmp.ne.s32.totalorder %s168, %s171
      %p177 = scmp.eq.s32.totalorder %s42, 0
      %p178 = por %p176, %p177
      %p179 = scmp.ne.s32.totalorder %s168, %s171
      %p180 = scmp.eq.s32.totalorder %s47, 3
      %p181 = por %p179, %p180
      %p182 = scmp.ne.s32.totalorder %s171, %s172
      %p183 = scmp.eq.s32.totalorder %s47, 0
      %p184 = por %p182, %p183
      %p185 = scmp.ne.s32.totalorder %s171, %s172
      %p186 = scmp.eq.s32.totalorder %s48, 3
      %p187 = por %p185, %p186
      %p189 = scmp.ne.s32.totalorder %s172, %s188
      %p190 = scmp.eq.s32.totalorder %s48, 0
      %p191 = por %p189, %p190
      %s192 = ssub.s32 %s50, %s57
      %p193 = scmp.eq.s32.totalorder %s192, 0
      %s195 = sadd.s32 %s194, 1
      %s196 = scalar_select %p193, %s194, %s195
      %p199 = pneg %p193
      %p200 = scmp.eq.s32.totalorder %s42, 3
      %p201 = por %p199, %p200
      %p202 = scmp.ne.s32.totalorder %s194, %s197
      %p203 = scmp.eq.s32.totalorder %s42, 0
      %p204 = por %p202, %p203
      %p205 = scmp.ne.s32.totalorder %s194, %s197
      %p206 = scmp.eq.s32.totalorder %s47, 3
      %p207 = por %p205, %p206
      %p208 = scmp.ne.s32.totalorder %s197, %s198
      %p209 = scmp.eq.s32.totalorder %s47, 0
      %p210 = por %p208, %p209
      %p211 = scmp.ne.s32.totalorder %s197, %s198
      %p212 = scmp.eq.s32.totalorder %s48, 3
      %p213 = por %p211, %p212
      %p215 = scmp.ne.s32.totalorder %s198, %s214
      %p216 = scmp.eq.s32.totalorder %s48, 0
      %p217 = por %p215, %p216
      %s218 = ssub.s32 %s50, %s57
      %p219 = scmp.eq.s32.totalorder %s218, 0
      %s221 = sadd.s32 %s220, 1
      %s222 = scalar_select %p219, %s220, %s221
      %p225 = pneg %p219
      %p226 = scmp.eq.s32.totalorder %s42, 3
      %p227 = por %p225, %p226
      %p228 = scmp.ne.s32.totalorder %s220, %s223
      %p229 = scmp.eq.s32.totalorder %s42, 0
      %p230 = por %p228, %p229
      %p231 = scmp.ne.s32.totalorder %s220, %s223
      %p232 = scmp.eq.s32.totalorder %s47, 3
      %p233 = por %p231, %p232
      %p234 = scmp.ne.s32.totalorder %s223, %s224
      %p235 = scmp.eq.s32.totalorder %s47, 0
      %p236 = por %p234, %p235
      %p237 = scmp.ne.s32.totalorder %s223, %s224
      %p238 = scmp.eq.s32.totalorder %s48, 3
      %p239 = por %p237, %p238
      %p241 = scmp.ne.s32.totalorder %s224, %s240
      %p242 = scmp.eq.s32.totalorder %s48, 0
      %p243 = por %p241, %p242
      %s244 = ssub.s32 %s50, %s57
      %p245 = scmp.eq.s32.totalorder %s244, 0
      %s247 = sadd.s32 %s246, 1
      %s248 = scalar_select %p245, %s246, %s247
      %p251 = pneg %p245
      %p252 = scmp.eq.s32.totalorder %s42, 3
      %p253 = por %p251, %p252
      %p254 = scmp.ne.s32.totalorder %s246, %s249
      %p255 = scmp.eq.s32.totalorder %s42, 0
      %p256 = por %p254, %p255
      %p257 = scmp.ne.s32.totalorder %s246, %s249
      %p258 = scmp.eq.s32.totalorder %s47, 3
      %p259 = por %p257, %p258
      %p260 = scmp.ne.s32.totalorder %s249, %s250
      %p261 = scmp.eq.s32.totalorder %s47, 0
      %p262 = por %p260, %p261
      %p263 = scmp.ne.s32.totalorder %s249, %s250
      %p264 = scmp.eq.s32.totalorder %s48, 3
      %p265 = por %p263, %p264
      %p267 = scmp.ne.s32.totalorder %s250, %s266
      %p268 = scmp.eq.s32.totalorder %s48, 0
      %p269 = por %p267, %p268
      %s270 = ssub.s32 %s50, %s57
      %p271 = scmp.eq.s32.totalorder %s270, 0
      %s273 = sadd.s32 %s272, 1
      %s274 = scalar_select %p271, %s272, %s273
      %p277 = pneg %p271
      %p278 = scmp.eq.s32.totalorder %s42, 3
      %p279 = por %p277, %p278
      %p280 = scmp.ne.s32.totalorder %s272, %s275
      %p281 = scmp.eq.s32.totalorder %s42, 0
      %p282 = por %p280, %p281
      %p283 = scmp.ne.s32.totalorder %s272, %s275
      %p284 = scmp.eq.s32.totalorder %s47, 3
      %p285 = por %p283, %p284
      %p286 = scmp.ne.s32.totalorder %s275, %s276
      %p287 = scmp.eq.s32.totalorder %s47, 0
      %p288 = por %p286, %p287
      %p289 = scmp.ne.s32.totalorder %s275, %s276
      %p290 = scmp.eq.s32.totalorder %s48, 3
      %p291 = por %p289, %p290
      %p293 = scmp.ne.s32.totalorder %s276, %s292
      %p294 = scmp.eq.s32.totalorder %s48, 0
      %p295 = por %p293, %p294
      %s296 = ssub.s32 %s50, %s57
      %p297 = scmp.eq.s32.totalorder %s296, 0
      %s299 = sadd.s32 %s298, 1
      %s300 = scalar_select %p297, %s298, %s299
      %p303 = pneg %p297
      %p304 = scmp.eq.s32.totalorder %s42, 3
      %p305 = por %p303, %p304
      %p306 = scmp.ne.s32.totalorder %s298, %s301
      %p307 = scmp.eq.s32.totalorder %s42, 0
      %p308 = por %p306, %p307
      %p309 = scmp.ne.s32.totalorder %s298, %s301
      %p310 = scmp.eq.s32.totalorder %s47, 3
      %p311 = por %p309, %p310
      %p312 = scmp.ne.s32.totalorder %s301, %s302
      %p313 = scmp.eq.s32.totalorder %s47, 0
      %p314 = por %p312, %p313
      %p315 = scmp.ne.s32.totalorder %s301, %s302
      %p316 = scmp.eq.s32.totalorder %s48, 3
      %p317 = por %p315, %p316
      %p319 = scmp.ne.s32.totalorder %s302, %s318
      %p320 = scmp.eq.s32.totalorder %s48, 0
      %p321 = por %p319, %p320
      %s322 = ssub.s32 %s50, %s57
      %p323 = scmp.eq.s32.totalorder %s322, 0
      %s325 = sadd.s32 %s324, 1
      %s326 = scalar_select %p323, %s324, %s325
      %p329 = pneg %p323
      %p330 = scmp.eq.s32.totalorder %s42, 3
      %p331 = por %p329, %p330
      %p332 = scmp.ne.s32.totalorder %s324, %s327
      %p333 = scmp.eq.s32.totalorder %s42, 0
      %p334 = por %p332, %p333
      %p335 = scmp.ne.s32.totalorder %s324, %s327
      %p336 = scmp.eq.s32.totalorder %s47, 3
      %p337 = por %p335, %p336
      %p338 = scmp.ne.s32.totalorder %s327, %s328
      %p339 = scmp.eq.s32.totalorder %s47, 0
      %p340 = por %p338, %p339
      %p341 = scmp.ne.s32.totalorder %s327, %s328
      %p342 = scmp.eq.s32.totalorder %s48, 3
      %p343 = por %p341, %p342
      %p345 = scmp.ne.s32.totalorder %s328, %s344
      %p346 = scmp.eq.s32.totalorder %s48, 0
      %p347 = por %p345, %p346
      %s348 = ssub.s32 %s50, %s57
      %p349 = scmp.eq.s32.totalorder %s348, 0
      %s351 = sadd.s32 %s350, 1
      %s352 = scalar_select %p349, %s350, %s351
      %p355 = pneg %p349
      %p356 = scmp.eq.s32.totalorder %s42, 3
      %p357 = por %p355, %p356
      %p358 = scmp.ne.s32.totalorder %s350, %s353
      %p359 = scmp.eq.s32.totalorder %s42, 0
      %p360 = por %p358, %p359
      %p361 = scmp.ne.s32.totalorder %s350, %s353
      %p362 = scmp.eq.s32.totalorder %s47, 3
      %p363 = por %p361, %p362
      %p364 = scmp.ne.s32.totalorder %s353, %s354
      %p365 = scmp.eq.s32.totalorder %s47, 0
      %p366 = por %p364, %p365
      %p367 = scmp.ne.s32.totalorder %s353, %s354
      %p368 = scmp.eq.s32.totalorder %s48, 3
      %p369 = por %p367, %p368
      %p371 = scmp.ne.s32.totalorder %s354, %s370
      %p372 = scmp.eq.s32.totalorder %s48, 0
      %p373 = por %p371, %p372
      %s374 = ssub.s32 %s50, %s57
      %p375 = scmp.eq.s32.totalorder %s374, 0
      %s377 = sadd.s32 %s376, 1
      %s378 = scalar_select %p375, %s376, %s377
      %p381 = pneg %p375
      %p382 = scmp.eq.s32.totalorder %s42, 3
      %p383 = por %p381, %p382
      %p384 = scmp.ne.s32.totalorder %s376, %s379
      %p385 = scmp.eq.s32.totalorder %s42, 0
      %p386 = por %p384, %p385
      %p387 = scmp.ne.s32.totalorder %s376, %s379
      %p388 = scmp.eq.s32.totalorder %s47, 3
      %p389 = por %p387, %p388
      %p390 = scmp.ne.s32.totalorder %s379, %s380
      %p391 = scmp.eq.s32.totalorder %s47, 0
      %p392 = por %p390, %p391
      %p393 = scmp.ne.s32.totalorder %s379, %s380
      %p394 = scmp.eq.s32.totalorder %s48, 3
      %p395 = por %p393, %p394
      %p397 = scmp.ne.s32.totalorder %s380, %s396
      %p398 = scmp.eq.s32.totalorder %s48, 0
      %p399 = por %p397, %p398
      %s400 = ssub.s32 %s50, %s57
      %p401 = scmp.eq.s32.totalorder %s400, 0
      %s403 = sadd.s32 %s402, 1
      %s404 = scalar_select %p401, %s402, %s403
      %p407 = pneg %p401
      %p408 = scmp.eq.s32.totalorder %s42, 3
      %p409 = por %p407, %p408
      %p410 = scmp.ne.s32.totalorder %s402, %s405
      %p411 = scmp.eq.s32.totalorder %s42, 0
      %p412 = por %p410, %p411
      %p413 = scmp.ne.s32.totalorder %s402, %s405
      %p414 = scmp.eq.s32.totalorder %s47, 3
      %p415 = por %p413, %p414
      %p416 = scmp.ne.s32.totalorder %s405, %s406
      %p417 = scmp.eq.s32.totalorder %s47, 0
      %p418 = por %p416, %p417
      %p419 = scmp.ne.s32.totalorder %s405, %s406
      %p420 = scmp.eq.s32.totalorder %s48, 3
      %p421 = por %p419, %p420
      %p423 = scmp.ne.s32.totalorder %s406, %s422
      %p424 = scmp.eq.s32.totalorder %s48, 0
      %p425 = por %p423, %p424
      %s426 = ssub.s32 %s50, %s57
      %p427 = scmp.eq.s32.totalorder %s426, 0
      %s429 = sadd.s32 %s428, 1
      %s430 = scalar_select %p427, %s428, %s429
      %p433 = pneg %p427
      %p434 = scmp.eq.s32.totalorder %s42, 3
      %p435 = por %p433, %p434
      %p436 = scmp.ne.s32.totalorder %s428, %s431
      %p437 = scmp.eq.s32.totalorder %s42, 0
      %p438 = por %p436, %p437
      %p439 = scmp.ne.s32.totalorder %s428, %s431
      %p440 = scmp.eq.s32.totalorder %s47, 3
      %p441 = por %p439, %p440
      %p442 = scmp.ne.s32.totalorder %s431, %s432
      %p443 = scmp.eq.s32.totalorder %s47, 0
      %p444 = por %p442, %p443
      %p445 = scmp.ne.s32.totalorder %s431, %s432
      %p446 = scmp.eq.s32.totalorder %s48, 3
      %p447 = por %p445, %p446
      %p449 = scmp.ne.s32.totalorder %s432, %s448
      %p450 = scmp.eq.s32.totalorder %s48, 0
      %p451 = por %p449, %p450
      %s452 = ssub.s32 %s50, %s57
      %p453 = scmp.eq.s32.totalorder %s452, 0
      %s455 = sadd.s32 %s454, 1
      %s456 = scalar_select %p453, %s454, %s455
      %p459 = pneg %p453
      %p460 = scmp.eq.s32.totalorder %s42, 3
      %p461 = por %p459, %p460
      %p462 = scmp.ne.s32.totalorder %s454, %s457
      %p463 = scmp.eq.s32.totalorder %s42, 0
      %p464 = por %p462, %p463
      %p465 = scmp.ne.s32.totalorder %s454, %s457
      %p466 = scmp.eq.s32.totalorder %s47, 3
      %p467 = por %p465, %p466
      %p468 = scmp.ne.s32.totalorder %s457, %s458
      %p469 = scmp.eq.s32.totalorder %s47, 0
      %p470 = por %p468, %p469
      %p471 = scmp.ne.s32.totalorder %s457, %s458
      %p472 = scmp.eq.s32.totalorder %s48, 3
      %p473 = por %p471, %p472
      %p475 = scmp.ne.s32.totalorder %s458, %s474
      %p476 = scmp.eq.s32.totalorder %s48, 0
      %p477 = por %p475, %p476
      %s478 = ssub.s32 %s50, %s57
      %p479 = scmp.eq.s32.totalorder %s478, 0
      %s481 = sadd.s32 %s480, 1
      %s482 = scalar_select %p479, %s480, %s481
      %p485 = pneg %p479
      %p486 = scmp.eq.s32.totalorder %s42, 3
      %p487 = por %p485, %p486
      %p488 = scmp.ne.s32.totalorder %s480, %s483
      %p489 = scmp.eq.s32.totalorder %s42, 0
      %p490 = por %p488, %p489
      %p491 = scmp.ne.s32.totalorder %s480, %s483
      %p492 = scmp.eq.s32.totalorder %s47, 3
      %p493 = por %p491, %p492
      %p494 = scmp.ne.s32.totalorder %s483, %s484
      %p495 = scmp.eq.s32.totalorder %s47, 0
      %p496 = por %p494, %p495
      %p497 = scmp.ne.s32.totalorder %s483, %s484
      %p498 = scmp.eq.s32.totalorder %s48, 3
      %p499 = por %p497, %p498
      %p501 = scmp.ne.s32.totalorder %s484, %s500
      %p502 = scmp.eq.s32.totalorder %s48, 0
      %p503 = por %p501, %p502
      %s504 = ssub.s32 %s50, %s57
      %p505 = scmp.eq.s32.totalorder %s504, 0
      %s507 = sadd.s32 %s506, 1
      %s508 = scalar_select %p505, %s506, %s507
      %p511 = pneg %p505
      %p512 = scmp.eq.s32.totalorder %s42, 3
      %p513 = por %p511, %p512
      %p514 = scmp.ne.s32.totalorder %s506, %s509
      %p515 = scmp.eq.s32.totalorder %s42, 0
      %p516 = por %p514, %p515
      %p517 = scmp.ne.s32.totalorder %s506, %s509
      %p518 = scmp.eq.s32.totalorder %s47, 3
      %p519 = por %p517, %p518
      %p520 = scmp.ne.s32.totalorder %s509, %s510
      %p521 = scmp.eq.s32.totalorder %s47, 0
      %p522 = por %p520, %p521
      %p523 = scmp.ne.s32.totalorder %s509, %s510
      %p524 = scmp.eq.s32.totalorder %s48, 3
      %p525 = por %p523, %p524
      %p527 = scmp.ne.s32.totalorder %s510, %s526
      %p528 = scmp.eq.s32.totalorder %s48, 0
      %p529 = por %p527, %p528
      %s530 = ssub.s32 %s49, %s61
      %p531 = scmp.eq.s32.totalorder %s530, 0
      %s533 = sadd.s32 %s532, 1
      %s534 = scalar_select %p531, %s532, %s533
      %p537 = pneg %p531
      %p538 = scmp.eq.s32.totalorder %s42, 3
      %p539 = por %p537, %p538
      %p540 = scmp.ne.s32.totalorder %s532, %s535
      %p541 = scmp.eq.s32.totalorder %s42, 0
      %p542 = por %p540, %p541
      %p543 = scmp.ne.s32.totalorder %s532, %s535
      %p544 = scmp.eq.s32.totalorder %s47, 3
      %p545 = por %p543, %p544
      %p546 = scmp.ne.s32.totalorder %s535, %s536
      %p547 = scmp.eq.s32.totalorder %s47, 0
      %p548 = por %p546, %p547
      %p549 = scmp.ne.s32.totalorder %s535, %s536
      %p550 = scmp.eq.s32.totalorder %s48, 3
      %p551 = por %p549, %p550
      %p553 = scmp.ne.s32.totalorder %s536, %s552
      %p554 = scmp.eq.s32.totalorder %s48, 0
      %p555 = por %p553, %p554
      %p556 = scmp.le.s32.totalorder 1, %s42
      %p557 = scmp.lt.s32.totalorder %s42, 5
      %p558 = pnand %p556, %p557
      %p559 = pneg %p558
      // Predicated region
      $region9: #{tpu_custom_call.1} parent=5 // pred_check
        _
      $region10: #{tpu_custom_call.1} parent=5 // pred_check_branch
        %561 = sbr.rel (%p558) target = $region12
      $region11: #{tpu_custom_call.1} parent=5 // pred_region
        %s562 = ssub.s32 %s42, 1
      $region12: #{tpu_custom_call.1} parent=5 // pred_fallthru
        _
      %p563 = scmp.lt.s32.totalorder %s42, 4
      // Predicated region
      $region13: #{tpu_custom_call.1} parent=5 // pred_check
        %p564 = pneg %p563
      $region14: #{tpu_custom_call.1} parent=5 // pred_check_branch
        %566 = sbr.rel (%p564) target = $region16
      $region15: #{tpu_custom_call.1} parent=5 // pred_region
        // Predicated region
        $region17: #{tpu_custom_call.1} parent=15 // pred_check
          %p567 = pneg %p74
        $region18: #{tpu_custom_call.1} parent=15 // pred_check_branch
          %569 = sbr.rel (%p567) target = $region20
        $region19: #{tpu_custom_call.1} parent=15 // pred_region
          %s570 = sand.u32 %s64, 1
          %s571 = scalar_lea.sflag [#allocation4], %s570
          %s572 = sand.u32 %s64, 1
          %s573 = smul.addr %s572, 16
          %s574 = scalar_lea.vmem [#allocation3], %s573
          %s575 = smul.u32 2, %s49
          %577 = vsyncadd %s571, 0
          %s578 = smul.addr %s575, 8
          %s579 = scalar_lea.hbm %s0, %s578
          %s580 = sshll.u32 %s579, 4
          %s581 = int_to_ptr.hbm [resolvable:$true] %s580
          %s582 = sshll.u32 %s574, 4
          %s583 = int_to_ptr.vmem [resolvable:$true] %s582
          %588 = dma.hbm_to_vmem [thread:$0]  %s581, 256, %s583, %s571, 128, 128, 8
        $region20: #{tpu_custom_call.1} parent=15 // pred_fallthru
          _
        // Predicated region
        $region21: #{tpu_custom_call.1} parent=15 // pred_check
          %p589 = pneg %p100
        $region22: #{tpu_custom_call.1} parent=15 // pred_check_branch
          %591 = sbr.rel (%p589) target = $region24
        $region23: #{tpu_custom_call.1} parent=15 // pred_region
          %s592 = sand.u32 %s42, 1
          %s593 = scalar_lea.sflag [#allocation7], %s592
          %s594 = sand.u32 %s90, 1
          %s595 = smul.addr %s594, 16
          %s596 = scalar_lea.vmem [#allocation6], %s595
          %s597 = smul.u32 2, %s49
          %599 = vsyncadd %s593, 0
          %s600 = smul.addr %s597, 8
          %s601 = scalar_lea.hbm %s1, %s600
          %s602 = sshll.u32 %s601, 4
          %s603 = int_to_ptr.hbm [resolvable:$true] %s602
          %s604 = sshll.u32 %s596, 4
          %s605 = int_to_ptr.vmem [resolvable:$true] %s604
          %610 = dma.hbm_to_vmem [thread:$0]  %s603, 256, %s605, %s593, 128, 128, 8
        $region24: #{tpu_custom_call.1} parent=15 // pred_fallthru
          _
        // Predicated region
        $region25: #{tpu_custom_call.1} parent=15 // pred_check
          %p611 = pneg %p126
        $region26: #{tpu_custom_call.1} parent=15 // pred_check_branch
          %613 = sbr.rel (%p611) target = $region28
        $region27: #{tpu_custom_call.1} parent=15 // pred_region
          %s614 = sand.u32 %s42, 1
          %s615 = scalar_lea.sflag [#allocation7], %s614
          %s616 = sand.u32 %s116, 1
          %s617 = smul.addr %s616, 192
          %s618 = scalar_lea.vmem [#allocation8], %s617
          %620 = vsyncadd %s615, 0
          %s621 = smul.addr %s50, 48
          %s622 = smul.addr %s621, 4
          %s623 = scalar_lea.hbm %s2, %s622
          %s624 = sshll.u32 %s623, 4
          %s625 = int_to_ptr.hbm [resolvable:$true] %s624
          %s626 = sshll.u32 %s618, 4
          %s627 = int_to_ptr.vmem [resolvable:$true] %s626
          %632 = dma.hbm_to_vmem [thread:$0]  %s625, 3072, %s627, %s615, 192, 192, 12
        $region28: #{tpu_custom_call.1} parent=15 // pred_fallthru
          _
        // Predicated region
        $region29: #{tpu_custom_call.1} parent=15 // pred_check
          %p633 = pneg %p152
        $region30: #{tpu_custom_call.1} parent=15 // pred_check_branch
          %635 = sbr.rel (%p633) target = $region32
        $region31: #{tpu_custom_call.1} parent=15 // pred_region
          %p636 = scmp.lt.s32.totalorder %s50, 1
          %s637 = scalar_select %p636, %s50, 1
          %s638 = smul.addr %s637, 3
          %s639 = scalar_lea.vmem %s3, %s638
        $region32: #{tpu_custom_call.1} parent=15 // pred_fallthru
          _
        // Predicated region
        $region33: #{tpu_custom_call.1} parent=15 // pred_check
          %p640 = pneg %p178
        $region34: #{tpu_custom_call.1} parent=15 // pred_check_branch
          %642 = sbr.rel (%p640) target = $region36
        $region35: #{tpu_custom_call.1} parent=15 // pred_region
          %s643 = sand.u32 %s42, 1
          %s644 = scalar_lea.sflag [#allocation10], %s643
          %s645 = sand.u32 %s168, 1
          %s646 = smul.addr %s645, 64
          %s647 = scalar_lea.vmem [#allocation9], %s646
          %649 = vsyncadd %s644, 0
          %s650 = smul.addr %s50, 16
          %s651 = smul.addr %s650, 4
          %s652 = scalar_lea.hbm %s4, %s651
          %s653 = sshll.u32 %s652, 4
          %s654 = int_to_ptr.hbm [resolvable:$true] %s653
          %s655 = sshll.u32 %s647, 4
          %s656 = int_to_ptr.vmem [resolvable:$true] %s655
          %661 = dma.hbm_to_vmem [thread:$0]  %s654, 1024, %s656, %s644, 64, 64, 4
        $region36: #{tpu_custom_call.1} parent=15 // pred_fallthru
          _
        // Predicated region
        $region37: #{tpu_custom_call.1} parent=15 // pred_check
          %p662 = pneg %p204
        $region38: #{tpu_custom_call.1} parent=15 // pred_check_branch
          %664 = sbr.rel (%p662) target = $region40
        $region39: #{tpu_custom_call.1} parent=15 // pred_region
          %p665 = scmp.lt.s32.totalorder %s50, 1
          %s666 = scalar_select %p665, %s50, 1
          %s667 = scalar_lea.vmem %s5, %s666
        $region40: #{tpu_custom_call.1} parent=15 // pred_fallthru
          _
        // Predicated region
        $region41: #{tpu_custom_call.1} parent=15 // pred_check
          %p668 = pneg %p230
        $region42: #{tpu_custom_call.1} parent=15 // pred_check_branch
          %670 = sbr.rel (%p668) target = $region44
        $region43: #{tpu_custom_call.1} parent=15 // pred_region
          %s671 = sand.u32 %s42, 1
          %s672 = scalar_lea.sflag [#allocation10], %s671
          %s673 = sand.u32 %s220, 1
          %s674 = smul.addr %s673, 64
          %s675 = scalar_lea.vmem [#allocation11], %s674
          %677 = vsyncadd %s672, 0
          %s678 = smul.addr %s50, 16
          %s679 = smul.addr %s678, 4
          %s680 = scalar_lea.hbm %s6, %s679
          %s681 = sshll.u32 %s680, 4
          %s682 = int_to_ptr.hbm [resolvable:$true] %s681
          %s683 = sshll.u32 %s675, 4
          %s684 = int_to_ptr.vmem [resolvable:$true] %s683
          %689 = dma.hbm_to_vmem [thread:$0]  %s682, 1024, %s684, %s672, 64, 64, 4
        $region44: #{tpu_custom_call.1} parent=15 // pred_fallthru
          _
        // Predicated region
        $region45: #{tpu_custom_call.1} parent=15 // pred_check
          %p690 = pneg %p256
        $region46: #{tpu_custom_call.1} parent=15 // pred_check_branch
          %692 = sbr.rel (%p690) target = $region48
        $region47: #{tpu_custom_call.1} parent=15 // pred_region
          %p693 = scmp.lt.s32.totalorder %s50, 1
          %s694 = scalar_select %p693, %s50, 1
          %s695 = scalar_lea.vmem %s7, %s694
        $region48: #{tpu_custom_call.1} parent=15 // pred_fallthru
          _
        // Predicated region
        $region49: #{tpu_custom_call.1} parent=15 // pred_check
          %p696 = pneg %p282
        $region50: #{tpu_custom_call.1} parent=15 // pred_check_branch
          %698 = sbr.rel (%p696) target = $region52
        $region51: #{tpu_custom_call.1} parent=15 // pred_region
          %s699 = sand.u32 %s42, 1
          %s700 = scalar_lea.sflag [#allocation13], %s699
          %s701 = sand.u32 %s272, 1
          %s702 = smul.addr %s701, 128
          %s703 = scalar_lea.vmem [#allocation12], %s702
          %705 = vsyncadd %s700, 0
          %s706 = smul.addr %s50, 32
          %s707 = smul.addr %s706, 4
          %s708 = scalar_lea.hbm %s8, %s707
          %s709 = sshll.u32 %s708, 4
          %s710 = int_to_ptr.hbm [resolvable:$true] %s709
          %s711 = sshll.u32 %s703, 4
          %s712 = int_to_ptr.vmem [resolvable:$true] %s711
          %717 = dma.hbm_to_vmem [thread:$0]  %s710, 2048, %s712, %s700, 128, 128, 8
        $region52: #{tpu_custom_call.1} parent=15 // pred_fallthru
          _
        // Predicated region
        $region53: #{tpu_custom_call.1} parent=15 // pred_check
          %p718 = pneg %p308
        $region54: #{tpu_custom_call.1} parent=15 // pred_check_branch
          %720 = sbr.rel (%p718) target = $region56
        $region55: #{tpu_custom_call.1} parent=15 // pred_region
          %p721 = scmp.lt.s32.totalorder %s50, 1
          %s722 = scalar_select %p721, %s50, 1
          %s723 = smul.addr %s722, 2
          %s724 = scalar_lea.vmem %s9, %s723
        $region56: #{tpu_custom_call.1} parent=15 // pred_fallthru
          _
        // Predicated region
        $region57: #{tpu_custom_call.1} parent=15 // pred_check
          %p725 = pneg %p334
        $region58: #{tpu_custom_call.1} parent=15 // pred_check_branch
          %727 = sbr.rel (%p725) target = $region60
        $region59: #{tpu_custom_call.1} parent=15 // pred_region
          %s728 = sand.u32 %s42, 1
          %s729 = scalar_lea.sflag [#allocation13], %s728
          %s730 = sand.u32 %s324, 1
          %s731 = smul.addr %s730, 64
          %s732 = scalar_lea.vmem [#allocation14], %s731
          %734 = vsyncadd %s729, 0
          %s735 = smul.addr %s50, 16
          %s736 = smul.addr %s735, 4
          %s737 = scalar_lea.hbm %s10, %s736
          %s738 = sshll.u32 %s737, 4
          %s739 = int_to_ptr.hbm [resolvable:$true] %s738
          %s740 = sshll.u32 %s732, 4
          %s741 = int_to_ptr.vmem [resolvable:$true] %s740
          %746 = dma.hbm_to_vmem [thread:$0]  %s739, 1024, %s741, %s729, 64, 64, 4
        $region60: #{tpu_custom_call.1} parent=15 // pred_fallthru
          _
        // Predicated region
        $region61: #{tpu_custom_call.1} parent=15 // pred_check
          %p747 = pneg %p360
        $region62: #{tpu_custom_call.1} parent=15 // pred_check_branch
          %749 = sbr.rel (%p747) target = $region64
        $region63: #{tpu_custom_call.1} parent=15 // pred_region
          %p750 = scmp.lt.s32.totalorder %s50, 1
          %s751 = scalar_select %p750, %s50, 1
          %s752 = scalar_lea.vmem %s11, %s751
        $region64: #{tpu_custom_call.1} parent=15 // pred_fallthru
          _
        // Predicated region
        $region65: #{tpu_custom_call.1} parent=15 // pred_check
          %p753 = pneg %p386
        $region66: #{tpu_custom_call.1} parent=15 // pred_check_branch
          %755 = sbr.rel (%p753) target = $region68
        $region67: #{tpu_custom_call.1} parent=15 // pred_region
          %s756 = sand.u32 %s42, 1
          %s757 = scalar_lea.sflag [#allocation16], %s756
          %s758 = sand.u32 %s376, 1
          %s759 = smul.addr %s758, 128
          %s760 = scalar_lea.vmem [#allocation15], %s759
          %762 = vsyncadd %s757, 0
          %s763 = smul.addr %s50, 32
          %s764 = smul.addr %s763, 4
          %s765 = scalar_lea.hbm %s12, %s764
          %s766 = sshll.u32 %s765, 4
          %s767 = int_to_ptr.hbm [resolvable:$true] %s766
          %s768 = sshll.u32 %s760, 4
          %s769 = int_to_ptr.vmem [resolvable:$true] %s768
          %774 = dma.hbm_to_vmem [thread:$0]  %s767, 2048, %s769, %s757, 128, 128, 8
        $region68: #{tpu_custom_call.1} parent=15 // pred_fallthru
          _
        // Predicated region
        $region69: #{tpu_custom_call.1} parent=15 // pred_check
          %p775 = pneg %p412
        $region70: #{tpu_custom_call.1} parent=15 // pred_check_branch
          %777 = sbr.rel (%p775) target = $region72
        $region71: #{tpu_custom_call.1} parent=15 // pred_region
          %p778 = scmp.lt.s32.totalorder %s50, 1
          %s779 = scalar_select %p778, %s50, 1
          %s780 = smul.addr %s779, 2
          %s781 = scalar_lea.vmem %s13, %s780
        $region72: #{tpu_custom_call.1} parent=15 // pred_fallthru
          _
        // Predicated region
        $region73: #{tpu_custom_call.1} parent=15 // pred_check
          %p782 = pneg %p438
        $region74: #{tpu_custom_call.1} parent=15 // pred_check_branch
          %784 = sbr.rel (%p782) target = $region76
        $region75: #{tpu_custom_call.1} parent=15 // pred_region
          %s785 = sand.u32 %s42, 1
          %s786 = scalar_lea.sflag [#allocation16], %s785
          %s787 = sand.u32 %s428, 1
          %s788 = smul.addr %s787, 128
          %s789 = scalar_lea.vmem [#allocation17], %s788
          %791 = vsyncadd %s786, 0
          %s792 = smul.addr %s50, 32
          %s793 = smul.addr %s792, 4
          %s794 = scalar_lea.hbm %s14, %s793
          %s795 = sshll.u32 %s794, 4
          %s796 = int_to_ptr.hbm [resolvable:$true] %s795
          %s797 = sshll.u32 %s789, 4
          %s798 = int_to_ptr.vmem [resolvable:$true] %s797
          %803 = dma.hbm_to_vmem [thread:$0]  %s796, 2048, %s798, %s786, 64, 64, 4
        $region76: #{tpu_custom_call.1} parent=15 // pred_fallthru
          _
        // Predicated region
        $region77: #{tpu_custom_call.1} parent=15 // pred_check
          %p804 = pneg %p464
        $region78: #{tpu_custom_call.1} parent=15 // pred_check_branch
          %806 = sbr.rel (%p804) target = $region80
        $region79: #{tpu_custom_call.1} parent=15 // pred_region
          %p807 = scmp.lt.s32.totalorder %s50, 1
          %s808 = scalar_select %p807, %s50, 1
          %s809 = scalar_lea.vmem %s15, %s808
        $region80: #{tpu_custom_call.1} parent=15 // pred_fallthru
          _
        // Predicated region
        $region81: #{tpu_custom_call.1} parent=15 // pred_check
          %p810 = pneg %p490
        $region82: #{tpu_custom_call.1} parent=15 // pred_check_branch
          %812 = sbr.rel (%p810) target = $region84
        $region83: #{tpu_custom_call.1} parent=15 // pred_region
          %p813 = scmp.lt.s32.totalorder %s50, 1
          %s814 = scalar_select %p813, %s50, 1
          %s815 = smul.addr %s814, 4
          %s816 = scalar_lea.vmem %s16, %s815
        $region84: #{tpu_custom_call.1} parent=15 // pred_fallthru
          _
        // Predicated region
        $region85: #{tpu_custom_call.1} parent=15 // pred_check
          %p817 = pneg %p516
        $region86: #{tpu_custom_call.1} parent=15 // pred_check_branch
          %819 = sbr.rel (%p817) target = $region88
        $region87: #{tpu_custom_call.1} parent=15 // pred_region
          %p820 = scmp.lt.s32.totalorder %s50, 1
          %s821 = scalar_select %p820, %s50, 1
          %s822 = smul.addr %s821, 4
          %s823 = scalar_lea.vmem %s17, %s822
        $region88: #{tpu_custom_call.1} parent=15 // pred_fallthru
          _
      $region16: #{tpu_custom_call.1} parent=5 // pred_fallthru
        _
      %p824 = scmp.le.s32.totalorder 1, %s42
      %p825 = scmp.lt.s32.totalorder %s42, 5
      %p826 = pnand %p824, %p825
      %p827 = pneg %p826
      // Predicated region
      $region89: #{tpu_custom_call.1} parent=5 // pred_check
        _
      $region90: #{tpu_custom_call.1} parent=5 // pred_check_branch
        %829 = sbr.rel (%p826) target = $region92
      $region91: #{tpu_custom_call.1} parent=5 // pred_region
        %s830 = ssub.s32 %s42, 1
        %s831 = sand.u32 %s67, 1
        %s832 = scalar_lea.sflag [#allocation4], %s831
        %s833 = sand.u32 %s67, 1
        %s834 = smul.addr %s833, 16
        %s835 = scalar_lea.vmem [#allocation3], %s834
        // Predicated region
        $region93: #{tpu_custom_call.1} parent=91 // pred_check
          %p836 = pneg %p80
        $region94: #{tpu_custom_call.1} parent=91 // pred_check_branch
          %838 = sbr.rel (%p836) target = $region96
        $region95: #{tpu_custom_call.1} parent=91 // pred_region
          %840 = dma.done %s832, 256
        $region96: #{tpu_custom_call.1} parent=91 // pred_fallthru
          _
        %s841 = sand.u32 %s47, 1
        %s842 = scalar_lea.sflag [#allocation7], %s841
        %s843 = sand.u32 %s93, 1
        %s844 = smul.addr %s843, 16
        %s845 = scalar_lea.vmem [#allocation6], %s844
        // Predicated region
        $region97: #{tpu_custom_call.1} parent=91 // pred_check
          %p846 = pneg %p106
        $region98: #{tpu_custom_call.1} parent=91 // pred_check_branch
          %848 = sbr.rel (%p846) target = $region100
        $region99: #{tpu_custom_call.1} parent=91 // pred_region
          %850 = dma.done %s842, 256
        $region100: #{tpu_custom_call.1} parent=91 // pred_fallthru
          _
        %s851 = sand.u32 %s47, 1
        %s852 = scalar_lea.sflag [#allocation7], %s851
        %s853 = sand.u32 %s119, 1
        %s854 = smul.addr %s853, 192
        %s855 = scalar_lea.vmem [#allocation8], %s854
        // Predicated region
        $region101: #{tpu_custom_call.1} parent=91 // pred_check
          %p856 = pneg %p132
        $region102: #{tpu_custom_call.1} parent=91 // pred_check_branch
          %858 = sbr.rel (%p856) target = $region104
        $region103: #{tpu_custom_call.1} parent=91 // pred_region
          %860 = dma.done %s852, 3072
        $region104: #{tpu_custom_call.1} parent=91 // pred_fallthru
          _
        %s861 = sand.u32 %s47, 1
        %s862 = scalar_lea.sflag [#allocation10], %s861
        %s863 = sand.u32 %s171, 1
        %s864 = smul.addr %s863, 64
        %s865 = scalar_lea.vmem [#allocation9], %s864
        // Predicated region
        $region105: #{tpu_custom_call.1} parent=91 // pred_check
          %p866 = pneg %p184
        $region106: #{tpu_custom_call.1} parent=91 // pred_check_branch
          %868 = sbr.rel (%p866) target = $region108
        $region107: #{tpu_custom_call.1} parent=91 // pred_region
          %870 = dma.done %s862, 1024
        $region108: #{tpu_custom_call.1} parent=91 // pred_fallthru
          _
        %s871 = sand.u32 %s47, 1
        %s872 = scalar_lea.sflag [#allocation10], %s871
        %s873 = sand.u32 %s223, 1
        %s874 = smul.addr %s873, 64
        %s875 = scalar_lea.vmem [#allocation11], %s874
        // Predicated region
        $region109: #{tpu_custom_call.1} parent=91 // pred_check
          %p876 = pneg %p236
        $region110: #{tpu_custom_call.1} parent=91 // pred_check_branch
          %878 = sbr.rel (%p876) target = $region112
        $region111: #{tpu_custom_call.1} parent=91 // pred_region
          %880 = dma.done %s872, 1024
        $region112: #{tpu_custom_call.1} parent=91 // pred_fallthru
          _
        %s881 = sand.u32 %s47, 1
        %s882 = scalar_lea.sflag [#allocation13], %s881
        %s883 = sand.u32 %s275, 1
        %s884 = smul.addr %s883, 128
        %s885 = scalar_lea.vmem [#allocation12], %s884
        // Predicated region
        $region113: #{tpu_custom_call.1} parent=91 // pred_check
          %p886 = pneg %p288
        $region114: #{tpu_custom_call.1} parent=91 // pred_check_branch
          %888 = sbr.rel (%p886) target = $region116
        $region115: #{tpu_custom_call.1} parent=91 // pred_region
          %890 = dma.done %s882, 2048
        $region116: #{tpu_custom_call.1} parent=91 // pred_fallthru
          _
        %s891 = sand.u32 %s47, 1
        %s892 = scalar_lea.sflag [#allocation13], %s891
        %s893 = sand.u32 %s327, 1
        %s894 = smul.addr %s893, 64
        %s895 = scalar_lea.vmem [#allocation14], %s894
        // Predicated region
        $region117: #{tpu_custom_call.1} parent=91 // pred_check
          %p896 = pneg %p340
        $region118: #{tpu_custom_call.1} parent=91 // pred_check_branch
          %898 = sbr.rel (%p896) target = $region120
        $region119: #{tpu_custom_call.1} parent=91 // pred_region
          %900 = dma.done %s892, 1024
        $region120: #{tpu_custom_call.1} parent=91 // pred_fallthru
          _
        %s901 = sand.u32 %s47, 1
        %s902 = scalar_lea.sflag [#allocation16], %s901
        %s903 = sand.u32 %s379, 1
        %s904 = smul.addr %s903, 128
        %s905 = scalar_lea.vmem [#allocation15], %s904
        // Predicated region
        $region121: #{tpu_custom_call.1} parent=91 // pred_check
          %p906 = pneg %p392
        $region122: #{tpu_custom_call.1} parent=91 // pred_check_branch
          %908 = sbr.rel (%p906) target = $region124
        $region123: #{tpu_custom_call.1} parent=91 // pred_region
          %910 = dma.done %s902, 2048
        $region124: #{tpu_custom_call.1} parent=91 // pred_fallthru
          _
        %s911 = sand.u32 %s47, 1
        %s912 = scalar_lea.sflag [#allocation16], %s911
        %s913 = sand.u32 %s431, 1
        %s914 = smul.addr %s913, 128
        %s915 = scalar_lea.vmem [#allocation17], %s914
        // Predicated region
        $region125: #{tpu_custom_call.1} parent=91 // pred_check
          %p916 = pneg %p444
        $region126: #{tpu_custom_call.1} parent=91 // pred_check_branch
          %918 = sbr.rel (%p916) target = $region128
        $region127: #{tpu_custom_call.1} parent=91 // pred_region
          %920 = dma.done %s912, 2048
        $region128: #{tpu_custom_call.1} parent=91 // pred_fallthru
          _
        %s921 = sand.u32 %s67, 1
        %s922 = scalar_lea.sflag [#allocation4], %s921
        %s923 = sand.u32 %s67, 1
        %s924 = smul.addr %s923, 16
        %s925 = scalar_lea.vmem [#allocation3], %s924
        %p926 = pneg %p80
        %p927 = pneg %p77
        %s928 = sand.u32 %s47, 1
        %s929 = scalar_lea.sflag [#allocation7], %s928
        %s930 = sand.u32 %s93, 1
        %s931 = smul.addr %s930, 16
        %s932 = scalar_lea.vmem [#allocation6], %s931
        %p933 = pneg %p106
        %p934 = pneg %p103
        %s935 = sand.u32 %s47, 1
        %s936 = scalar_lea.sflag [#allocation7], %s935
        %s937 = sand.u32 %s119, 1
        %s938 = smul.addr %s937, 192
        %s939 = scalar_lea.vmem [#allocation8], %s938
        %p940 = pneg %p132
        %p941 = pneg %p129
        %p942 = scmp.lt.s32.totalorder %s52, 1
        %s943 = scalar_select %p942, %s52, 1
        %s944 = smul.addr %s943, 3
        %s945 = scalar_lea.vmem %s3, %s944
        %p946 = pneg %p158
        %p947 = pneg %p155
        %s948 = sand.u32 %s47, 1
        %s949 = scalar_lea.sflag [#allocation10], %s948
        %s950 = sand.u32 %s171, 1
        %s951 = smul.addr %s950, 64
        %s952 = scalar_lea.vmem [#allocation9], %s951
        %p953 = pneg %p184
        %p954 = pneg %p181
        %p955 = scmp.lt.s32.totalorder %s52, 1
        %s956 = scalar_select %p955, %s52, 1
        %s957 = scalar_lea.vmem %s5, %s956
        %p958 = pneg %p210
        %p959 = pneg %p207
        %s960 = sand.u32 %s47, 1
        %s961 = scalar_lea.sflag [#allocation10], %s960
        %s962 = sand.u32 %s223, 1
        %s963 = smul.addr %s962, 64
        %s964 = scalar_lea.vmem [#allocation11], %s963
        %p965 = pneg %p236
        %p966 = pneg %p233
        %p967 = scmp.lt.s32.totalorder %s52, 1
        %s968 = scalar_select %p967, %s52, 1
        %s969 = scalar_lea.vmem %s7, %s968
        %p970 = pneg %p262
        %p971 = pneg %p259
        %s972 = sand.u32 %s47, 1
        %s973 = scalar_lea.sflag [#allocation13], %s972
        %s974 = sand.u32 %s275, 1
        %s975 = smul.addr %s974, 128
        %s976 = scalar_lea.vmem [#allocation12], %s975
        %p977 = pneg %p288
        %p978 = pneg %p285
        %p979 = scmp.lt.s32.totalorder %s52, 1
        %s980 = scalar_select %p979, %s52, 1
        %s981 = smul.addr %s980, 2
        %s982 = scalar_lea.vmem %s9, %s981
        %p983 = pneg %p314
        %p984 = pneg %p311
        %s985 = sand.u32 %s47, 1
        %s986 = scalar_lea.sflag [#allocation13], %s985
        %s987 = sand.u32 %s327, 1
        %s988 = smul.addr %s987, 64
        %s989 = scalar_lea.vmem [#allocation14], %s988
        %p990 = pneg %p340
        %p991 = pneg %p337
        %p992 = scmp.lt.s32.totalorder %s52, 1
        %s993 = scalar_select %p992, %s52, 1
        %s994 = scalar_lea.vmem %s11, %s993
        %p995 = pneg %p366
        %p996 = pneg %p363
        %s997 = sand.u32 %s47, 1
        %s998 = scalar_lea.sflag [#allocation16], %s997
        %s999 = sand.u32 %s379, 1
        %s1000 = smul.addr %s999, 128
        %s1001 = scalar_lea.vmem [#allocation15], %s1000
        %p1002 = pneg %p392
        %p1003 = pneg %p389
        %p1004 = scmp.lt.s32.totalorder %s52, 1
        %s1005 = scalar_select %p1004, %s52, 1
        %s1006 = smul.addr %s1005, 2
        %s1007 = scalar_lea.vmem %s13, %s1006
        %p1008 = pneg %p418
        %p1009 = pneg %p415
        %s1010 = sand.u32 %s47, 1
        %s1011 = scalar_lea.sflag [#allocation16], %s1010
        %s1012 = sand.u32 %s431, 1
        %s1013 = smul.addr %s1012, 128
        %s1014 = scalar_lea.vmem [#allocation17], %s1013
        %p1015 = pneg %p444
        %p1016 = pneg %p441
        %p1017 = scmp.lt.s32.totalorder %s52, 1
        %s1018 = scalar_select %p1017, %s52, 1
        %s1019 = scalar_lea.vmem %s15, %s1018
        %p1020 = pneg %p470
        %p1021 = pneg %p467
        %p1022 = scmp.lt.s32.totalorder %s52, 1
        %s1023 = scalar_select %p1022, %s52, 1
        %s1024 = smul.addr %s1023, 4
        %s1025 = scalar_lea.vmem %s16, %s1024
        %p1026 = pneg %p496
        %p1027 = pneg %p493
        %p1028 = scmp.lt.s32.totalorder %s52, 1
        %s1029 = scalar_select %p1028, %s52, 1
        %s1030 = smul.addr %s1029, 4
        %s1031 = scalar_lea.vmem %s17, %s1030
        %p1032 = pneg %p522
        %p1033 = pneg %p519
        %p1034 = pneg %p548
        %p1035 = pneg %p545
        %s1036 = sand.u32 %s535, 1
        %s1037 = scalar_lea.sflag [#allocation5], %s1036
        %s1038 = sand.u32 %s535, 1
        %s1039 = smul.addr %s1038, 16
        %s1040 = scalar_lea.vmem [#allocation18], %s1039
        %s1041 = smul.u32 2, %s51
        %s1042 = smul.u32 2, %s51
        %p1043 = scmp.lt.s32.totalorder %s52, 1
        %s1044 = scalar_select %p1043, %s52, 1
        %s1045 = smul.addr %s1044, 3
        %s1046 = scalar_lea.vmem %s3, %s1045
        %p1047 = scmp.lt.s32.totalorder %s52, 1
        %s1048 = scalar_select %p1047, %s52, 1
        %s1049 = scalar_lea.vmem %s5, %s1048
        %p1050 = scmp.lt.s32.totalorder %s52, 1
        %s1051 = scalar_select %p1050, %s52, 1
        %s1052 = scalar_lea.vmem %s7, %s1051
        %p1053 = scmp.lt.s32.totalorder %s52, 1
        %s1054 = scalar_select %p1053, %s52, 1
        %s1055 = smul.addr %s1054, 2
        %s1056 = scalar_lea.vmem %s9, %s1055
        %p1057 = scmp.lt.s32.totalorder %s52, 1
        %s1058 = scalar_select %p1057, %s52, 1
        %s1059 = scalar_lea.vmem %s11, %s1058
        %p1060 = scmp.lt.s32.totalorder %s52, 1
        %s1061 = scalar_select %p1060, %s52, 1
        %s1062 = smul.addr %s1061, 2
        %s1063 = scalar_lea.vmem %s13, %s1062
        %p1064 = scmp.lt.s32.totalorder %s52, 1
        %s1065 = scalar_select %p1064, %s52, 1
        %s1066 = scalar_lea.vmem %s15, %s1065
        %p1067 = scmp.lt.s32.totalorder %s52, 1
        %s1068 = scalar_select %p1067, %s52, 1
        %s1069 = smul.addr %s1068, 4
        %s1070 = scalar_lea.vmem %s16, %s1069
        %p1071 = scmp.lt.s32.totalorder %s52, 1
        %s1072 = scalar_select %p1071, %s52, 1
        %s1073 = smul.addr %s1072, 4
        %s1074 = scalar_lea.vmem %s17, %s1073
        %s1075 = smul.u32 2, %s51
        %p1077 = scmp.eq.s32.totalorder %s52, 0
        // Predicated region
        $region129: #{tpu_custom_call.1} parent=91 // pred_check
          %p1078 = pneg %p1077
        $region130: #{tpu_custom_call.1} parent=91 // pred_check_branch
          %1080 = sbr.rel (%p1078) target = $region132
        $region131: #{tpu_custom_call.1} parent=91 // pred_region
          %v1081 = vld [vmem:[%s835] sm:$0xff]
          %v1082 = vld [vmem:[%s835 + $0x8] sm:$0xff]
          %1083 = vst [vmem:[#allocation2] sm:$0xff] %v1081
          %1084 = vst [vmem:[#allocation2 + $0x8] sm:$0xff] %v1082
        $region132: #{tpu_custom_call.1} parent=91 // pred_fallthru
          _
        %v1085 = vld [vmem:[#allocation2] sm:$0xff]
        %v1086 = vld [vmem:[#allocation2 + $0x8] sm:$0xff]
        %v1087 = vld [vmem:[%s845] sm:$0xff]
        %v1088 = vld [vmem:[%s845 + $0x8] sm:$0xff]
        %v1089 = vld [vmem:[%s1070] sm:$0x7]
        %v1090 = vld [vmem:[%s1074] sm:$0x7]
        %v1091 = vlaneseq
        %v1092 = vshrl.u32 %v1091, 7
        %v1093 = vlaneseq
        %v1094 = vand.u32 %v1093, 127
        %vm1095 = vcmp.le.s32.totalorder %v1094, %v1092
        %vm1096 = vcmp.lt.s32.totalorder %v1094, 8
        %vm1097 = vmand %vm1095, %vm1096
        %v1098 = vpack.c.bf16 %v1086, %v1085
        %v1099 = vld [vmem:[%s855] sm:$0xff]
        %v1100 = vld [vmem:[%s855 + $0x8] sm:$0xf]
        %v1101 = vld [vmem:[%s855 + $0xc] sm:$0xff]
        %v1102 = vld [vmem:[%s855 + $0x14] sm:$0xf]
        %v1103 = vld [vmem:[%s855 + $0x18] sm:$0xff]
        %v1104 = vld [vmem:[%s855 + $0x20] sm:$0xf]
        %v1105 = vld [vmem:[%s855 + $0x24] sm:$0xff]
        %v1106 = vld [vmem:[%s855 + $0x2c] sm:$0xf]
        %v1107 = vld [vmem:[%s855 + $0x30] sm:$0xff]
        %v1108 = vld [vmem:[%s855 + $0x38] sm:$0xf]
        %v1109 = vld [vmem:[%s855 + $0x3c] sm:$0xff]
        %v1110 = vld [vmem:[%s855 + $0x44] sm:$0xf]
        %v1111 = vld [vmem:[%s855 + $0x48] sm:$0xff]
        %v1112 = vld [vmem:[%s855 + $0x50] sm:$0xf]
        %v1113 = vld [vmem:[%s855 + $0x54] sm:$0xff]
        %v1114 = vld [vmem:[%s855 + $0x5c] sm:$0xf]
        %v1115 = vld [vmem:[%s855 + $0x60] sm:$0xff]
        %v1116 = vld [vmem:[%s855 + $0x68] sm:$0xf]
        %v1117 = vld [vmem:[%s855 + $0x6c] sm:$0xff]
        %v1118 = vld [vmem:[%s855 + $0x74] sm:$0xf]
        %v1119 = vld [vmem:[%s855 + $0x78] sm:$0xff]
        %v1120 = vld [vmem:[%s855 + $0x80] sm:$0xf]
        %v1121 = vld [vmem:[%s855 + $0x84] sm:$0xff]
        %v1122 = vld [vmem:[%s855 + $0x8c] sm:$0xf]
        %v1123 = vld [vmem:[%s855 + $0x90] sm:$0xff]
        %v1124 = vld [vmem:[%s855 + $0x98] sm:$0xf]
        %v1125 = vld [vmem:[%s855 + $0x9c] sm:$0xff]
        %v1126 = vld [vmem:[%s855 + $0xa4] sm:$0xf]
        %v1127 = vld [vmem:[%s855 + $0xa8] sm:$0xff]
        %v1128 = vld [vmem:[%s855 + $0xb0] sm:$0xf]
        %v1129 = vld [vmem:[%s855 + $0xb4] sm:$0xff]
        %v1130 = vld [vmem:[%s855 + $0xbc] sm:$0xf]
        %v1131 = vld [vmem:[%s1046] sm:$0x7]
        %v1133 = vperm.slane %v1131, 0
        %v1134 = vperm.slane %v1131, 1
        %v1135 = vperm.slane %v1131, 2
        %v1171 = vunpack.c.l.b16 %v1099
        %v1172 = vunpack.c.h.b16 %v1099
        %v1173 = vunpack.c.l.b16 %v1100
        %v1174 = vunpack.c.l.b16 %v1101
        %v1175 = vunpack.c.h.b16 %v1101
        %v1176 = vunpack.c.l.b16 %v1102
        %v1177 = vunpack.c.l.b16 %v1103
        %v1178 = vunpack.c.h.b16 %v1103
        %v1179 = vunpack.c.l.b16 %v1104
        %v1180 = vunpack.c.l.b16 %v1105
        %v1181 = vunpack.c.h.b16 %v1105
        %v1182 = vunpack.c.l.b16 %v1106
        %v1183 = vunpack.c.l.b16 %v1107
        %v1184 = vunpack.c.h.b16 %v1107
        %v1185 = vunpack.c.l.b16 %v1108
        %v1186 = vunpack.c.l.b16 %v1109
        %v1187 = vunpack.c.h.b16 %v1109
        %v1188 = vunpack.c.l.b16 %v1110
        %v1189 = vunpack.c.l.b16 %v1111
        %v1190 = vunpack.c.h.b16 %v1111
        %v1191 = vunpack.c.l.b16 %v1112
        %v1192 = vunpack.c.l.b16 %v1113
        %v1193 = vunpack.c.h.b16 %v1113
        %v1194 = vunpack.c.l.b16 %v1114
        %v1195 = vunpack.c.l.b16 %v1115
        %v1196 = vunpack.c.h.b16 %v1115
        %v1197 = vunpack.c.l.b16 %v1116
        %v1198 = vunpack.c.l.b16 %v1117
        %v1199 = vunpack.c.h.b16 %v1117
        %v1200 = vunpack.c.l.b16 %v1118
        %v1201 = vunpack.c.l.b16 %v1119
        %v1202 = vunpack.c.h.b16 %v1119
        %v1203 = vunpack.c.l.b16 %v1120
        %v1204 = vunpack.c.l.b16 %v1121
        %v1205 = vunpack.c.h.b16 %v1121
        %v1206 = vunpack.c.l.b16 %v1122
        %v1207 = vunpack.c.l.b16 %v1123
        %v1208 = vunpack.c.h.b16 %v1123
        %v1209 = vunpack.c.l.b16 %v1124
        %v1210 = vunpack.c.l.b16 %v1125
        %v1211 = vunpack.c.h.b16 %v1125
        %v1212 = vunpack.c.l.b16 %v1126
        %v1213 = vunpack.c.l.b16 %v1127
        %v1214 = vunpack.c.h.b16 %v1127
        %v1215 = vunpack.c.l.b16 %v1128
        %v1216 = vunpack.c.l.b16 %v1129
        %v1217 = vunpack.c.h.b16 %v1129
        %v1218 = vunpack.c.l.b16 %v1130
        %v1219 = vpack.c.b16 %v1174, %v1171
        %v1220 = vpack.c.b16 %v1175, %v1172
        %v1221 = vpack.c.b16 %v1176, %v1173
        %v1222 = vpack.c.b16 %v1180, %v1177
        %v1223 = vpack.c.b16 %v1181, %v1178
        %v1224 = vpack.c.b16 %v1182, %v1179
        %v1225 = vpack.c.b16 %v1186, %v1183
        %v1226 = vpack.c.b16 %v1187, %v1184
        %v1227 = vpack.c.b16 %v1188, %v1185
        %v1228 = vpack.c.b16 %v1192, %v1189
        %v1229 = vpack.c.b16 %v1193, %v1190
        %v1230 = vpack.c.b16 %v1194, %v1191
        %v1231 = vpack.c.b16 %v1198, %v1195
        %v1232 = vpack.c.b16 %v1199, %v1196
        %v1233 = vpack.c.b16 %v1200, %v1197
        %v1234 = vpack.c.b16 %v1204, %v1201
        %v1235 = vpack.c.b16 %v1205, %v1202
        %v1236 = vpack.c.b16 %v1206, %v1203
        %v1237 = vpack.c.b16 %v1210, %v1207
        %v1238 = vpack.c.b16 %v1211, %v1208
        %v1239 = vpack.c.b16 %v1212, %v1209
        %v1240 = vpack.c.b16 %v1216, %v1213
        %v1241 = vpack.c.b16 %v1217, %v1214
        %v1242 = vpack.c.b16 %v1218, %v1215
        %1267 = vmatpush.bf16.msra.mxu0 %v1240
        %1268 = vmatpush.bf16.msra.mxu0 %v1237
        %1269 = vmatpush.bf16.msra.mxu0 %v1234
        %1270 = vmatpush.bf16.msra.mxu0 %v1231
        %1271 = vmatpush.bf16.msra.mxu0 %v1228
        %1272 = vmatpush.bf16.msra.mxu0 %v1225
        %1273 = vmatpush.bf16.msra.mxu0 %v1222
        %1274 = vmatpush.bf16.msra.mxu0 %v1219
        %1275 = vmatmul.bf16.gmra.mxu0 %v1098
        %v1276 = vpop.f32.mrf.mxu0
        %v1277 = vadd.f32 %v1133, %v1276
        %v1278 = vpop.f32.mrf.mxu0
        %v1279 = vadd.f32 %v1133, %v1278
        %1280 = vdwg.mxu0
        %1281 = vmatpush.bf16.msra.mxu0 %v1241
        %1282 = vmatpush.bf16.msra.mxu0 %v1238
        %1283 = vmatpush.bf16.msra.mxu0 %v1235
        %1284 = vmatpush.bf16.msra.mxu0 %v1232
        %1285 = vmatpush.bf16.msra.mxu0 %v1229
        %1286 = vmatpush.bf16.msra.mxu0 %v1226
        %1287 = vmatpush.bf16.msra.mxu0 %v1223
        %1288 = vmatpush.bf16.msra.mxu0 %v1220
        %1289 = vmatmul.bf16.gmra.mxu0 %v1098
        %v1290 = vpop.f32.mrf.mxu0
        %v1291 = vadd.f32 %v1134, %v1290
        %v1292 = vpop.f32.mrf.mxu0
        %v1293 = vadd.f32 %v1134, %v1292
        %1294 = vdwg.mxu0
        %1295 = vmatpush.bf16.msra.mxu0 %v1242
        %1296 = vmatpush.bf16.msra.mxu0 %v1239
        %1297 = vmatpush.bf16.msra.mxu0 %v1236
        %1298 = vmatpush.bf16.msra.mxu0 %v1233
        %1299 = vmatpush.bf16.msra.mxu0 %v1230
        %1300 = vmatpush.bf16.msra.mxu0 %v1227
        %1301 = vmatpush.bf16.msra.mxu0 %v1224
        %1302 = vmatpush.bf16.msra.mxu0 %v1221
        %1303 = vmatmul.bf16.gmra.mxu0 %v1098
        %v1304 = vpop.f32.mrf.mxu0
        %v1305 = vadd.f32 %v1135, %v1304
        %v1306 = vpop.f32.mrf.mxu0
        %v1307 = vadd.f32 %v1135, %v1306
        %1308 = vdwg.mxu0
        %1310 = vrot.lane.b32.xlu0 %v1277, 96
        %v1311 = vpop.permute.xlu0 %1310
        %1313 = vrot.lane.b32.xlu0 %v1277, 64
        %v1314 = vpop.permute.xlu0 %1313
        %1316 = vrot.lane.b32.xlu0 %v1277, 32
        %v1317 = vpop.permute.xlu0 %1316
        %v1319 = vrot.slane %v1314, 4
        %vm1320 = vcmask 1047556
        %v1321 = vsel %vm1320, %v1319, %v1277
        %v1322 = vrot.slane %v1277, 4
        %v1323 = vsel %vm1320, %v1314, %v1322
        %v1325 = vunpack.c.l.s4 1983009808
        %v1326 = vunpack.c.0.s8 %v1325
        %v1327 = vperm.slane %v1321, %v1326
        %v1329 = vunpack.c.l.s4 1983009808
        %v1330 = vunpack.c.0.s8 %v1329
        %v1331 = vperm.slane %v1323, %v1330
        %v1332 = vrot.slane %v1317, 4
        %v1333 = vsel %vm1320, %v1332, %v1311
        %v1334 = vrot.slane %v1311, 4
        %v1335 = vsel %vm1320, %v1317, %v1334
        %v1337 = vunpack.c.l.s4 1983009808
        %v1338 = vunpack.c.0.s8 %v1337
        %v1339 = vperm.slane %v1333, %v1338
        %v1341 = vunpack.c.l.s4 1983009808
        %v1342 = vunpack.c.0.s8 %v1341
        %v1343 = vperm.slane %v1335, %v1342
        %v1344 = vrot.slane %v1339, 4
        %v1345 = vsel %vm1320, %v1344, %v1327
        %v1346 = vrot.slane %v1327, 4
        %v1347 = vsel %vm1320, %v1339, %v1346
        %v1349 = vunpack.c.l.s4 1934713408
        %v1350 = vunpack.c.0.s8 %v1349
        %v1351 = vperm.slane %v1345, %v1350
        %v1353 = vunpack.c.l.s4 1934713408
        %v1354 = vunpack.c.0.s8 %v1353
        %v1355 = vperm.slane %v1347, %v1354
        %v1356 = vrot.slane %v1343, 4
        %v1357 = vsel %vm1320, %v1356, %v1331
        %v1358 = vrot.slane %v1331, 4
        %v1359 = vsel %vm1320, %v1343, %v1358
        %v1361 = vunpack.c.l.s4 1934713408
        %v1362 = vunpack.c.0.s8 %v1361
        %v1363 = vperm.slane %v1357, %v1362
        %v1365 = vunpack.c.l.s4 1934713408
        %v1366 = vunpack.c.0.s8 %v1365
        %v1367 = vperm.slane %v1359, %v1366
        %v1368 = vrot.slane %v1351, 4
        %v1369 = vsel %vm1320, 0.0, %v1368
        %v1370 = vrot.slane %v1355, 4
        %v1371 = vsel %vm1320, 0.0, %v1370
        %v1372 = vrot.slane %v1363, 4
        %v1373 = vsel %vm1320, 0.0, %v1372
        %v1374 = vrot.slane %v1367, 4
        %v1375 = vsel %vm1320, 0.0, %v1374
        %v1376 = vsel %vm1320, %v1370, %v1351
        %v1378 = vunpack.c.l.s4 1983009808
        %v1379 = vunpack.c.0.s8 %v1378
        %v1380 = vperm.slane %v1376, %v1379
        %v1381 = vrot.slane %v1371, 4
        %v1382 = vsel %vm1320, %v1381, %v1369
        %v1384 = vunpack.c.l.s4 1983009808
        %v1385 = vunpack.c.0.s8 %v1384
        %v1386 = vperm.slane %v1382, %v1385
        %v1387 = vsel %vm1320, %v1374, %v1363
        %v1389 = vunpack.c.l.s4 1983009808
        %v1390 = vunpack.c.0.s8 %v1389
        %v1391 = vperm.slane %v1387, %v1390
        %v1392 = vrot.slane %v1375, 4
        %v1393 = vsel %vm1320, %v1392, %v1373
        %v1395 = vunpack.c.l.s4 1983009808
        %v1396 = vunpack.c.0.s8 %v1395
        %v1397 = vperm.slane %v1393, %v1396
        %v1398 = vrot.slane %v1386, 4
        %v1399 = vsel %vm1320, %v1398, %v1380
        %v1400 = vrot.slane %v1380, 4
        %v1401 = vsel %vm1320, %v1386, %v1400
        %v1403 = vunpack.c.l.s4 1934713408
        %v1404 = vunpack.c.0.s8 %v1403
        %v1405 = vperm.slane %v1399, %v1404
        %v1407 = vunpack.c.l.s4 1934713408
        %v1408 = vunpack.c.0.s8 %v1407
        %v1409 = vperm.slane %v1401, %v1408
        %v1410 = vrot.slane %v1397, 4
        %v1411 = vsel %vm1320, %v1410, %v1391
        %v1412 = vrot.slane %v1391, 4
        %v1413 = vsel %vm1320, %v1397, %v1412
        %v1415 = vunpack.c.l.s4 1934713408
        %v1416 = vunpack.c.0.s8 %v1415
        %v1417 = vperm.slane %v1411, %v1416
        %v1419 = vunpack.c.l.s4 1934713408
        %v1420 = vunpack.c.0.s8 %v1419
        %v1421 = vperm.slane %v1413, %v1420
        %v1422 = vrot.slane %v1417, 4
        %v1423 = vsel %vm1320, %v1422, %v1405
        %v1424 = vrot.slane %v1405, 4
        %v1425 = vsel %vm1320, %v1417, %v1424
        %v1426 = vrot.slane %v1421, 4
        %v1427 = vsel %vm1320, %v1426, %v1409
        %v1428 = vrot.slane %v1409, 4
        %v1429 = vsel %vm1320, %v1421, %v1428
        %v1430 = vpack.c.bf16 %v1423, %v1423
        %v1431 = vpack.c.bf16 %v1425, %v1425
        %v1432 = vpack.c.bf16 %v1427, %v1427
        %v1433 = vpack.c.bf16 %v1429, %v1429
        %1435 = vrot.lane.b32.xlu0 %v1291, 96
        %v1436 = vpop.permute.xlu0 %1435
        %1438 = vrot.lane.b32.xlu0 %v1291, 64
        %v1439 = vpop.permute.xlu0 %1438
        %1441 = vrot.lane.b32.xlu0 %v1291, 32
        %v1442 = vpop.permute.xlu0 %1441
        %v1444 = vrot.slane %v1439, 4
        %v1445 = vsel %vm1320, %v1444, %v1291
        %v1446 = vrot.slane %v1291, 4
        %v1447 = vsel %vm1320, %v1439, %v1446
        %v1449 = vunpack.c.l.s4 1983009808
        %v1450 = vunpack.c.0.s8 %v1449
        %v1451 = vperm.slane %v1445, %v1450
        %v1453 = vunpack.c.l.s4 1983009808
        %v1454 = vunpack.c.0.s8 %v1453
        %v1455 = vperm.slane %v1447, %v1454
        %v1456 = vrot.slane %v1442, 4
        %v1457 = vsel %vm1320, %v1456, %v1436
        %v1458 = vrot.slane %v1436, 4
        %v1459 = vsel %vm1320, %v1442, %v1458
        %v1461 = vunpack.c.l.s4 1983009808
        %v1462 = vunpack.c.0.s8 %v1461
        %v1463 = vperm.slane %v1457, %v1462
        %v1465 = vunpack.c.l.s4 1983009808
        %v1466 = vunpack.c.0.s8 %v1465
        %v1467 = vperm.slane %v1459, %v1466
        %v1468 = vrot.slane %v1463, 4
        %v1469 = vsel %vm1320, %v1468, %v1451
        %v1470 = vrot.slane %v1451, 4
        %v1471 = vsel %vm1320, %v1463, %v1470
        %v1473 = vunpack.c.l.s4 1934713408
        %v1474 = vunpack.c.0.s8 %v1473
        %v1475 = vperm.slane %v1469, %v1474
        %v1477 = vunpack.c.l.s4 1934713408
        %v1478 = vunpack.c.0.s8 %v1477
        %v1479 = vperm.slane %v1471, %v1478
        %v1480 = vrot.slane %v1467, 4
        %v1481 = vsel %vm1320, %v1480, %v1455
        %v1482 = vrot.slane %v1455, 4
        %v1483 = vsel %vm1320, %v1467, %v1482
        %v1485 = vunpack.c.l.s4 1934713408
        %v1486 = vunpack.c.0.s8 %v1485
        %v1487 = vperm.slane %v1481, %v1486
        %v1489 = vunpack.c.l.s4 1934713408
        %v1490 = vunpack.c.0.s8 %v1489
        %v1491 = vperm.slane %v1483, %v1490
        %v1492 = vrot.slane %v1475, 4
        %v1493 = vsel %vm1320, 0.0, %v1492
        %v1494 = vrot.slane %v1479, 4
        %v1495 = vsel %vm1320, 0.0, %v1494
        %v1496 = vrot.slane %v1487, 4
        %v1497 = vsel %vm1320, 0.0, %v1496
        %v1498 = vrot.slane %v1491, 4
        %v1499 = vsel %vm1320, 0.0, %v1498
        %v1500 = vsel %vm1320, %v1494, %v1475
        %v1502 = vunpack.c.l.s4 1983009808
        %v1503 = vunpack.c.0.s8 %v1502
        %v1504 = vperm.slane %v1500, %v1503
        %v1505 = vrot.slane %v1495, 4
        %v1506 = vsel %vm1320, %v1505, %v1493
        %v1508 = vunpack.c.l.s4 1983009808
        %v1509 = vunpack.c.0.s8 %v1508
        %v1510 = vperm.slane %v1506, %v1509
        %v1511 = vsel %vm1320, %v1498, %v1487
        %v1513 = vunpack.c.l.s4 1983009808
        %v1514 = vunpack.c.0.s8 %v1513
        %v1515 = vperm.slane %v1511, %v1514
        %v1516 = vrot.slane %v1499, 4
        %v1517 = vsel %vm1320, %v1516, %v1497
        %v1519 = vunpack.c.l.s4 1983009808
        %v1520 = vunpack.c.0.s8 %v1519
        %v1521 = vperm.slane %v1517, %v1520
        %v1522 = vrot.slane %v1510, 4
        %v1523 = vsel %vm1320, %v1522, %v1504
        %v1524 = vrot.slane %v1504, 4
        %v1525 = vsel %vm1320, %v1510, %v1524
        %v1527 = vunpack.c.l.s4 1934713408
        %v1528 = vunpack.c.0.s8 %v1527
        %v1529 = vperm.slane %v1523, %v1528
        %v1531 = vunpack.c.l.s4 1934713408
        %v1532 = vunpack.c.0.s8 %v1531
        %v1533 = vperm.slane %v1525, %v1532
        %v1534 = vrot.slane %v1521, 4
        %v1535 = vsel %vm1320, %v1534, %v1515
        %v1536 = vrot.slane %v1515, 4
        %v1537 = vsel %vm1320, %v1521, %v1536
        %v1539 = vunpack.c.l.s4 1934713408
        %v1540 = vunpack.c.0.s8 %v1539
        %v1541 = vperm.slane %v1535, %v1540
        %v1543 = vunpack.c.l.s4 1934713408
        %v1544 = vunpack.c.0.s8 %v1543
        %v1545 = vperm.slane %v1537, %v1544
        %v1546 = vrot.slane %v1541, 4
        %v1547 = vsel %vm1320, %v1546, %v1529
        %v1548 = vrot.slane %v1529, 4
        %v1549 = vsel %vm1320, %v1541, %v1548
        %v1550 = vrot.slane %v1545, 4
        %v1551 = vsel %vm1320, %v1550, %v1533
        %v1552 = vrot.slane %v1533, 4
        %v1553 = vsel %vm1320, %v1545, %v1552
        %v1554 = vpack.c.bf16 %v1547, %v1547
        %v1555 = vpack.c.bf16 %v1549, %v1549
        %v1556 = vpack.c.bf16 %v1551, %v1551
        %v1557 = vpack.c.bf16 %v1553, %v1553
        %1559 = vrot.lane.b32.xlu0 %v1305, 96
        %v1560 = vpop.permute.xlu0 %1559
        %1562 = vrot.lane.b32.xlu0 %v1305, 64
        %v1563 = vpop.permute.xlu0 %1562
        %1565 = vrot.lane.b32.xlu0 %v1305, 32
        %v1566 = vpop.permute.xlu0 %1565
        %v1568 = vrot.slane %v1563, 4
        %v1569 = vsel %vm1320, %v1568, %v1305
        %v1570 = vrot.slane %v1305, 4
        %v1571 = vsel %vm1320, %v1563, %v1570
        %v1573 = vunpack.c.l.s4 1983009808
        %v1574 = vunpack.c.0.s8 %v1573
        %v1575 = vperm.slane %v1569, %v1574
        %v1577 = vunpack.c.l.s4 1983009808
        %v1578 = vunpack.c.0.s8 %v1577
        %v1579 = vperm.slane %v1571, %v1578
        %v1580 = vrot.slane %v1566, 4
        %v1581 = vsel %vm1320, %v1580, %v1560
        %v1582 = vrot.slane %v1560, 4
        %v1583 = vsel %vm1320, %v1566, %v1582
        %v1585 = vunpack.c.l.s4 1983009808
        %v1586 = vunpack.c.0.s8 %v1585
        %v1587 = vperm.slane %v1581, %v1586
        %v1589 = vunpack.c.l.s4 1983009808
        %v1590 = vunpack.c.0.s8 %v1589
        %v1591 = vperm.slane %v1583, %v1590
        %v1592 = vrot.slane %v1587, 4
        %v1593 = vsel %vm1320, %v1592, %v1575
        %v1594 = vrot.slane %v1575, 4
        %v1595 = vsel %vm1320, %v1587, %v1594
        %v1597 = vunpack.c.l.s4 1934713408
        %v1598 = vunpack.c.0.s8 %v1597
        %v1599 = vperm.slane %v1593, %v1598
        %v1601 = vunpack.c.l.s4 1934713408
        %v1602 = vunpack.c.0.s8 %v1601
        %v1603 = vperm.slane %v1595, %v1602
        %v1604 = vrot.slane %v1591, 4
        %v1605 = vsel %vm1320, %v1604, %v1579
        %v1606 = vrot.slane %v1579, 4
        %v1607 = vsel %vm1320, %v1591, %v1606
        %v1609 = vunpack.c.l.s4 1934713408
        %v1610 = vunpack.c.0.s8 %v1609
        %v1611 = vperm.slane %v1605, %v1610
        %v1613 = vunpack.c.l.s4 1934713408
        %v1614 = vunpack.c.0.s8 %v1613
        %v1615 = vperm.slane %v1607, %v1614
        %v1616 = vrot.slane %v1599, 4
        %v1617 = vsel %vm1320, 0.0, %v1616
        %v1618 = vrot.slane %v1603, 4
        %v1619 = vsel %vm1320, 0.0, %v1618
        %v1620 = vrot.slane %v1611, 4
        %v1621 = vsel %vm1320, 0.0, %v1620
        %v1622 = vrot.slane %v1615, 4
        %v1623 = vsel %vm1320, 0.0, %v1622
        %v1624 = vsel %vm1320, %v1618, %v1599
        %v1626 = vunpack.c.l.s4 1983009808
        %v1627 = vunpack.c.0.s8 %v1626
        %v1628 = vperm.slane %v1624, %v1627
        %v1629 = vrot.slane %v1619, 4
        %v1630 = vsel %vm1320, %v1629, %v1617
        %v1632 = vunpack.c.l.s4 1983009808
        %v1633 = vunpack.c.0.s8 %v1632
        %v1634 = vperm.slane %v1630, %v1633
        %v1635 = vsel %vm1320, %v1622, %v1611
        %v1637 = vunpack.c.l.s4 1983009808
        %v1638 = vunpack.c.0.s8 %v1637
        %v1639 = vperm.slane %v1635, %v1638
        %v1640 = vrot.slane %v1623, 4
        %v1641 = vsel %vm1320, %v1640, %v1621
        %v1643 = vunpack.c.l.s4 1983009808
        %v1644 = vunpack.c.0.s8 %v1643
        %v1645 = vperm.slane %v1641, %v1644
        %v1646 = vrot.slane %v1634, 4
        %v1647 = vsel %vm1320, %v1646, %v1628
        %v1648 = vrot.slane %v1628, 4
        %v1649 = vsel %vm1320, %v1634, %v1648
        %v1651 = vunpack.c.l.s4 1934713408
        %v1652 = vunpack.c.0.s8 %v1651
        %v1653 = vperm.slane %v1647, %v1652
        %v1655 = vunpack.c.l.s4 1934713408
        %v1656 = vunpack.c.0.s8 %v1655
        %v1657 = vperm.slane %v1649, %v1656
        %v1658 = vrot.slane %v1645, 4
        %v1659 = vsel %vm1320, %v1658, %v1639
        %v1660 = vrot.slane %v1639, 4
        %v1661 = vsel %vm1320, %v1645, %v1660
        %v1663 = vunpack.c.l.s4 1934713408
        %v1664 = vunpack.c.0.s8 %v1663
        %v1665 = vperm.slane %v1659, %v1664
        %v1667 = vunpack.c.l.s4 1934713408
        %v1668 = vunpack.c.0.s8 %v1667
        %v1669 = vperm.slane %v1661, %v1668
        %v1670 = vrot.slane %v1665, 4
        %v1671 = vsel %vm1320, %v1670, %v1653
        %v1672 = vrot.slane %v1653, 4
        %v1673 = vsel %vm1320, %v1665, %v1672
        %v1674 = vrot.slane %v1669, 4
        %v1675 = vsel %vm1320, %v1674, %v1657
        %v1676 = vrot.slane %v1657, 4
        %v1677 = vsel %vm1320, %v1669, %v1676
        %v1678 = vpack.c.bf16 %v1671, %v1671
        %v1679 = vpack.c.bf16 %v1673, %v1673
        %v1680 = vpack.c.bf16 %v1675, %v1675
        %v1681 = vpack.c.bf16 %v1677, %v1677
        %vm1682 = vcmask 261120
        %v1684 = vsel %vm1682, %v1430, 0
        %v1687 = vsel %vm1682, %v1554, 0
        %1689 = vmatpush.bf16.xpose.msra.mxu0 0
        %1690 = vmatpush.bf16.xpose.msra.mxu0 0
        %1691 = vmatpush.bf16.xpose.msra.mxu0 0
        %1692 = vmatpush.bf16.xpose.msra.mxu0 0
        %1693 = vmatpush.bf16.xpose.msra.mxu0 0
        %1694 = vmatpush.bf16.xpose.msra.mxu0 0
        %1695 = vmatpush.bf16.xpose.msra.mxu0 0
        %1696 = vmatpush.bf16.xpose.msra.mxu0 %v1687
        %1697 = vmatmul.bf16.gmra.mxu0 %v1684
        %v1698 = vpop.f32.mrf.mxu0
        %v1699 = vadd.f32 0.0, %v1698
        %v1700 = vpop.f32.mrf.mxu0
        %1701 = vdwg.mxu0
        %v1703 = vsel %vm1682, %v1431, 0
        %v1706 = vsel %vm1682, %v1555, 0
        %1708 = vmatpush.bf16.xpose.msra.mxu0 0
        %1709 = vmatpush.bf16.xpose.msra.mxu0 0
        %1710 = vmatpush.bf16.xpose.msra.mxu0 0
        %1711 = vmatpush.bf16.xpose.msra.mxu0 0
        %1712 = vmatpush.bf16.xpose.msra.mxu0 0
        %1713 = vmatpush.bf16.xpose.msra.mxu0 0
        %1714 = vmatpush.bf16.xpose.msra.mxu0 0
        %1715 = vmatpush.bf16.xpose.msra.mxu0 %v1706
        %1716 = vmatmul.bf16.gmra.mxu0 %v1703
        %v1717 = vpop.f32.mrf.mxu0
        %v1718 = vadd.f32 0.0, %v1717
        %v1719 = vpop.f32.mrf.mxu0
        %1720 = vdwg.mxu0
        %v1722 = vsel %vm1682, %v1432, 0
        %v1725 = vsel %vm1682, %v1556, 0
        %1727 = vmatpush.bf16.xpose.msra.mxu0 0
        %1728 = vmatpush.bf16.xpose.msra.mxu0 0
        %1729 = vmatpush.bf16.xpose.msra.mxu0 0
        %1730 = vmatpush.bf16.xpose.msra.mxu0 0
        %1731 = vmatpush.bf16.xpose.msra.mxu0 0
        %1732 = vmatpush.bf16.xpose.msra.mxu0 0
        %1733 = vmatpush.bf16.xpose.msra.mxu0 0
        %1734 = vmatpush.bf16.xpose.msra.mxu0 %v1725
        %1735 = vmatmul.bf16.gmra.mxu0 %v1722
        %v1736 = vpop.f32.mrf.mxu0
        %v1737 = vadd.f32 0.0, %v1736
        %v1738 = vpop.f32.mrf.mxu0
        %1739 = vdwg.mxu0
        %v1741 = vsel %vm1682, %v1433, 0
        %v1744 = vsel %vm1682, %v1557, 0
        %1746 = vmatpush.bf16.xpose.msra.mxu0 0
        %1747 = vmatpush.bf16.xpose.msra.mxu0 0
        %1748 = vmatpush.bf16.xpose.msra.mxu0 0
        %1749 = vmatpush.bf16.xpose.msra.mxu0 0
        %1750 = vmatpush.bf16.xpose.msra.mxu0 0
        %1751 = vmatpush.bf16.xpose.msra.mxu0 0
        %1752 = vmatpush.bf16.xpose.msra.mxu0 0
        %1753 = vmatpush.bf16.xpose.msra.mxu0 %v1744
        %1754 = vmatmul.bf16.gmra.mxu0 %v1741
        %v1755 = vpop.f32.mrf.mxu0
        %v1756 = vadd.f32 0.0, %v1755
        %v1757 = vpop.f32.mrf.mxu0
        %1758 = vdwg.mxu0
        %v1759 = vmul.f32 %v1699, 0.17677669
        %v1760 = vmul.f32 %v1718, 0.17677669
        %v1761 = vmul.f32 %v1737, 0.17677669
        %v1762 = vmul.f32 %v1756, 0.17677669
        %v1763 = vsel %vm1097, 1, 0
        %vm1764 = vcmp.eq.s32.totalorder %v1763, 1
        %v1765 = vsel %vm1764, %v1759, -1e+30
        %v1766 = vsel %vm1764, %v1760, -1e+30
        %v1767 = vsel %vm1764, %v1761, -1e+30
        %v1768 = vsel %vm1764, %v1762, -1e+30
        %vm1769 = vcmask 64512
        %v1770 = vsel %vm1769, %v1765, -inf
        %1771 = vmax.xlane.f32.xlu0 %v1770
        %v1772 = vpop.xlane.xlu0 %1771
        %v1773 = vsel %vm1769, %v1766, -inf
        %1774 = vmax.xlane.f32.xlu0 %v1773
        %v1775 = vpop.xlane.xlu0 %1774
        %v1776 = vsel %vm1769, %v1767, -inf
        %1777 = vmax.xlane.f32.xlu0 %v1776
        %v1778 = vpop.xlane.xlu0 %1777
        %v1779 = vsel %vm1769, %v1768, -inf
        %1780 = vmax.xlane.f32.xlu0 %v1779
        %v1781 = vpop.xlane.xlu0 %1780
        %v1782 = vsub.f32 %v1765, %v1772
        %v1783 = vsub.f32 %v1766, %v1775
        %v1784 = vsub.f32 %v1767, %v1778
        %v1785 = vsub.f32 %v1768, %v1781
        %v1786 = vmul.f32 %v1782, 1.442695
        %v1787 = vpow.pop %v1786
        %v1788 = vmul.f32 %v1783, 1.442695
        %v1789 = vpow.pop %v1788
        %v1790 = vmul.f32 %v1784, 1.442695
        %v1791 = vpow.pop %v1790
        %v1792 = vmul.f32 %v1785, 1.442695
        %v1793 = vpow.pop %v1792
        %v1794 = vsel %vm1769, %v1787, 0.0
        %1795 = vadd.xlane.f32.xlu0 %v1794
        %v1796 = vpop.xlane.xlu0 %1795
        %v1797 = vsel %vm1769, %v1789, 0.0
        %1798 = vadd.xlane.f32.xlu0 %v1797
        %v1799 = vpop.xlane.xlu0 %1798
        %v1800 = vsel %vm1769, %v1791, 0.0
        %1801 = vadd.xlane.f32.xlu0 %v1800
        %v1802 = vpop.xlane.xlu0 %1801
        %v1803 = vsel %vm1769, %v1793, 0.0
        %1804 = vadd.xlane.f32.xlu0 %v1803
        %v1805 = vpop.xlane.xlu0 %1804
        %v1806 = vrcp.pop %v1796
        %v1807 = vrcp.pop %v1799
        %v1808 = vrcp.pop %v1802
        %v1809 = vrcp.pop %v1805
        %v1810 = vmul.f32 %v1787, %v1806
        %v1811 = vmul.f32 %v1789, %v1807
        %v1812 = vmul.f32 %v1791, %v1808
        %v1813 = vmul.f32 %v1793, %v1809
        %v1814 = vpack.c.bf16 %v1810, %v1810
        %v1815 = vpack.c.bf16 %v1811, %v1811
        %v1816 = vpack.c.bf16 %v1812, %v1812
        %v1817 = vpack.c.bf16 %v1813, %v1813
        %v1819 = vsel %vm1769, %v1814, 0
        %vm1821 = vcmask 1043456
        %v1823 = vsel %vm1821, %v1678, 0
        %1825 = vmatpush.bf16.msra.mxu0 0
        %1826 = vmatpush.bf16.msra.mxu0 0
        %1827 = vmatpush.bf16.msra.mxu0 0
        %1828 = vmatpush.bf16.msra.mxu0 0
        %1829 = vmatpush.bf16.msra.mxu0 0
        %1830 = vmatpush.bf16.msra.mxu0 0
        %1831 = vmatpush.bf16.msra.mxu0 0
        %1832 = vmatpush.bf16.msra.mxu0 %v1823
        %1833 = vmatmul.bf16.gmra.mxu0 %v1819
        %v1834 = vpop.f32.mrf.mxu0
        %v1835 = vadd.f32 0.0, %v1834
        %v1836 = vpop.f32.mrf.mxu0
        %1837 = vdwg.mxu0
        %v1839 = vsel %vm1769, %v1815, 0
        %v1842 = vsel %vm1821, %v1679, 0
        %1844 = vmatpush.bf16.msra.mxu0 0
        %1845 = vmatpush.bf16.msra.mxu0 0
        %1846 = vmatpush.bf16.msra.mxu0 0
        %1847 = vmatpush.bf16.msra.mxu0 0
        %1848 = vmatpush.bf16.msra.mxu0 0
        %1849 = vmatpush.bf16.msra.mxu0 0
        %1850 = vmatpush.bf16.msra.mxu0 0
        %1851 = vmatpush.bf16.msra.mxu0 %v1842
        %1852 = vmatmul.bf16.gmra.mxu0 %v1839
        %v1853 = vpop.f32.mrf.mxu0
        %v1854 = vadd.f32 0.0, %v1853
        %v1855 = vpop.f32.mrf.mxu0
        %1856 = vdwg.mxu0
        %v1858 = vsel %vm1769, %v1816, 0
        %v1861 = vsel %vm1821, %v1680, 0
        %1863 = vmatpush.bf16.msra.mxu0 0
        %1864 = vmatpush.bf16.msra.mxu0 0
        %1865 = vmatpush.bf16.msra.mxu0 0
        %1866 = vmatpush.bf16.msra.mxu0 0
        %1867 = vmatpush.bf16.msra.mxu0 0
        %1868 = vmatpush.bf16.msra.mxu0 0
        %1869 = vmatpush.bf16.msra.mxu0 0
        %1870 = vmatpush.bf16.msra.mxu0 %v1861
        %1871 = vmatmul.bf16.gmra.mxu0 %v1858
        %v1872 = vpop.f32.mrf.mxu0
        %v1873 = vadd.f32 0.0, %v1872
        %v1874 = vpop.f32.mrf.mxu0
        %1875 = vdwg.mxu0
        %v1877 = vsel %vm1769, %v1817, 0
        %v1880 = vsel %vm1821, %v1681, 0
        %1882 = vmatpush.bf16.msra.mxu0 0
        %1883 = vmatpush.bf16.msra.mxu0 0
        %1884 = vmatpush.bf16.msra.mxu0 0
        %1885 = vmatpush.bf16.msra.mxu0 0
        %1886 = vmatpush.bf16.msra.mxu0 0
        %1887 = vmatpush.bf16.msra.mxu0 0
        %1888 = vmatpush.bf16.msra.mxu0 0
        %1889 = vmatpush.bf16.msra.mxu0 %v1880
        %1890 = vmatmul.bf16.gmra.mxu0 %v1877
        %v1891 = vpop.f32.mrf.mxu0
        %v1892 = vadd.f32 0.0, %v1891
        %v1893 = vpop.f32.mrf.mxu0
        %1894 = vdwg.mxu0
        %v1895 = vrot.slane %v1873, 4
        %v1896 = vsel %vm1320, %v1895, %v1835
        %v1897 = vrot.slane %v1835, 4
        %v1898 = vsel %vm1320, %v1873, %v1897
        %v1900 = vunpack.c.l.s4 1983009808
        %v1901 = vunpack.c.0.s8 %v1900
        %v1902 = vperm.slane %v1896, %v1901
        %v1904 = vunpack.c.l.s4 1983009808
        %v1905 = vunpack.c.0.s8 %v1904
        %v1906 = vperm.slane %v1898, %v1905
        %v1907 = vrot.slane %v1892, 4
        %v1908 = vsel %vm1320, %v1907, %v1854
        %v1909 = vrot.slane %v1854, 4
        %v1910 = vsel %vm1320, %v1892, %v1909
        %v1912 = vunpack.c.l.s4 1983009808
        %v1913 = vunpack.c.0.s8 %v1912
        %v1914 = vperm.slane %v1908, %v1913
        %v1916 = vunpack.c.l.s4 1983009808
        %v1917 = vunpack.c.0.s8 %v1916
        %v1918 = vperm.slane %v1910, %v1917
        %v1919 = vrot.slane %v1914, 4
        %v1920 = vsel %vm1320, %v1919, %v1902
        %v1921 = vrot.slane %v1902, 4
        %v1922 = vsel %vm1320, %v1914, %v1921
        %v1924 = vunpack.c.l.s4 1934713408
        %v1925 = vunpack.c.0.s8 %v1924
        %v1926 = vperm.slane %v1920, %v1925
        %v1928 = vunpack.c.l.s4 1934713408
        %v1929 = vunpack.c.0.s8 %v1928
        %v1930 = vperm.slane %v1922, %v1929
        %v1931 = vrot.slane %v1918, 4
        %v1932 = vsel %vm1320, %v1931, %v1906
        %v1933 = vrot.slane %v1906, 4
        %v1934 = vsel %vm1320, %v1918, %v1933
        %v1936 = vunpack.c.l.s4 1934713408
        %v1937 = vunpack.c.0.s8 %v1936
        %v1938 = vperm.slane %v1932, %v1937
        %v1940 = vunpack.c.l.s4 1934713408
        %v1941 = vunpack.c.0.s8 %v1940
        %v1942 = vperm.slane %v1934, %v1941
        %v1943 = vrot.slane %v1926, 4
        %v1944 = vsel %vm1320, 0.0, %v1943
        %v1945 = vrot.slane %v1930, 4
        %v1946 = vsel %vm1320, 0.0, %v1945
        %v1947 = vrot.slane %v1938, 4
        %v1948 = vsel %vm1320, 0.0, %v1947
        %v1949 = vrot.slane %v1942, 4
        %v1950 = vsel %vm1320, 0.0, %v1949
        %v1951 = vsel %vm1320, %v1945, %v1926
        %v1953 = vunpack.c.l.s4 1983009808
        %v1954 = vunpack.c.0.s8 %v1953
        %v1955 = vperm.slane %v1951, %v1954
        %v1956 = vrot.slane %v1946, 4
        %v1957 = vsel %vm1320, %v1956, %v1944
        %v1959 = vunpack.c.l.s4 1983009808
        %v1960 = vunpack.c.0.s8 %v1959
        %v1961 = vperm.slane %v1957, %v1960
        %v1962 = vsel %vm1320, %v1949, %v1938
        %v1964 = vunpack.c.l.s4 1983009808
        %v1965 = vunpack.c.0.s8 %v1964
        %v1966 = vperm.slane %v1962, %v1965
        %v1967 = vrot.slane %v1950, 4
        %v1968 = vsel %vm1320, %v1967, %v1948
        %v1970 = vunpack.c.l.s4 1983009808
        %v1971 = vunpack.c.0.s8 %v1970
        %v1972 = vperm.slane %v1968, %v1971
        %v1973 = vrot.slane %v1961, 4
        %v1974 = vsel %vm1320, %v1973, %v1955
        %v1975 = vrot.slane %v1955, 4
        %v1976 = vsel %vm1320, %v1961, %v1975
        %v1978 = vunpack.c.l.s4 1934713408
        %v1979 = vunpack.c.0.s8 %v1978
        %v1980 = vperm.slane %v1974, %v1979
        %v1982 = vunpack.c.l.s4 1934713408
        %v1983 = vunpack.c.0.s8 %v1982
        %v1984 = vperm.slane %v1976, %v1983
        %v1985 = vrot.slane %v1972, 4
        %v1986 = vsel %vm1320, %v1985, %v1966
        %v1987 = vrot.slane %v1966, 4
        %v1988 = vsel %vm1320, %v1972, %v1987
        %v1990 = vunpack.c.l.s4 1934713408
        %v1991 = vunpack.c.0.s8 %v1990
        %v1992 = vperm.slane %v1986, %v1991
        %v1994 = vunpack.c.l.s4 1934713408
        %v1995 = vunpack.c.0.s8 %v1994
        %v1996 = vperm.slane %v1988, %v1995
        %v1997 = vrot.slane %v1992, 4
        %v1998 = vsel %vm1320, %v1997, %v1980
        %v1999 = vrot.slane %v1980, 4
        %v2000 = vsel %vm1320, %v1992, %v1999
        %v2001 = vrot.slane %v1996, 4
        %v2002 = vsel %vm1320, %v2001, %v1984
        %v2003 = vrot.slane %v1984, 4
        %v2004 = vsel %vm1320, %v1996, %v2003
        %2006 = vrot.lane.b32.xlu0 %v2000, 32
        %v2007 = vpop.permute.xlu0 %2006
        %2010 = vrot.lane.b32.xlu0 %v2002, 64
        %v2011 = vpop.permute.xlu0 %2010
        %2014 = vrot.lane.b32.xlu0 %v2004, 96
        %v2015 = vpop.permute.xlu0 %2014
        %v2017 = vsel %vm1682, %v1998, %v2007
        %vm2018 = vcmask 523264
        %v2019 = vsel %vm2018, %v2017, %v2011
        %vm2020 = vcmask 785408
        %v2021 = vsel %vm2020, %v2019, %v2015
        %2023 = vrot.lane.b32.xlu0 %v1279, 96
        %v2024 = vpop.permute.xlu0 %2023
        %2026 = vrot.lane.b32.xlu0 %v1279, 64
        %v2027 = vpop.permute.xlu0 %2026
        %2029 = vrot.lane.b32.xlu0 %v1279, 32
        %v2030 = vpop.permute.xlu0 %2029
        %v2032 = vrot.slane %v2027, 4
        %v2033 = vsel %vm1320, %v2032, %v1279
        %v2034 = vrot.slane %v1279, 4
        %v2035 = vsel %vm1320, %v2027, %v2034
        %v2037 = vunpack.c.l.s4 1983009808
        %v2038 = vunpack.c.0.s8 %v2037
        %v2039 = vperm.slane %v2033, %v2038
        %v2041 = vunpack.c.l.s4 1983009808
        %v2042 = vunpack.c.0.s8 %v2041
        %v2043 = vperm.slane %v2035, %v2042
        %v2044 = vrot.slane %v2030, 4
        %v2045 = vsel %vm1320, %v2044, %v2024
        %v2046 = vrot.slane %v2024, 4
        %v2047 = vsel %vm1320, %v2030, %v2046
        %v2049 = vunpack.c.l.s4 1983009808
        %v2050 = vunpack.c.0.s8 %v2049
        %v2051 = vperm.slane %v2045, %v2050
        %v2053 = vunpack.c.l.s4 1983009808
        %v2054 = vunpack.c.0.s8 %v2053
        %v2055 = vperm.slane %v2047, %v2054
        %v2056 = vrot.slane %v2051, 4
        %v2057 = vsel %vm1320, %v2056, %v2039
        %v2058 = vrot.slane %v2039, 4
        %v2059 = vsel %vm1320, %v2051, %v2058
        %v2061 = vunpack.c.l.s4 1934713408
        %v2062 = vunpack.c.0.s8 %v2061
        %v2063 = vperm.slane %v2057, %v2062
        %v2065 = vunpack.c.l.s4 1934713408
        %v2066 = vunpack.c.0.s8 %v2065
        %v2067 = vperm.slane %v2059, %v2066
        %v2068 = vrot.slane %v2055, 4
        %v2069 = vsel %vm1320, %v2068, %v2043
        %v2070 = vrot.slane %v2043, 4
        %v2071 = vsel %vm1320, %v2055, %v2070
        %v2073 = vunpack.c.l.s4 1934713408
        %v2074 = vunpack.c.0.s8 %v2073
        %v2075 = vperm.slane %v2069, %v2074
        %v2077 = vunpack.c.l.s4 1934713408
        %v2078 = vunpack.c.0.s8 %v2077
        %v2079 = vperm.slane %v2071, %v2078
        %v2080 = vrot.slane %v2063, 4
        %v2081 = vsel %vm1320, 0.0, %v2080
        %v2082 = vrot.slane %v2067, 4
        %v2083 = vsel %vm1320, 0.0, %v2082
        %v2084 = vrot.slane %v2075, 4
        %v2085 = vsel %vm1320, 0.0, %v2084
        %v2086 = vrot.slane %v2079, 4
        %v2087 = vsel %vm1320, 0.0, %v2086
        %v2088 = vsel %vm1320, %v2082, %v2063
        %v2090 = vunpack.c.l.s4 1983009808
        %v2091 = vunpack.c.0.s8 %v2090
        %v2092 = vperm.slane %v2088, %v2091
        %v2093 = vrot.slane %v2083, 4
        %v2094 = vsel %vm1320, %v2093, %v2081
        %v2096 = vunpack.c.l.s4 1983009808
        %v2097 = vunpack.c.0.s8 %v2096
        %v2098 = vperm.slane %v2094, %v2097
        %v2099 = vsel %vm1320, %v2086, %v2075
        %v2101 = vunpack.c.l.s4 1983009808
        %v2102 = vunpack.c.0.s8 %v2101
        %v2103 = vperm.slane %v2099, %v2102
        %v2104 = vrot.slane %v2087, 4
        %v2105 = vsel %vm1320, %v2104, %v2085
        %v2107 = vunpack.c.l.s4 1983009808
        %v2108 = vunpack.c.0.s8 %v2107
        %v2109 = vperm.slane %v2105, %v2108
        %v2110 = vrot.slane %v2098, 4
        %v2111 = vsel %vm1320, %v2110, %v2092
        %v2112 = vrot.slane %v2092, 4
        %v2113 = vsel %vm1320, %v2098, %v2112
        %v2115 = vunpack.c.l.s4 1934713408
        %v2116 = vunpack.c.0.s8 %v2115
        %v2117 = vperm.slane %v2111, %v2116
        %v2119 = vunpack.c.l.s4 1934713408
        %v2120 = vunpack.c.0.s8 %v2119
        %v2121 = vperm.slane %v2113, %v2120
        %v2122 = vrot.slane %v2109, 4
        %v2123 = vsel %vm1320, %v2122, %v2103
        %v2124 = vrot.slane %v2103, 4
        %v2125 = vsel %vm1320, %v2109, %v2124
        %v2127 = vunpack.c.l.s4 1934713408
        %v2128 = vunpack.c.0.s8 %v2127
        %v2129 = vperm.slane %v2123, %v2128
        %v2131 = vunpack.c.l.s4 1934713408
        %v2132 = vunpack.c.0.s8 %v2131
        %v2133 = vperm.slane %v2125, %v2132
        %v2134 = vrot.slane %v2129, 4
        %v2135 = vsel %vm1320, %v2134, %v2117
        %v2136 = vrot.slane %v2117, 4
        %v2137 = vsel %vm1320, %v2129, %v2136
        %v2138 = vrot.slane %v2133, 4
        %v2139 = vsel %vm1320, %v2138, %v2121
        %v2140 = vrot.slane %v2121, 4
        %v2141 = vsel %vm1320, %v2133, %v2140
        %v2142 = vpack.c.bf16 %v2135, %v2135
        %v2143 = vpack.c.bf16 %v2137, %v2137
        %v2144 = vpack.c.bf16 %v2139, %v2139
        %v2145 = vpack.c.bf16 %v2141, %v2141
        %2147 = vrot.lane.b32.xlu0 %v1293, 96
        %v2148 = vpop.permute.xlu0 %2147
        %2150 = vrot.lane.b32.xlu0 %v1293, 64
        %v2151 = vpop.permute.xlu0 %2150
        %2153 = vrot.lane.b32.xlu0 %v1293, 32
        %v2154 = vpop.permute.xlu0 %2153
        %v2156 = vrot.slane %v2151, 4
        %v2157 = vsel %vm1320, %v2156, %v1293
        %v2158 = vrot.slane %v1293, 4
        %v2159 = vsel %vm1320, %v2151, %v2158
        %v2161 = vunpack.c.l.s4 1983009808
        %v2162 = vunpack.c.0.s8 %v2161
        %v2163 = vperm.slane %v2157, %v2162
        %v2165 = vunpack.c.l.s4 1983009808
        %v2166 = vunpack.c.0.s8 %v2165
        %v2167 = vperm.slane %v2159, %v2166
        %v2168 = vrot.slane %v2154, 4
        %v2169 = vsel %vm1320, %v2168, %v2148
        %v2170 = vrot.slane %v2148, 4
        %v2171 = vsel %vm1320, %v2154, %v2170
        %v2173 = vunpack.c.l.s4 1983009808
        %v2174 = vunpack.c.0.s8 %v2173
        %v2175 = vperm.slane %v2169, %v2174
        %v2177 = vunpack.c.l.s4 1983009808
        %v2178 = vunpack.c.0.s8 %v2177
        %v2179 = vperm.slane %v2171, %v2178
        %v2180 = vrot.slane %v2175, 4
        %v2181 = vsel %vm1320, %v2180, %v2163
        %v2182 = vrot.slane %v2163, 4
        %v2183 = vsel %vm1320, %v2175, %v2182
        %v2185 = vunpack.c.l.s4 1934713408
        %v2186 = vunpack.c.0.s8 %v2185
        %v2187 = vperm.slane %v2181, %v2186
        %v2189 = vunpack.c.l.s4 1934713408
        %v2190 = vunpack.c.0.s8 %v2189
        %v2191 = vperm.slane %v2183, %v2190
        %v2192 = vrot.slane %v2179, 4
        %v2193 = vsel %vm1320, %v2192, %v2167
        %v2194 = vrot.slane %v2167, 4
        %v2195 = vsel %vm1320, %v2179, %v2194
        %v2197 = vunpack.c.l.s4 1934713408
        %v2198 = vunpack.c.0.s8 %v2197
        %v2199 = vperm.slane %v2193, %v2198
        %v2201 = vunpack.c.l.s4 1934713408
        %v2202 = vunpack.c.0.s8 %v2201
        %v2203 = vperm.slane %v2195, %v2202
        %v2204 = vrot.slane %v2187, 4
        %v2205 = vsel %vm1320, 0.0, %v2204
        %v2206 = vrot.slane %v2191, 4
        %v2207 = vsel %vm1320, 0.0, %v2206
        %v2208 = vrot.slane %v2199, 4
        %v2209 = vsel %vm1320, 0.0, %v2208
        %v2210 = vrot.slane %v2203, 4
        %v2211 = vsel %vm1320, 0.0, %v2210
        %v2212 = vsel %vm1320, %v2206, %v2187
        %v2214 = vunpack.c.l.s4 1983009808
        %v2215 = vunpack.c.0.s8 %v2214
        %v2216 = vperm.slane %v2212, %v2215
        %v2217 = vrot.slane %v2207, 4
        %v2218 = vsel %vm1320, %v2217, %v2205
        %v2220 = vunpack.c.l.s4 1983009808
        %v2221 = vunpack.c.0.s8 %v2220
        %v2222 = vperm.slane %v2218, %v2221
        %v2223 = vsel %vm1320, %v2210, %v2199
        %v2225 = vunpack.c.l.s4 1983009808
        %v2226 = vunpack.c.0.s8 %v2225
        %v2227 = vperm.slane %v2223, %v2226
        %v2228 = vrot.slane %v2211, 4
        %v2229 = vsel %vm1320, %v2228, %v2209
        %v2231 = vunpack.c.l.s4 1983009808
        %v2232 = vunpack.c.0.s8 %v2231
        %v2233 = vperm.slane %v2229, %v2232
        %v2234 = vrot.slane %v2222, 4
        %v2235 = vsel %vm1320, %v2234, %v2216
        %v2236 = vrot.slane %v2216, 4
        %v2237 = vsel %vm1320, %v2222, %v2236
        %v2239 = vunpack.c.l.s4 1934713408
        %v2240 = vunpack.c.0.s8 %v2239
        %v2241 = vperm.slane %v2235, %v2240
        %v2243 = vunpack.c.l.s4 1934713408
        %v2244 = vunpack.c.0.s8 %v2243
        %v2245 = vperm.slane %v2237, %v2244
        %v2246 = vrot.slane %v2233, 4
        %v2247 = vsel %vm1320, %v2246, %v2227
        %v2248 = vrot.slane %v2227, 4
        %v2249 = vsel %vm1320, %v2233, %v2248
        %v2251 = vunpack.c.l.s4 1934713408
        %v2252 = vunpack.c.0.s8 %v2251
        %v2253 = vperm.slane %v2247, %v2252
        %v2255 = vunpack.c.l.s4 1934713408
        %v2256 = vunpack.c.0.s8 %v2255
        %v2257 = vperm.slane %v2249, %v2256
        %v2258 = vrot.slane %v2253, 4
        %v2259 = vsel %vm1320, %v2258, %v2241
        %v2260 = vrot.slane %v2241, 4
        %v2261 = vsel %vm1320, %v2253, %v2260
        %v2262 = vrot.slane %v2257, 4
        %v2263 = vsel %vm1320, %v2262, %v2245
        %v2264 = vrot.slane %v2245, 4
        %v2265 = vsel %vm1320, %v2257, %v2264
        %v2266 = vpack.c.bf16 %v2259, %v2259
        %v2267 = vpack.c.bf16 %v2261, %v2261
        %v2268 = vpack.c.bf16 %v2263, %v2263
        %v2269 = vpack.c.bf16 %v2265, %v2265
        %2271 = vrot.lane.b32.xlu0 %v1307, 96
        %v2272 = vpop.permute.xlu0 %2271
        %2274 = vrot.lane.b32.xlu0 %v1307, 64
        %v2275 = vpop.permute.xlu0 %2274
        %2277 = vrot.lane.b32.xlu0 %v1307, 32
        %v2278 = vpop.permute.xlu0 %2277
        %v2280 = vrot.slane %v2275, 4
        %v2281 = vsel %vm1320, %v2280, %v1307
        %v2282 = vrot.slane %v1307, 4
        %v2283 = vsel %vm1320, %v2275, %v2282
        %v2285 = vunpack.c.l.s4 1983009808
        %v2286 = vunpack.c.0.s8 %v2285
        %v2287 = vperm.slane %v2281, %v2286
        %v2289 = vunpack.c.l.s4 1983009808
        %v2290 = vunpack.c.0.s8 %v2289
        %v2291 = vperm.slane %v2283, %v2290
        %v2292 = vrot.slane %v2278, 4
        %v2293 = vsel %vm1320, %v2292, %v2272
        %v2294 = vrot.slane %v2272, 4
        %v2295 = vsel %vm1320, %v2278, %v2294
        %v2297 = vunpack.c.l.s4 1983009808
        %v2298 = vunpack.c.0.s8 %v2297
        %v2299 = vperm.slane %v2293, %v2298
        %v2301 = vunpack.c.l.s4 1983009808
        %v2302 = vunpack.c.0.s8 %v2301
        %v2303 = vperm.slane %v2295, %v2302
        %v2304 = vrot.slane %v2299, 4
        %v2305 = vsel %vm1320, %v2304, %v2287
        %v2306 = vrot.slane %v2287, 4
        %v2307 = vsel %vm1320, %v2299, %v2306
        %v2309 = vunpack.c.l.s4 1934713408
        %v2310 = vunpack.c.0.s8 %v2309
        %v2311 = vperm.slane %v2305, %v2310
        %v2313 = vunpack.c.l.s4 1934713408
        %v2314 = vunpack.c.0.s8 %v2313
        %v2315 = vperm.slane %v2307, %v2314
        %v2316 = vrot.slane %v2303, 4
        %v2317 = vsel %vm1320, %v2316, %v2291
        %v2318 = vrot.slane %v2291, 4
        %v2319 = vsel %vm1320, %v2303, %v2318
        %v2321 = vunpack.c.l.s4 1934713408
        %v2322 = vunpack.c.0.s8 %v2321
        %v2323 = vperm.slane %v2317, %v2322
        %v2325 = vunpack.c.l.s4 1934713408
        %v2326 = vunpack.c.0.s8 %v2325
        %v2327 = vperm.slane %v2319, %v2326
        %v2328 = vrot.slane %v2311, 4
        %v2329 = vsel %vm1320, 0.0, %v2328
        %v2330 = vrot.slane %v2315, 4
        %v2331 = vsel %vm1320, 0.0, %v2330
        %v2332 = vrot.slane %v2323, 4
        %v2333 = vsel %vm1320, 0.0, %v2332
        %v2334 = vrot.slane %v2327, 4
        %v2335 = vsel %vm1320, 0.0, %v2334
        %v2336 = vsel %vm1320, %v2330, %v2311
        %v2338 = vunpack.c.l.s4 1983009808
        %v2339 = vunpack.c.0.s8 %v2338
        %v2340 = vperm.slane %v2336, %v2339
        %v2341 = vrot.slane %v2331, 4
        %v2342 = vsel %vm1320, %v2341, %v2329
        %v2344 = vunpack.c.l.s4 1983009808
        %v2345 = vunpack.c.0.s8 %v2344
        %v2346 = vperm.slane %v2342, %v2345
        %v2347 = vsel %vm1320, %v2334, %v2323
        %v2349 = vunpack.c.l.s4 1983009808
        %v2350 = vunpack.c.0.s8 %v2349
        %v2351 = vperm.slane %v2347, %v2350
        %v2352 = vrot.slane %v2335, 4
        %v2353 = vsel %vm1320, %v2352, %v2333
        %v2355 = vunpack.c.l.s4 1983009808
        %v2356 = vunpack.c.0.s8 %v2355
        %v2357 = vperm.slane %v2353, %v2356
        %v2358 = vrot.slane %v2346, 4
        %v2359 = vsel %vm1320, %v2358, %v2340
        %v2360 = vrot.slane %v2340, 4
        %v2361 = vsel %vm1320, %v2346, %v2360
        %v2363 = vunpack.c.l.s4 1934713408
        %v2364 = vunpack.c.0.s8 %v2363
        %v2365 = vperm.slane %v2359, %v2364
        %v2367 = vunpack.c.l.s4 1934713408
        %v2368 = vunpack.c.0.s8 %v2367
        %v2369 = vperm.slane %v2361, %v2368
        %v2370 = vrot.slane %v2357, 4
        %v2371 = vsel %vm1320, %v2370, %v2351
        %v2372 = vrot.slane %v2351, 4
        %v2373 = vsel %vm1320, %v2357, %v2372
        %v2375 = vunpack.c.l.s4 1934713408
        %v2376 = vunpack.c.0.s8 %v2375
        %v2377 = vperm.slane %v2371, %v2376
        %v2379 = vunpack.c.l.s4 1934713408
        %v2380 = vunpack.c.0.s8 %v2379
        %v2381 = vperm.slane %v2373, %v2380
        %v2382 = vrot.slane %v2377, 4
        %v2383 = vsel %vm1320, %v2382, %v2365
        %v2384 = vrot.slane %v2365, 4
        %v2385 = vsel %vm1320, %v2377, %v2384
        %v2386 = vrot.slane %v2381, 4
        %v2387 = vsel %vm1320, %v2386, %v2369
        %v2388 = vrot.slane %v2369, 4
        %v2389 = vsel %vm1320, %v2381, %v2388
        %v2390 = vpack.c.bf16 %v2383, %v2383
        %v2391 = vpack.c.bf16 %v2385, %v2385
        %v2392 = vpack.c.bf16 %v2387, %v2387
        %v2393 = vpack.c.bf16 %v2389, %v2389
        %v2395 = vsel %vm1682, %v2142, 0
        %v2398 = vsel %vm1682, %v2266, 0
        %2400 = vmatpush.bf16.xpose.msra.mxu0 0
        %2401 = vmatpush.bf16.xpose.msra.mxu0 0
        %2402 = vmatpush.bf16.xpose.msra.mxu0 0
        %2403 = vmatpush.bf16.xpose.msra.mxu0 0
        %2404 = vmatpush.bf16.xpose.msra.mxu0 0
        %2405 = vmatpush.bf16.xpose.msra.mxu0 0
        %2406 = vmatpush.bf16.xpose.msra.mxu0 0
        %2407 = vmatpush.bf16.xpose.msra.mxu0 %v2398
        %2408 = vmatmul.bf16.gmra.mxu0 %v2395
        %v2409 = vpop.f32.mrf.mxu0
        %v2410 = vadd.f32 0.0, %v2409
        %v2411 = vpop.f32.mrf.mxu0
        %2412 = vdwg.mxu0
        %v2414 = vsel %vm1682, %v2143, 0
        %v2417 = vsel %vm1682, %v2267, 0
        %2419 = vmatpush.bf16.xpose.msra.mxu0 0
        %2420 = vmatpush.bf16.xpose.msra.mxu0 0
        %2421 = vmatpush.bf16.xpose.msra.mxu0 0
        %2422 = vmatpush.bf16.xpose.msra.mxu0 0
        %2423 = vmatpush.bf16.xpose.msra.mxu0 0
        %2424 = vmatpush.bf16.xpose.msra.mxu0 0
        %2425 = vmatpush.bf16.xpose.msra.mxu0 0
        %2426 = vmatpush.bf16.xpose.msra.mxu0 %v2417
        %2427 = vmatmul.bf16.gmra.mxu0 %v2414
        %v2428 = vpop.f32.mrf.mxu0
        %v2429 = vadd.f32 0.0, %v2428
        %v2430 = vpop.f32.mrf.mxu0
        %2431 = vdwg.mxu0
        %v2433 = vsel %vm1682, %v2144, 0
        %v2436 = vsel %vm1682, %v2268, 0
        %2438 = vmatpush.bf16.xpose.msra.mxu0 0
        %2439 = vmatpush.bf16.xpose.msra.mxu0 0
        %2440 = vmatpush.bf16.xpose.msra.mxu0 0
        %2441 = vmatpush.bf16.xpose.msra.mxu0 0
        %2442 = vmatpush.bf16.xpose.msra.mxu0 0
        %2443 = vmatpush.bf16.xpose.msra.mxu0 0
        %2444 = vmatpush.bf16.xpose.msra.mxu0 0
        %2445 = vmatpush.bf16.xpose.msra.mxu0 %v2436
        %2446 = vmatmul.bf16.gmra.mxu0 %v2433
        %v2447 = vpop.f32.mrf.mxu0
        %v2448 = vadd.f32 0.0, %v2447
        %v2449 = vpop.f32.mrf.mxu0
        %2450 = vdwg.mxu0
        %v2452 = vsel %vm1682, %v2145, 0
        %v2455 = vsel %vm1682, %v2269, 0
        %2457 = vmatpush.bf16.xpose.msra.mxu0 0
        %2458 = vmatpush.bf16.xpose.msra.mxu0 0
        %2459 = vmatpush.bf16.xpose.msra.mxu0 0
        %2460 = vmatpush.bf16.xpose.msra.mxu0 0
        %2461 = vmatpush.bf16.xpose.msra.mxu0 0
        %2462 = vmatpush.bf16.xpose.msra.mxu0 0
        %2463 = vmatpush.bf16.xpose.msra.mxu0 0
        %2464 = vmatpush.bf16.xpose.msra.mxu0 %v2455
        %2465 = vmatmul.bf16.gmra.mxu0 %v2452
        %v2466 = vpop.f32.mrf.mxu0
        %v2467 = vadd.f32 0.0, %v2466
        %v2468 = vpop.f32.mrf.mxu0
        %2469 = vdwg.mxu0
        %v2470 = vmul.f32 %v2410, 0.17677669
        %v2471 = vmul.f32 %v2429, 0.17677669
        %v2472 = vmul.f32 %v2448, 0.17677669
        %v2473 = vmul.f32 %v2467, 0.17677669
        %v2474 = vsel %vm1764, %v2470, -1e+30
        %v2475 = vsel %vm1764, %v2471, -1e+30
        %v2476 = vsel %vm1764, %v2472, -1e+30
        %v2477 = vsel %vm1764, %v2473, -1e+30
        %v2478 = vsel %vm1769, %v2474, -inf
        %2479 = vmax.xlane.f32.xlu0 %v2478
        %v2480 = vpop.xlane.xlu0 %2479
        %v2481 = vsel %vm1769, %v2475, -inf
        %2482 = vmax.xlane.f32.xlu0 %v2481
        %v2483 = vpop.xlane.xlu0 %2482
        %v2484 = vsel %vm1769, %v2476, -inf
        %2485 = vmax.xlane.f32.xlu0 %v2484
        %v2486 = vpop.xlane.xlu0 %2485
        %v2487 = vsel %vm1769, %v2477, -inf
        %2488 = vmax.xlane.f32.xlu0 %v2487
        %v2489 = vpop.xlane.xlu0 %2488
        %v2490 = vsub.f32 %v2474, %v2480
        %v2491 = vsub.f32 %v2475, %v2483
        %v2492 = vsub.f32 %v2476, %v2486
        %v2493 = vsub.f32 %v2477, %v2489
        %v2494 = vmul.f32 %v2490, 1.442695
        %v2495 = vpow.pop %v2494
        %v2496 = vmul.f32 %v2491, 1.442695
        %v2497 = vpow.pop %v2496
        %v2498 = vmul.f32 %v2492, 1.442695
        %v2499 = vpow.pop %v2498
        %v2500 = vmul.f32 %v2493, 1.442695
        %v2501 = vpow.pop %v2500
        %v2502 = vsel %vm1769, %v2495, 0.0
        %2503 = vadd.xlane.f32.xlu0 %v2502
        %v2504 = vpop.xlane.xlu0 %2503
        %v2505 = vsel %vm1769, %v2497, 0.0
        %2506 = vadd.xlane.f32.xlu0 %v2505
        %v2507 = vpop.xlane.xlu0 %2506
        %v2508 = vsel %vm1769, %v2499, 0.0
        %2509 = vadd.xlane.f32.xlu0 %v2508
        %v2510 = vpop.xlane.xlu0 %2509
        %v2511 = vsel %vm1769, %v2501, 0.0
        %2512 = vadd.xlane.f32.xlu0 %v2511
        %v2513 = vpop.xlane.xlu0 %2512
        %v2514 = vrcp.pop %v2504
        %v2515 = vrcp.pop %v2507
        %v2516 = vrcp.pop %v2510
        %v2517 = vrcp.pop %v2513
        %v2518 = vmul.f32 %v2495, %v2514
        %v2519 = vmul.f32 %v2497, %v2515
        %v2520 = vmul.f32 %v2499, %v2516
        %v2521 = vmul.f32 %v2501, %v2517
        %v2522 = vpack.c.bf16 %v2518, %v2518
        %v2523 = vpack.c.bf16 %v2519, %v2519
        %v2524 = vpack.c.bf16 %v2520, %v2520
        %v2525 = vpack.c.bf16 %v2521, %v2521
        %v2527 = vsel %vm1769, %v2522, 0
        %v2530 = vsel %vm1821, %v2390, 0
        %2532 = vmatpush.bf16.msra.mxu0 0
        %2533 = vmatpush.bf16.msra.mxu0 0
        %2534 = vmatpush.bf16.msra.mxu0 0
        %2535 = vmatpush.bf16.msra.mxu0 0
        %2536 = vmatpush.bf16.msra.mxu0 0
        %2537 = vmatpush.bf16.msra.mxu0 0
        %2538 = vmatpush.bf16.msra.mxu0 0
        %2539 = vmatpush.bf16.msra.mxu0 %v2530
        %2540 = vmatmul.bf16.gmra.mxu0 %v2527
        %v2541 = vpop.f32.mrf.mxu0
        %v2542 = vadd.f32 0.0, %v2541
        %v2543 = vpop.f32.mrf.mxu0
        %2544 = vdwg.mxu0
        %v2546 = vsel %vm1769, %v2523, 0
        %v2549 = vsel %vm1821, %v2391, 0
        %2551 = vmatpush.bf16.msra.mxu0 0
        %2552 = vmatpush.bf16.msra.mxu0 0
        %2553 = vmatpush.bf16.msra.mxu0 0
        %2554 = vmatpush.bf16.msra.mxu0 0
        %2555 = vmatpush.bf16.msra.mxu0 0
        %2556 = vmatpush.bf16.msra.mxu0 0
        %2557 = vmatpush.bf16.msra.mxu0 0
        %2558 = vmatpush.bf16.msra.mxu0 %v2549
        %2559 = vmatmul.bf16.gmra.mxu0 %v2546
        %v2560 = vpop.f32.mrf.mxu0
        %v2561 = vadd.f32 0.0, %v2560
        %v2562 = vpop.f32.mrf.mxu0
        %2563 = vdwg.mxu0
        %v2565 = vsel %vm1769, %v2524, 0
        %v2568 = vsel %vm1821, %v2392, 0
        %2570 = vmatpush.bf16.msra.mxu0 0
        %2571 = vmatpush.bf16.msra.mxu0 0
        %2572 = vmatpush.bf16.msra.mxu0 0
        %2573 = vmatpush.bf16.msra.mxu0 0
        %2574 = vmatpush.bf16.msra.mxu0 0
        %2575 = vmatpush.bf16.msra.mxu0 0
        %2576 = vmatpush.bf16.msra.mxu0 0
        %2577 = vmatpush.bf16.msra.mxu0 %v2568
        %2578 = vmatmul.bf16.gmra.mxu0 %v2565
        %v2579 = vpop.f32.mrf.mxu0
        %v2580 = vadd.f32 0.0, %v2579
        %v2581 = vpop.f32.mrf.mxu0
        %2582 = vdwg.mxu0
        %v2584 = vsel %vm1769, %v2525, 0
        %v2587 = vsel %vm1821, %v2393, 0
        %2589 = vmatpush.bf16.msra.mxu0 0
        %2590 = vmatpush.bf16.msra.mxu0 0
        %2591 = vmatpush.bf16.msra.mxu0 0
        %2592 = vmatpush.bf16.msra.mxu0 0
        %2593 = vmatpush.bf16.msra.mxu0 0
        %2594 = vmatpush.bf16.msra.mxu0 0
        %2595 = vmatpush.bf16.msra.mxu0 0
        %2596 = vmatpush.bf16.msra.mxu0 %v2587
        %2597 = vmatmul.bf16.gmra.mxu0 %v2584
        %v2598 = vpop.f32.mrf.mxu0
        %v2599 = vadd.f32 0.0, %v2598
        %v2600 = vpop.f32.mrf.mxu0
        %2601 = vdwg.mxu0
        %v2602 = vrot.slane %v2580, 4
        %v2603 = vsel %vm1320, %v2602, %v2542
        %v2604 = vrot.slane %v2542, 4
        %v2605 = vsel %vm1320, %v2580, %v2604
        %v2607 = vunpack.c.l.s4 1983009808
        %v2608 = vunpack.c.0.s8 %v2607
        %v2609 = vperm.slane %v2603, %v2608
        %v2611 = vunpack.c.l.s4 1983009808
        %v2612 = vunpack.c.0.s8 %v2611
        %v2613 = vperm.slane %v2605, %v2612
        %v2614 = vrot.slane %v2599, 4
        %v2615 = vsel %vm1320, %v2614, %v2561
        %v2616 = vrot.slane %v2561, 4
        %v2617 = vsel %vm1320, %v2599, %v2616
        %v2619 = vunpack.c.l.s4 1983009808
        %v2620 = vunpack.c.0.s8 %v2619
        %v2621 = vperm.slane %v2615, %v2620
        %v2623 = vunpack.c.l.s4 1983009808
        %v2624 = vunpack.c.0.s8 %v2623
        %v2625 = vperm.slane %v2617, %v2624
        %v2626 = vrot.slane %v2621, 4
        %v2627 = vsel %vm1320, %v2626, %v2609
        %v2628 = vrot.slane %v2609, 4
        %v2629 = vsel %vm1320, %v2621, %v2628
        %v2631 = vunpack.c.l.s4 1934713408
        %v2632 = vunpack.c.0.s8 %v2631
        %v2633 = vperm.slane %v2627, %v2632
        %v2635 = vunpack.c.l.s4 1934713408
        %v2636 = vunpack.c.0.s8 %v2635
        %v2637 = vperm.slane %v2629, %v2636
        %v2638 = vrot.slane %v2625, 4
        %v2639 = vsel %vm1320, %v2638, %v2613
        %v2640 = vrot.slane %v2613, 4
        %v2641 = vsel %vm1320, %v2625, %v2640
        %v2643 = vunpack.c.l.s4 1934713408
        %v2644 = vunpack.c.0.s8 %v2643
        %v2645 = vperm.slane %v2639, %v2644
        %v2647 = vunpack.c.l.s4 1934713408
        %v2648 = vunpack.c.0.s8 %v2647
        %v2649 = vperm.slane %v2641, %v2648
        %v2650 = vrot.slane %v2633, 4
        %v2651 = vsel %vm1320, 0.0, %v2650
        %v2652 = vrot.slane %v2637, 4
        %v2653 = vsel %vm1320, 0.0, %v2652
        %v2654 = vrot.slane %v2645, 4
        %v2655 = vsel %vm1320, 0.0, %v2654
        %v2656 = vrot.slane %v2649, 4
        %v2657 = vsel %vm1320, 0.0, %v2656
        %v2658 = vsel %vm1320, %v2652, %v2633
        %v2660 = vunpack.c.l.s4 1983009808
        %v2661 = vunpack.c.0.s8 %v2660
        %v2662 = vperm.slane %v2658, %v2661
        %v2663 = vrot.slane %v2653, 4
        %v2664 = vsel %vm1320, %v2663, %v2651
        %v2666 = vunpack.c.l.s4 1983009808
        %v2667 = vunpack.c.0.s8 %v2666
        %v2668 = vperm.slane %v2664, %v2667
        %v2669 = vsel %vm1320, %v2656, %v2645
        %v2671 = vunpack.c.l.s4 1983009808
        %v2672 = vunpack.c.0.s8 %v2671
        %v2673 = vperm.slane %v2669, %v2672
        %v2674 = vrot.slane %v2657, 4
        %v2675 = vsel %vm1320, %v2674, %v2655
        %v2677 = vunpack.c.l.s4 1983009808
        %v2678 = vunpack.c.0.s8 %v2677
        %v2679 = vperm.slane %v2675, %v2678
        %v2680 = vrot.slane %v2668, 4
        %v2681 = vsel %vm1320, %v2680, %v2662
        %v2682 = vrot.slane %v2662, 4
        %v2683 = vsel %vm1320, %v2668, %v2682
        %v2685 = vunpack.c.l.s4 1934713408
        %v2686 = vunpack.c.0.s8 %v2685
        %v2687 = vperm.slane %v2681, %v2686
        %v2689 = vunpack.c.l.s4 1934713408
        %v2690 = vunpack.c.0.s8 %v2689
        %v2691 = vperm.slane %v2683, %v2690
        %v2692 = vrot.slane %v2679, 4
        %v2693 = vsel %vm1320, %v2692, %v2673
        %v2694 = vrot.slane %v2673, 4
        %v2695 = vsel %vm1320, %v2679, %v2694
        %v2697 = vunpack.c.l.s4 1934713408
        %v2698 = vunpack.c.0.s8 %v2697
        %v2699 = vperm.slane %v2693, %v2698
        %v2701 = vunpack.c.l.s4 1934713408
        %v2702 = vunpack.c.0.s8 %v2701
        %v2703 = vperm.slane %v2695, %v2702
        %v2704 = vrot.slane %v2699, 4
        %v2705 = vsel %vm1320, %v2704, %v2687
        %v2706 = vrot.slane %v2687, 4
        %v2707 = vsel %vm1320, %v2699, %v2706
        %v2708 = vrot.slane %v2703, 4
        %v2709 = vsel %vm1320, %v2708, %v2691
        %v2710 = vrot.slane %v2691, 4
        %v2711 = vsel %vm1320, %v2703, %v2710
        %2713 = vrot.lane.b32.xlu0 %v2707, 32
        %v2714 = vpop.permute.xlu0 %2713
        %2717 = vrot.lane.b32.xlu0 %v2709, 64
        %v2718 = vpop.permute.xlu0 %2717
        %2721 = vrot.lane.b32.xlu0 %v2711, 96
        %v2722 = vpop.permute.xlu0 %2721
        %v2724 = vsel %vm1682, %v2705, %v2714
        %v2725 = vsel %vm2018, %v2724, %v2718
        %v2726 = vsel %vm2020, %v2725, %v2722
        %v2727 = vpack.c.bf16 %v2726, %v2021
        %v2728 = vld [vmem:[%s865] sm:$0xf]
        %v2729 = vld [vmem:[%s865 + $0x4] sm:$0xf]
        %v2730 = vld [vmem:[%s865 + $0x8] sm:$0xf]
        %v2731 = vld [vmem:[%s865 + $0xc] sm:$0xf]
        %v2732 = vld [vmem:[%s865 + $0x10] sm:$0xf]
        %v2733 = vld [vmem:[%s865 + $0x14] sm:$0xf]
        %v2734 = vld [vmem:[%s865 + $0x18] sm:$0xf]
        %v2735 = vld [vmem:[%s865 + $0x1c] sm:$0xf]
        %v2736 = vld [vmem:[%s865 + $0x20] sm:$0xf]
        %v2737 = vld [vmem:[%s865 + $0x24] sm:$0xf]
        %v2738 = vld [vmem:[%s865 + $0x28] sm:$0xf]
        %v2739 = vld [vmem:[%s865 + $0x2c] sm:$0xf]
        %v2740 = vld [vmem:[%s865 + $0x30] sm:$0xf]
        %v2741 = vld [vmem:[%s865 + $0x34] sm:$0xf]
        %v2742 = vld [vmem:[%s865 + $0x38] sm:$0xf]
        %v2743 = vld [vmem:[%s865 + $0x3c] sm:$0xf]
        %v2744 = vld [vmem:[%s1049] sm:$0x1]
        %v2746 = vperm.slane %v2744, 0
        %v2764 = vunpack.c.l.b16 %v2728
        %v2765 = vunpack.c.l.b16 %v2729
        %v2766 = vunpack.c.l.b16 %v2730
        %v2767 = vunpack.c.l.b16 %v2731
        %v2768 = vunpack.c.l.b16 %v2732
        %v2769 = vunpack.c.l.b16 %v2733
        %v2770 = vunpack.c.l.b16 %v2734
        %v2771 = vunpack.c.l.b16 %v2735
        %v2772 = vunpack.c.l.b16 %v2736
        %v2773 = vunpack.c.l.b16 %v2737
        %v2774 = vunpack.c.l.b16 %v2738
        %v2775 = vunpack.c.l.b16 %v2739
        %v2776 = vunpack.c.l.b16 %v2740
        %v2777 = vunpack.c.l.b16 %v2741
        %v2778 = vunpack.c.l.b16 %v2742
        %v2779 = vunpack.c.l.b16 %v2743
        %v2780 = vpack.c.b16 %v2765, %v2764
        %v2781 = vpack.c.b16 %v2767, %v2766
        %v2782 = vpack.c.b16 %v2769, %v2768
        %v2783 = vpack.c.b16 %v2771, %v2770
        %v2784 = vpack.c.b16 %v2773, %v2772
        %v2785 = vpack.c.b16 %v2775, %v2774
        %v2786 = vpack.c.b16 %v2777, %v2776
        %v2787 = vpack.c.b16 %v2779, %v2778
        %2796 = vmatpush.bf16.msra.mxu0 %v2787
        %2797 = vmatpush.bf16.msra.mxu0 %v2786
        %2798 = vmatpush.bf16.msra.mxu0 %v2785
        %2799 = vmatpush.bf16.msra.mxu0 %v2784
        %2800 = vmatpush.bf16.msra.mxu0 %v2783
        %2801 = vmatpush.bf16.msra.mxu0 %v2782
        %2802 = vmatpush.bf16.msra.mxu0 %v2781
        %2803 = vmatpush.bf16.msra.mxu0 %v2780
        %2804 = vmatmul.bf16.gmra.mxu0 %v2727
        %v2805 = vpop.f32.mrf.mxu0
        %v2806 = vadd.f32 %v2746, %v2805
        %v2807 = vpop.f32.mrf.mxu0
        %v2808 = vadd.f32 %v2746, %v2807
        %2809 = vdwg.mxu0
        %v2810 = vadd.f32 %v1085, %v2806
        %v2811 = vadd.f32 %v1086, %v2808
        %2812 = vadd.xlane.f32.xlu0 %v2810
        %v2813 = vpop.xlane.xlu0 %2812
        %2814 = vadd.xlane.f32.xlu0 %v2811
        %v2815 = vpop.xlane.xlu0 %2814
        %v2816 = vrcp.pop 128.0
        %v2817 = vmul.f32 128.0, %v2816
        %v2818 = vsub.f32 1.0, %v2817
        %v2819 = vmul.f32 %v2816, %v2818
        %v2820 = vadd.f32 %v2816, %v2819
        %vm2821 = vweird.f32 %v2816
        %v2822 = vsel %vm2821, %v2816, %v2820
        %v2823 = vmul.f32 %v2813, %v2822
        %v2824 = vmul.f32 %v2815, %v2822
        %v2825 = vsub.f32 %v2810, %v2823
        %v2826 = vsub.f32 %v2811, %v2824
        %v2827 = vmul.f32 %v2825, %v2825
        %v2828 = vmul.f32 %v2826, %v2826
        %2829 = vadd.xlane.f32.xlu0 %v2827
        %v2830 = vpop.xlane.xlu0 %2829
        %2831 = vadd.xlane.f32.xlu0 %v2828
        %v2832 = vpop.xlane.xlu0 %2831
        %v2833 = vmul.f32 %v2830, %v2822
        %v2834 = vmul.f32 %v2832, %v2822
        %v2835 = vadd.f32 %v2833, 1e-05
        %v2836 = vadd.f32 %v2834, 1e-05
        %v2837 = vrsqrt.pop %v2835
        %v2838 = vmul.f32 %v2837, %v2835
        %v2839 = vmul.f32 %v2838, %v2837
        %v2840 = vmul.f32 0.5, %v2839
        %v2841 = vsub.f32 1.5, %v2840
        %v2842 = vmul.f32 %v2837, %v2841
        %vm2843 = vweird.f32 %v2835
        %vm2844 = vweird.f32 %v2837
        %vm2845 = vmor %vm2843, %vm2844
        %v2846 = vsel %vm2845, %v2837, %v2842
        %v2847 = vrsqrt.pop %v2836
        %v2848 = vmul.f32 %v2847, %v2836
        %v2849 = vmul.f32 %v2848, %v2847
        %v2850 = vmul.f32 0.5, %v2849
        %v2851 = vsub.f32 1.5, %v2850
        %v2852 = vmul.f32 %v2847, %v2851
        %vm2853 = vweird.f32 %v2836
        %vm2854 = vweird.f32 %v2847
        %vm2855 = vmor %vm2853, %vm2854
        %v2856 = vsel %vm2855, %v2847, %v2852
        %v2857 = vmul.f32 %v2825, %v2846
        %v2858 = vmul.f32 %v2826, %v2856
        %v2859 = vperm.slane %v1089, 0
        %v2860 = vmul.f32 %v2857, %v2859
        %v2861 = vmul.f32 %v2858, %v2859
        %v2862 = vperm.slane %v1090, 0
        %v2863 = vadd.f32 %v2860, %v2862
        %v2864 = vadd.f32 %v2861, %v2862
        %v2865 = vpack.c.bf16 %v2864, %v2863
        %v2866 = vld [vmem:[%s875] sm:$0xf]
        %v2867 = vld [vmem:[%s875 + $0x4] sm:$0xf]
        %v2868 = vld [vmem:[%s875 + $0x8] sm:$0xf]
        %v2869 = vld [vmem:[%s875 + $0xc] sm:$0xf]
        %v2870 = vld [vmem:[%s875 + $0x10] sm:$0xf]
        %v2871 = vld [vmem:[%s875 + $0x14] sm:$0xf]
        %v2872 = vld [vmem:[%s875 + $0x18] sm:$0xf]
        %v2873 = vld [vmem:[%s875 + $0x1c] sm:$0xf]
        %v2874 = vld [vmem:[%s875 + $0x20] sm:$0xf]
        %v2875 = vld [vmem:[%s875 + $0x24] sm:$0xf]
        %v2876 = vld [vmem:[%s875 + $0x28] sm:$0xf]
        %v2877 = vld [vmem:[%s875 + $0x2c] sm:$0xf]
        %v2878 = vld [vmem:[%s875 + $0x30] sm:$0xf]
        %v2879 = vld [vmem:[%s875 + $0x34] sm:$0xf]
        %v2880 = vld [vmem:[%s875 + $0x38] sm:$0xf]
        %v2881 = vld [vmem:[%s875 + $0x3c] sm:$0xf]
        %v2882 = vld [vmem:[%s1052] sm:$0x1]
        %v2884 = vperm.slane %v2882, 0
        %v2902 = vunpack.c.l.b16 %v2866
        %v2903 = vunpack.c.l.b16 %v2867
        %v2904 = vunpack.c.l.b16 %v2868
        %v2905 = vunpack.c.l.b16 %v2869
        %v2906 = vunpack.c.l.b16 %v2870
        %v2907 = vunpack.c.l.b16 %v2871
        %v2908 = vunpack.c.l.b16 %v2872
        %v2909 = vunpack.c.l.b16 %v2873
        %v2910 = vunpack.c.l.b16 %v2874
        %v2911 = vunpack.c.l.b16 %v2875
        %v2912 = vunpack.c.l.b16 %v2876
        %v2913 = vunpack.c.l.b16 %v2877
        %v2914 = vunpack.c.l.b16 %v2878
        %v2915 = vunpack.c.l.b16 %v2879
        %v2916 = vunpack.c.l.b16 %v2880
        %v2917 = vunpack.c.l.b16 %v2881
        %v2918 = vpack.c.b16 %v2903, %v2902
        %v2919 = vpack.c.b16 %v2905, %v2904
        %v2920 = vpack.c.b16 %v2907, %v2906
        %v2921 = vpack.c.b16 %v2909, %v2908
        %v2922 = vpack.c.b16 %v2911, %v2910
        %v2923 = vpack.c.b16 %v2913, %v2912
        %v2924 = vpack.c.b16 %v2915, %v2914
        %v2925 = vpack.c.b16 %v2917, %v2916
        %2934 = vmatpush.bf16.msra.mxu0 %v2925
        %2935 = vmatpush.bf16.msra.mxu0 %v2924
        %2936 = vmatpush.bf16.msra.mxu0 %v2923
        %2937 = vmatpush.bf16.msra.mxu0 %v2922
        %2938 = vmatpush.bf16.msra.mxu0 %v2921
        %2939 = vmatpush.bf16.msra.mxu0 %v2920
        %2940 = vmatpush.bf16.msra.mxu0 %v2919
        %2941 = vmatpush.bf16.msra.mxu0 %v2918
        %2942 = vmatmul.bf16.gmra.mxu0 %v2865
        %v2943 = vpop.f32.mrf.mxu0
        %v2944 = vadd.f32 %v2884, %v2943
        %v2945 = vpop.f32.mrf.mxu0
        %v2946 = vadd.f32 %v2884, %v2945
        %2947 = vdwg.mxu0
        %v2948 = vpack.c.bf16 %v1088, %v1087
        %v2949 = vld [vmem:[%s885] sm:$0xff]
        %v2950 = vld [vmem:[%s885 + $0x8] sm:$0xff]
        %v2951 = vld [vmem:[%s885 + $0x10] sm:$0xff]
        %v2952 = vld [vmem:[%s885 + $0x18] sm:$0xff]
        %v2953 = vld [vmem:[%s885 + $0x20] sm:$0xff]
        %v2954 = vld [vmem:[%s885 + $0x28] sm:$0xff]
        %v2955 = vld [vmem:[%s885 + $0x30] sm:$0xff]
        %v2956 = vld [vmem:[%s885 + $0x38] sm:$0xff]
        %v2957 = vld [vmem:[%s885 + $0x40] sm:$0xff]
        %v2958 = vld [vmem:[%s885 + $0x48] sm:$0xff]
        %v2959 = vld [vmem:[%s885 + $0x50] sm:$0xff]
        %v2960 = vld [vmem:[%s885 + $0x58] sm:$0xff]
        %v2961 = vld [vmem:[%s885 + $0x60] sm:$0xff]
        %v2962 = vld [vmem:[%s885 + $0x68] sm:$0xff]
        %v2963 = vld [vmem:[%s885 + $0x70] sm:$0xff]
        %v2964 = vld [vmem:[%s885 + $0x78] sm:$0xff]
        %v2965 = vld [vmem:[%s1056] sm:$0x3]
        %v2967 = vperm.slane %v2965, 0
        %v2968 = vperm.slane %v2965, 1
        %v2987 = vunpack.c.l.b16 %v2949
        %v2988 = vunpack.c.h.b16 %v2949
        %v2989 = vunpack.c.l.b16 %v2950
        %v2990 = vunpack.c.h.b16 %v2950
        %v2991 = vunpack.c.l.b16 %v2951
        %v2992 = vunpack.c.h.b16 %v2951
        %v2993 = vunpack.c.l.b16 %v2952
        %v2994 = vunpack.c.h.b16 %v2952
        %v2995 = vunpack.c.l.b16 %v2953
        %v2996 = vunpack.c.h.b16 %v2953
        %v2997 = vunpack.c.l.b16 %v2954
        %v2998 = vunpack.c.h.b16 %v2954
        %v2999 = vunpack.c.l.b16 %v2955
        %v3000 = vunpack.c.h.b16 %v2955
        %v3001 = vunpack.c.l.b16 %v2956
        %v3002 = vunpack.c.h.b16 %v2956
        %v3003 = vunpack.c.l.b16 %v2957
        %v3004 = vunpack.c.h.b16 %v2957
        %v3005 = vunpack.c.l.b16 %v2958
        %v3006 = vunpack.c.h.b16 %v2958
        %v3007 = vunpack.c.l.b16 %v2959
        %v3008 = vunpack.c.h.b16 %v2959
        %v3009 = vunpack.c.l.b16 %v2960
        %v3010 = vunpack.c.h.b16 %v2960
        %v3011 = vunpack.c.l.b16 %v2961
        %v3012 = vunpack.c.h.b16 %v2961
        %v3013 = vunpack.c.l.b16 %v2962
        %v3014 = vunpack.c.h.b16 %v2962
        %v3015 = vunpack.c.l.b16 %v2963
        %v3016 = vunpack.c.h.b16 %v2963
        %v3017 = vunpack.c.l.b16 %v2964
        %v3018 = vunpack.c.h.b16 %v2964
        %v3019 = vpack.c.b16 %v2989, %v2987
        %v3020 = vpack.c.b16 %v2990, %v2988
        %v3021 = vpack.c.b16 %v2993, %v2991
        %v3022 = vpack.c.b16 %v2994, %v2992
        %v3023 = vpack.c.b16 %v2997, %v2995
        %v3024 = vpack.c.b16 %v2998, %v2996
        %v3025 = vpack.c.b16 %v3001, %v2999
        %v3026 = vpack.c.b16 %v3002, %v3000
        %v3027 = vpack.c.b16 %v3005, %v3003
        %v3028 = vpack.c.b16 %v3006, %v3004
        %v3029 = vpack.c.b16 %v3009, %v3007
        %v3030 = vpack.c.b16 %v3010, %v3008
        %v3031 = vpack.c.b16 %v3013, %v3011
        %v3032 = vpack.c.b16 %v3014, %v3012
        %v3033 = vpack.c.b16 %v3017, %v3015
        %v3034 = vpack.c.b16 %v3018, %v3016
        %3051 = vmatpush.bf16.msra.mxu0 %v3033
        %3052 = vmatpush.bf16.msra.mxu0 %v3031
        %3053 = vmatpush.bf16.msra.mxu0 %v3029
        %3054 = vmatpush.bf16.msra.mxu0 %v3027
        %3055 = vmatpush.bf16.msra.mxu0 %v3025
        %3056 = vmatpush.bf16.msra.mxu0 %v3023
        %3057 = vmatpush.bf16.msra.mxu0 %v3021
        %3058 = vmatpush.bf16.msra.mxu0 %v3019
        %3059 = vmatmul.bf16.gmra.mxu0 %v2948
        %v3060 = vpop.f32.mrf.mxu0
        %v3061 = vadd.f32 %v2967, %v3060
        %v3062 = vpop.f32.mrf.mxu0
        %v3063 = vadd.f32 %v2967, %v3062
        %3064 = vdwg.mxu0
        %3065 = vmatpush.bf16.msra.mxu0 %v3034
        %3066 = vmatpush.bf16.msra.mxu0 %v3032
        %3067 = vmatpush.bf16.msra.mxu0 %v3030
        %3068 = vmatpush.bf16.msra.mxu0 %v3028
        %3069 = vmatpush.bf16.msra.mxu0 %v3026
        %3070 = vmatpush.bf16.msra.mxu0 %v3024
        %3071 = vmatpush.bf16.msra.mxu0 %v3022
        %3072 = vmatpush.bf16.msra.mxu0 %v3020
        %3073 = vmatmul.bf16.gmra.mxu0 %v2948
        %v3074 = vpop.f32.mrf.mxu0
        %v3075 = vadd.f32 %v2968, %v3074
        %v3076 = vpop.f32.mrf.mxu0
        %v3077 = vadd.f32 %v2968, %v3076
        %3078 = vdwg.mxu0
        %3080 = vrot.lane.b32.xlu0 %v2944, 96
        %v3081 = vpop.permute.xlu0 %3080
        %3083 = vrot.lane.b32.xlu0 %v2944, 64
        %v3084 = vpop.permute.xlu0 %3083
        %3086 = vrot.lane.b32.xlu0 %v2944, 32
        %v3087 = vpop.permute.xlu0 %3086
        %v3089 = vrot.slane %v3084, 4
        %v3090 = vsel %vm1320, %v3089, %v2944
        %v3091 = vrot.slane %v2944, 4
        %v3092 = vsel %vm1320, %v3084, %v3091
        %v3094 = vunpack.c.l.s4 1983009808
        %v3095 = vunpack.c.0.s8 %v3094
        %v3096 = vperm.slane %v3090, %v3095
        %v3098 = vunpack.c.l.s4 1983009808
        %v3099 = vunpack.c.0.s8 %v3098
        %v3100 = vperm.slane %v3092, %v3099
        %v3101 = vrot.slane %v3087, 4
        %v3102 = vsel %vm1320, %v3101, %v3081
        %v3103 = vrot.slane %v3081, 4
        %v3104 = vsel %vm1320, %v3087, %v3103
        %v3106 = vunpack.c.l.s4 1983009808
        %v3107 = vunpack.c.0.s8 %v3106
        %v3108 = vperm.slane %v3102, %v3107
        %v3110 = vunpack.c.l.s4 1983009808
        %v3111 = vunpack.c.0.s8 %v3110
        %v3112 = vperm.slane %v3104, %v3111
        %v3113 = vrot.slane %v3108, 4
        %v3114 = vsel %vm1320, %v3113, %v3096
        %v3115 = vrot.slane %v3096, 4
        %v3116 = vsel %vm1320, %v3108, %v3115
        %v3118 = vunpack.c.l.s4 1934713408
        %v3119 = vunpack.c.0.s8 %v3118
        %v3120 = vperm.slane %v3114, %v3119
        %v3122 = vunpack.c.l.s4 1934713408
        %v3123 = vunpack.c.0.s8 %v3122
        %v3124 = vperm.slane %v3116, %v3123
        %v3125 = vrot.slane %v3112, 4
        %v3126 = vsel %vm1320, %v3125, %v3100
        %v3127 = vrot.slane %v3100, 4
        %v3128 = vsel %vm1320, %v3112, %v3127
        %v3130 = vunpack.c.l.s4 1934713408
        %v3131 = vunpack.c.0.s8 %v3130
        %v3132 = vperm.slane %v3126, %v3131
        %v3134 = vunpack.c.l.s4 1934713408
        %v3135 = vunpack.c.0.s8 %v3134
        %v3136 = vperm.slane %v3128, %v3135
        %v3137 = vrot.slane %v3120, 4
        %v3138 = vsel %vm1320, 0.0, %v3137
        %v3139 = vrot.slane %v3124, 4
        %v3140 = vsel %vm1320, 0.0, %v3139
        %v3141 = vrot.slane %v3132, 4
        %v3142 = vsel %vm1320, 0.0, %v3141
        %v3143 = vrot.slane %v3136, 4
        %v3144 = vsel %vm1320, 0.0, %v3143
        %v3145 = vsel %vm1320, %v3139, %v3120
        %v3147 = vunpack.c.l.s4 1983009808
        %v3148 = vunpack.c.0.s8 %v3147
        %v3149 = vperm.slane %v3145, %v3148
        %v3150 = vrot.slane %v3140, 4
        %v3151 = vsel %vm1320, %v3150, %v3138
        %v3153 = vunpack.c.l.s4 1983009808
        %v3154 = vunpack.c.0.s8 %v3153
        %v3155 = vperm.slane %v3151, %v3154
        %v3156 = vsel %vm1320, %v3143, %v3132
        %v3158 = vunpack.c.l.s4 1983009808
        %v3159 = vunpack.c.0.s8 %v3158
        %v3160 = vperm.slane %v3156, %v3159
        %v3161 = vrot.slane %v3144, 4
        %v3162 = vsel %vm1320, %v3161, %v3142
        %v3164 = vunpack.c.l.s4 1983009808
        %v3165 = vunpack.c.0.s8 %v3164
        %v3166 = vperm.slane %v3162, %v3165
        %v3167 = vrot.slane %v3155, 4
        %v3168 = vsel %vm1320, %v3167, %v3149
        %v3169 = vrot.slane %v3149, 4
        %v3170 = vsel %vm1320, %v3155, %v3169
        %v3172 = vunpack.c.l.s4 1934713408
        %v3173 = vunpack.c.0.s8 %v3172
        %v3174 = vperm.slane %v3168, %v3173
        %v3176 = vunpack.c.l.s4 1934713408
        %v3177 = vunpack.c.0.s8 %v3176
        %v3178 = vperm.slane %v3170, %v3177
        %v3179 = vrot.slane %v3166, 4
        %v3180 = vsel %vm1320, %v3179, %v3160
        %v3181 = vrot.slane %v3160, 4
        %v3182 = vsel %vm1320, %v3166, %v3181
        %v3184 = vunpack.c.l.s4 1934713408
        %v3185 = vunpack.c.0.s8 %v3184
        %v3186 = vperm.slane %v3180, %v3185
        %v3188 = vunpack.c.l.s4 1934713408
        %v3189 = vunpack.c.0.s8 %v3188
        %v3190 = vperm.slane %v3182, %v3189
        %v3191 = vrot.slane %v3186, 4
        %v3192 = vsel %vm1320, %v3191, %v3174
        %v3193 = vrot.slane %v3174, 4
        %v3194 = vsel %vm1320, %v3186, %v3193
        %v3195 = vrot.slane %v3190, 4
        %v3196 = vsel %vm1320, %v3195, %v3178
        %v3197 = vrot.slane %v3178, 4
        %v3198 = vsel %vm1320, %v3190, %v3197
        %v3199 = vpack.c.bf16 %v3192, %v3192
        %v3200 = vpack.c.bf16 %v3194, %v3194
        %v3201 = vpack.c.bf16 %v3196, %v3196
        %v3202 = vpack.c.bf16 %v3198, %v3198
        %3204 = vrot.lane.b32.xlu0 %v3061, 96
        %v3205 = vpop.permute.xlu0 %3204
        %3207 = vrot.lane.b32.xlu0 %v3061, 64
        %v3208 = vpop.permute.xlu0 %3207
        %3210 = vrot.lane.b32.xlu0 %v3061, 32
        %v3211 = vpop.permute.xlu0 %3210
        %v3213 = vrot.slane %v3208, 4
        %v3214 = vsel %vm1320, %v3213, %v3061
        %v3215 = vrot.slane %v3061, 4
        %v3216 = vsel %vm1320, %v3208, %v3215
        %v3218 = vunpack.c.l.s4 1983009808
        %v3219 = vunpack.c.0.s8 %v3218
        %v3220 = vperm.slane %v3214, %v3219
        %v3222 = vunpack.c.l.s4 1983009808
        %v3223 = vunpack.c.0.s8 %v3222
        %v3224 = vperm.slane %v3216, %v3223
        %v3225 = vrot.slane %v3211, 4
        %v3226 = vsel %vm1320, %v3225, %v3205
        %v3227 = vrot.slane %v3205, 4
        %v3228 = vsel %vm1320, %v3211, %v3227
        %v3230 = vunpack.c.l.s4 1983009808
        %v3231 = vunpack.c.0.s8 %v3230
        %v3232 = vperm.slane %v3226, %v3231
        %v3234 = vunpack.c.l.s4 1983009808
        %v3235 = vunpack.c.0.s8 %v3234
        %v3236 = vperm.slane %v3228, %v3235
        %v3237 = vrot.slane %v3232, 4
        %v3238 = vsel %vm1320, %v3237, %v3220
        %v3239 = vrot.slane %v3220, 4
        %v3240 = vsel %vm1320, %v3232, %v3239
        %v3242 = vunpack.c.l.s4 1934713408
        %v3243 = vunpack.c.0.s8 %v3242
        %v3244 = vperm.slane %v3238, %v3243
        %v3246 = vunpack.c.l.s4 1934713408
        %v3247 = vunpack.c.0.s8 %v3246
        %v3248 = vperm.slane %v3240, %v3247
        %v3249 = vrot.slane %v3236, 4
        %v3250 = vsel %vm1320, %v3249, %v3224
        %v3251 = vrot.slane %v3224, 4
        %v3252 = vsel %vm1320, %v3236, %v3251
        %v3254 = vunpack.c.l.s4 1934713408
        %v3255 = vunpack.c.0.s8 %v3254
        %v3256 = vperm.slane %v3250, %v3255
        %v3258 = vunpack.c.l.s4 1934713408
        %v3259 = vunpack.c.0.s8 %v3258
        %v3260 = vperm.slane %v3252, %v3259
        %v3261 = vrot.slane %v3244, 4
        %v3262 = vsel %vm1320, 0.0, %v3261
        %v3263 = vrot.slane %v3248, 4
        %v3264 = vsel %vm1320, 0.0, %v3263
        %v3265 = vrot.slane %v3256, 4
        %v3266 = vsel %vm1320, 0.0, %v3265
        %v3267 = vrot.slane %v3260, 4
        %v3268 = vsel %vm1320, 0.0, %v3267
        %v3269 = vsel %vm1320, %v3263, %v3244
        %v3271 = vunpack.c.l.s4 1983009808
        %v3272 = vunpack.c.0.s8 %v3271
        %v3273 = vperm.slane %v3269, %v3272
        %v3274 = vrot.slane %v3264, 4
        %v3275 = vsel %vm1320, %v3274, %v3262
        %v3277 = vunpack.c.l.s4 1983009808
        %v3278 = vunpack.c.0.s8 %v3277
        %v3279 = vperm.slane %v3275, %v3278
        %v3280 = vsel %vm1320, %v3267, %v3256
        %v3282 = vunpack.c.l.s4 1983009808
        %v3283 = vunpack.c.0.s8 %v3282
        %v3284 = vperm.slane %v3280, %v3283
        %v3285 = vrot.slane %v3268, 4
        %v3286 = vsel %vm1320, %v3285, %v3266
        %v3288 = vunpack.c.l.s4 1983009808
        %v3289 = vunpack.c.0.s8 %v3288
        %v3290 = vperm.slane %v3286, %v3289
        %v3291 = vrot.slane %v3279, 4
        %v3292 = vsel %vm1320, %v3291, %v3273
        %v3293 = vrot.slane %v3273, 4
        %v3294 = vsel %vm1320, %v3279, %v3293
        %v3296 = vunpack.c.l.s4 1934713408
        %v3297 = vunpack.c.0.s8 %v3296
        %v3298 = vperm.slane %v3292, %v3297
        %v3300 = vunpack.c.l.s4 1934713408
        %v3301 = vunpack.c.0.s8 %v3300
        %v3302 = vperm.slane %v3294, %v3301
        %v3303 = vrot.slane %v3290, 4
        %v3304 = vsel %vm1320, %v3303, %v3284
        %v3305 = vrot.slane %v3284, 4
        %v3306 = vsel %vm1320, %v3290, %v3305
        %v3308 = vunpack.c.l.s4 1934713408
        %v3309 = vunpack.c.0.s8 %v3308
        %v3310 = vperm.slane %v3304, %v3309
        %v3312 = vunpack.c.l.s4 1934713408
        %v3313 = vunpack.c.0.s8 %v3312
        %v3314 = vperm.slane %v3306, %v3313
        %v3315 = vrot.slane %v3310, 4
        %v3316 = vsel %vm1320, %v3315, %v3298
        %v3317 = vrot.slane %v3298, 4
        %v3318 = vsel %vm1320, %v3310, %v3317
        %v3319 = vrot.slane %v3314, 4
        %v3320 = vsel %vm1320, %v3319, %v3302
        %v3321 = vrot.slane %v3302, 4
        %v3322 = vsel %vm1320, %v3314, %v3321
        %v3323 = vpack.c.bf16 %v3316, %v3316
        %v3324 = vpack.c.bf16 %v3318, %v3318
        %v3325 = vpack.c.bf16 %v3320, %v3320
        %v3326 = vpack.c.bf16 %v3322, %v3322
        %3328 = vrot.lane.b32.xlu0 %v3075, 96
        %v3329 = vpop.permute.xlu0 %3328
        %3331 = vrot.lane.b32.xlu0 %v3075, 64
        %v3332 = vpop.permute.xlu0 %3331
        %3334 = vrot.lane.b32.xlu0 %v3075, 32
        %v3335 = vpop.permute.xlu0 %3334
        %v3337 = vrot.slane %v3332, 4
        %v3338 = vsel %vm1320, %v3337, %v3075
        %v3339 = vrot.slane %v3075, 4
        %v3340 = vsel %vm1320, %v3332, %v3339
        %v3342 = vunpack.c.l.s4 1983009808
        %v3343 = vunpack.c.0.s8 %v3342
        %v3344 = vperm.slane %v3338, %v3343
        %v3346 = vunpack.c.l.s4 1983009808
        %v3347 = vunpack.c.0.s8 %v3346
        %v3348 = vperm.slane %v3340, %v3347
        %v3349 = vrot.slane %v3335, 4
        %v3350 = vsel %vm1320, %v3349, %v3329
        %v3351 = vrot.slane %v3329, 4
        %v3352 = vsel %vm1320, %v3335, %v3351
        %v3354 = vunpack.c.l.s4 1983009808
        %v3355 = vunpack.c.0.s8 %v3354
        %v3356 = vperm.slane %v3350, %v3355
        %v3358 = vunpack.c.l.s4 1983009808
        %v3359 = vunpack.c.0.s8 %v3358
        %v3360 = vperm.slane %v3352, %v3359
        %v3361 = vrot.slane %v3356, 4
        %v3362 = vsel %vm1320, %v3361, %v3344
        %v3363 = vrot.slane %v3344, 4
        %v3364 = vsel %vm1320, %v3356, %v3363
        %v3366 = vunpack.c.l.s4 1934713408
        %v3367 = vunpack.c.0.s8 %v3366
        %v3368 = vperm.slane %v3362, %v3367
        %v3370 = vunpack.c.l.s4 1934713408
        %v3371 = vunpack.c.0.s8 %v3370
        %v3372 = vperm.slane %v3364, %v3371
        %v3373 = vrot.slane %v3360, 4
        %v3374 = vsel %vm1320, %v3373, %v3348
        %v3375 = vrot.slane %v3348, 4
        %v3376 = vsel %vm1320, %v3360, %v3375
        %v3378 = vunpack.c.l.s4 1934713408
        %v3379 = vunpack.c.0.s8 %v3378
        %v3380 = vperm.slane %v3374, %v3379
        %v3382 = vunpack.c.l.s4 1934713408
        %v3383 = vunpack.c.0.s8 %v3382
        %v3384 = vperm.slane %v3376, %v3383
        %v3385 = vrot.slane %v3368, 4
        %v3386 = vsel %vm1320, 0.0, %v3385
        %v3387 = vrot.slane %v3372, 4
        %v3388 = vsel %vm1320, 0.0, %v3387
        %v3389 = vrot.slane %v3380, 4
        %v3390 = vsel %vm1320, 0.0, %v3389
        %v3391 = vrot.slane %v3384, 4
        %v3392 = vsel %vm1320, 0.0, %v3391
        %v3393 = vsel %vm1320, %v3387, %v3368
        %v3395 = vunpack.c.l.s4 1983009808
        %v3396 = vunpack.c.0.s8 %v3395
        %v3397 = vperm.slane %v3393, %v3396
        %v3398 = vrot.slane %v3388, 4
        %v3399 = vsel %vm1320, %v3398, %v3386
        %v3401 = vunpack.c.l.s4 1983009808
        %v3402 = vunpack.c.0.s8 %v3401
        %v3403 = vperm.slane %v3399, %v3402
        %v3404 = vsel %vm1320, %v3391, %v3380
        %v3406 = vunpack.c.l.s4 1983009808
        %v3407 = vunpack.c.0.s8 %v3406
        %v3408 = vperm.slane %v3404, %v3407
        %v3409 = vrot.slane %v3392, 4
        %v3410 = vsel %vm1320, %v3409, %v3390
        %v3412 = vunpack.c.l.s4 1983009808
        %v3413 = vunpack.c.0.s8 %v3412
        %v3414 = vperm.slane %v3410, %v3413
        %v3415 = vrot.slane %v3403, 4
        %v3416 = vsel %vm1320, %v3415, %v3397
        %v3417 = vrot.slane %v3397, 4
        %v3418 = vsel %vm1320, %v3403, %v3417
        %v3420 = vunpack.c.l.s4 1934713408
        %v3421 = vunpack.c.0.s8 %v3420
        %v3422 = vperm.slane %v3416, %v3421
        %v3424 = vunpack.c.l.s4 1934713408
        %v3425 = vunpack.c.0.s8 %v3424
        %v3426 = vperm.slane %v3418, %v3425
        %v3427 = vrot.slane %v3414, 4
        %v3428 = vsel %vm1320, %v3427, %v3408
        %v3429 = vrot.slane %v3408, 4
        %v3430 = vsel %vm1320, %v3414, %v3429
        %v3432 = vunpack.c.l.s4 1934713408
        %v3433 = vunpack.c.0.s8 %v3432
        %v3434 = vperm.slane %v3428, %v3433
        %v3436 = vunpack.c.l.s4 1934713408
        %v3437 = vunpack.c.0.s8 %v3436
        %v3438 = vperm.slane %v3430, %v3437
        %v3439 = vrot.slane %v3434, 4
        %v3440 = vsel %vm1320, %v3439, %v3422
        %v3441 = vrot.slane %v3422, 4
        %v3442 = vsel %vm1320, %v3434, %v3441
        %v3443 = vrot.slane %v3438, 4
        %v3444 = vsel %vm1320, %v3443, %v3426
        %v3445 = vrot.slane %v3426, 4
        %v3446 = vsel %vm1320, %v3438, %v3445
        %v3447 = vpack.c.bf16 %v3440, %v3440
        %v3448 = vpack.c.bf16 %v3442, %v3442
        %v3449 = vpack.c.bf16 %v3444, %v3444
        %v3450 = vpack.c.bf16 %v3446, %v3446
        %v3452 = vsel %vm1682, %v3199, 0
        %v3455 = vsel %vm1682, %v3323, 0
        %3457 = vmatpush.bf16.xpose.msra.mxu0 0
        %3458 = vmatpush.bf16.xpose.msra.mxu0 0
        %3459 = vmatpush.bf16.xpose.msra.mxu0 0
        %3460 = vmatpush.bf16.xpose.msra.mxu0 0
        %3461 = vmatpush.bf16.xpose.msra.mxu0 0
        %3462 = vmatpush.bf16.xpose.msra.mxu0 0
        %3463 = vmatpush.bf16.xpose.msra.mxu0 0
        %3464 = vmatpush.bf16.xpose.msra.mxu0 %v3455
        %3465 = vmatmul.bf16.gmra.mxu0 %v3452
        %v3466 = vpop.f32.mrf.mxu0
        %v3467 = vadd.f32 0.0, %v3466
        %v3468 = vpop.f32.mrf.mxu0
        %3469 = vdwg.mxu0
        %v3471 = vsel %vm1682, %v3200, 0
        %v3474 = vsel %vm1682, %v3324, 0
        %3476 = vmatpush.bf16.xpose.msra.mxu0 0
        %3477 = vmatpush.bf16.xpose.msra.mxu0 0
        %3478 = vmatpush.bf16.xpose.msra.mxu0 0
        %3479 = vmatpush.bf16.xpose.msra.mxu0 0
        %3480 = vmatpush.bf16.xpose.msra.mxu0 0
        %3481 = vmatpush.bf16.xpose.msra.mxu0 0
        %3482 = vmatpush.bf16.xpose.msra.mxu0 0
        %3483 = vmatpush.bf16.xpose.msra.mxu0 %v3474
        %3484 = vmatmul.bf16.gmra.mxu0 %v3471
        %v3485 = vpop.f32.mrf.mxu0
        %v3486 = vadd.f32 0.0, %v3485
        %v3487 = vpop.f32.mrf.mxu0
        %3488 = vdwg.mxu0
        %v3490 = vsel %vm1682, %v3201, 0
        %v3493 = vsel %vm1682, %v3325, 0
        %3495 = vmatpush.bf16.xpose.msra.mxu0 0
        %3496 = vmatpush.bf16.xpose.msra.mxu0 0
        %3497 = vmatpush.bf16.xpose.msra.mxu0 0
        %3498 = vmatpush.bf16.xpose.msra.mxu0 0
        %3499 = vmatpush.bf16.xpose.msra.mxu0 0
        %3500 = vmatpush.bf16.xpose.msra.mxu0 0
        %3501 = vmatpush.bf16.xpose.msra.mxu0 0
        %3502 = vmatpush.bf16.xpose.msra.mxu0 %v3493
        %3503 = vmatmul.bf16.gmra.mxu0 %v3490
        %v3504 = vpop.f32.mrf.mxu0
        %v3505 = vadd.f32 0.0, %v3504
        %v3506 = vpop.f32.mrf.mxu0
        %3507 = vdwg.mxu0
        %v3509 = vsel %vm1682, %v3202, 0
        %v3512 = vsel %vm1682, %v3326, 0
        %3514 = vmatpush.bf16.xpose.msra.mxu0 0
        %3515 = vmatpush.bf16.xpose.msra.mxu0 0
        %3516 = vmatpush.bf16.xpose.msra.mxu0 0
        %3517 = vmatpush.bf16.xpose.msra.mxu0 0
        %3518 = vmatpush.bf16.xpose.msra.mxu0 0
        %3519 = vmatpush.bf16.xpose.msra.mxu0 0
        %3520 = vmatpush.bf16.xpose.msra.mxu0 0
        %3521 = vmatpush.bf16.xpose.msra.mxu0 %v3512
        %3522 = vmatmul.bf16.gmra.mxu0 %v3509
        %v3523 = vpop.f32.mrf.mxu0
        %v3524 = vadd.f32 0.0, %v3523
        %v3525 = vpop.f32.mrf.mxu0
        %3526 = vdwg.mxu0
        %v3527 = vmul.f32 %v3467, 0.17677669
        %v3528 = vmul.f32 %v3486, 0.17677669
        %v3529 = vmul.f32 %v3505, 0.17677669
        %v3530 = vmul.f32 %v3524, 0.17677669
        %v3531 = vsel %vm1096, 1, 0
        %vm3532 = vcmp.eq.s32.totalorder %v3531, 1
        %v3533 = vsel %vm3532, %v3527, -1e+30
        %v3534 = vsel %vm3532, %v3528, -1e+30
        %v3535 = vsel %vm3532, %v3529, -1e+30
        %v3536 = vsel %vm3532, %v3530, -1e+30
        %v3537 = vsel %vm1769, %v3533, -inf
        %3538 = vmax.xlane.f32.xlu0 %v3537
        %v3539 = vpop.xlane.xlu0 %3538
        %v3540 = vsel %vm1769, %v3534, -inf
        %3541 = vmax.xlane.f32.xlu0 %v3540
        %v3542 = vpop.xlane.xlu0 %3541
        %v3543 = vsel %vm1769, %v3535, -inf
        %3544 = vmax.xlane.f32.xlu0 %v3543
        %v3545 = vpop.xlane.xlu0 %3544
        %v3546 = vsel %vm1769, %v3536, -inf
        %3547 = vmax.xlane.f32.xlu0 %v3546
        %v3548 = vpop.xlane.xlu0 %3547
        %v3549 = vsub.f32 %v3533, %v3539
        %v3550 = vsub.f32 %v3534, %v3542
        %v3551 = vsub.f32 %v3535, %v3545
        %v3552 = vsub.f32 %v3536, %v3548
        %v3553 = vmul.f32 %v3549, 1.442695
        %v3554 = vpow.pop %v3553
        %v3555 = vmul.f32 %v3550, 1.442695
        %v3556 = vpow.pop %v3555
        %v3557 = vmul.f32 %v3551, 1.442695
        %v3558 = vpow.pop %v3557
        %v3559 = vmul.f32 %v3552, 1.442695
        %v3560 = vpow.pop %v3559
        %v3561 = vsel %vm1769, %v3554, 0.0
        %3562 = vadd.xlane.f32.xlu0 %v3561
        %v3563 = vpop.xlane.xlu0 %3562
        %v3564 = vsel %vm1769, %v3556, 0.0
        %3565 = vadd.xlane.f32.xlu0 %v3564
        %v3566 = vpop.xlane.xlu0 %3565
        %v3567 = vsel %vm1769, %v3558, 0.0
        %3568 = vadd.xlane.f32.xlu0 %v3567
        %v3569 = vpop.xlane.xlu0 %3568
        %v3570 = vsel %vm1769, %v3560, 0.0
        %3571 = vadd.xlane.f32.xlu0 %v3570
        %v3572 = vpop.xlane.xlu0 %3571
        %v3573 = vrcp.pop %v3563
        %v3574 = vrcp.pop %v3566
        %v3575 = vrcp.pop %v3569
        %v3576 = vrcp.pop %v3572
        %v3577 = vmul.f32 %v3554, %v3573
        %v3578 = vmul.f32 %v3556, %v3574
        %v3579 = vmul.f32 %v3558, %v3575
        %v3580 = vmul.f32 %v3560, %v3576
        %v3581 = vpack.c.bf16 %v3577, %v3577
        %v3582 = vpack.c.bf16 %v3578, %v3578
        %v3583 = vpack.c.bf16 %v3579, %v3579
        %v3584 = vpack.c.bf16 %v3580, %v3580
        %v3586 = vsel %vm1769, %v3581, 0
        %v3589 = vsel %vm1821, %v3447, 0
        %3591 = vmatpush.bf16.msra.mxu0 0
        %3592 = vmatpush.bf16.msra.mxu0 0
        %3593 = vmatpush.bf16.msra.mxu0 0
        %3594 = vmatpush.bf16.msra.mxu0 0
        %3595 = vmatpush.bf16.msra.mxu0 0
        %3596 = vmatpush.bf16.msra.mxu0 0
        %3597 = vmatpush.bf16.msra.mxu0 0
        %3598 = vmatpush.bf16.msra.mxu0 %v3589
        %3599 = vmatmul.bf16.gmra.mxu0 %v3586
        %v3600 = vpop.f32.mrf.mxu0
        %v3601 = vadd.f32 0.0, %v3600
        %v3602 = vpop.f32.mrf.mxu0
        %3603 = vdwg.mxu0
        %v3605 = vsel %vm1769, %v3582, 0
        %v3608 = vsel %vm1821, %v3448, 0
        %3610 = vmatpush.bf16.msra.mxu0 0
        %3611 = vmatpush.bf16.msra.mxu0 0
        %3612 = vmatpush.bf16.msra.mxu0 0
        %3613 = vmatpush.bf16.msra.mxu0 0
        %3614 = vmatpush.bf16.msra.mxu0 0
        %3615 = vmatpush.bf16.msra.mxu0 0
        %3616 = vmatpush.bf16.msra.mxu0 0
        %3617 = vmatpush.bf16.msra.mxu0 %v3608
        %3618 = vmatmul.bf16.gmra.mxu0 %v3605
        %v3619 = vpop.f32.mrf.mxu0
        %v3620 = vadd.f32 0.0, %v3619
        %v3621 = vpop.f32.mrf.mxu0
        %3622 = vdwg.mxu0
        %v3624 = vsel %vm1769, %v3583, 0
        %v3627 = vsel %vm1821, %v3449, 0
        %3629 = vmatpush.bf16.msra.mxu0 0
        %3630 = vmatpush.bf16.msra.mxu0 0
        %3631 = vmatpush.bf16.msra.mxu0 0
        %3632 = vmatpush.bf16.msra.mxu0 0
        %3633 = vmatpush.bf16.msra.mxu0 0
        %3634 = vmatpush.bf16.msra.mxu0 0
        %3635 = vmatpush.bf16.msra.mxu0 0
        %3636 = vmatpush.bf16.msra.mxu0 %v3627
        %3637 = vmatmul.bf16.gmra.mxu0 %v3624
        %v3638 = vpop.f32.mrf.mxu0
        %v3639 = vadd.f32 0.0, %v3638
        %v3640 = vpop.f32.mrf.mxu0
        %3641 = vdwg.mxu0
        %v3643 = vsel %vm1769, %v3584, 0
        %v3646 = vsel %vm1821, %v3450, 0
        %3648 = vmatpush.bf16.msra.mxu0 0
        %3649 = vmatpush.bf16.msra.mxu0 0
        %3650 = vmatpush.bf16.msra.mxu0 0
        %3651 = vmatpush.bf16.msra.mxu0 0
        %3652 = vmatpush.bf16.msra.mxu0 0
        %3653 = vmatpush.bf16.msra.mxu0 0
        %3654 = vmatpush.bf16.msra.mxu0 0
        %3655 = vmatpush.bf16.msra.mxu0 %v3646
        %3656 = vmatmul.bf16.gmra.mxu0 %v3643
        %v3657 = vpop.f32.mrf.mxu0
        %v3658 = vadd.f32 0.0, %v3657
        %v3659 = vpop.f32.mrf.mxu0
        %3660 = vdwg.mxu0
        %v3661 = vrot.slane %v3639, 4
        %v3662 = vsel %vm1320, %v3661, %v3601
        %v3663 = vrot.slane %v3601, 4
        %v3664 = vsel %vm1320, %v3639, %v3663
        %v3666 = vunpack.c.l.s4 1983009808
        %v3667 = vunpack.c.0.s8 %v3666
        %v3668 = vperm.slane %v3662, %v3667
        %v3670 = vunpack.c.l.s4 1983009808
        %v3671 = vunpack.c.0.s8 %v3670
        %v3672 = vperm.slane %v3664, %v3671
        %v3673 = vrot.slane %v3658, 4
        %v3674 = vsel %vm1320, %v3673, %v3620
        %v3675 = vrot.slane %v3620, 4
        %v3676 = vsel %vm1320, %v3658, %v3675
        %v3678 = vunpack.c.l.s4 1983009808
        %v3679 = vunpack.c.0.s8 %v3678
        %v3680 = vperm.slane %v3674, %v3679
        %v3682 = vunpack.c.l.s4 1983009808
        %v3683 = vunpack.c.0.s8 %v3682
        %v3684 = vperm.slane %v3676, %v3683
        %v3685 = vrot.slane %v3680, 4
        %v3686 = vsel %vm1320, %v3685, %v3668
        %v3687 = vrot.slane %v3668, 4
        %v3688 = vsel %vm1320, %v3680, %v3687
        %v3690 = vunpack.c.l.s4 1934713408
        %v3691 = vunpack.c.0.s8 %v3690
        %v3692 = vperm.slane %v3686, %v3691
        %v3694 = vunpack.c.l.s4 1934713408
        %v3695 = vunpack.c.0.s8 %v3694
        %v3696 = vperm.slane %v3688, %v3695
        %v3697 = vrot.slane %v3684, 4
        %v3698 = vsel %vm1320, %v3697, %v3672
        %v3699 = vrot.slane %v3672, 4
        %v3700 = vsel %vm1320, %v3684, %v3699
        %v3702 = vunpack.c.l.s4 1934713408
        %v3703 = vunpack.c.0.s8 %v3702
        %v3704 = vperm.slane %v3698, %v3703
        %v3706 = vunpack.c.l.s4 1934713408
        %v3707 = vunpack.c.0.s8 %v3706
        %v3708 = vperm.slane %v3700, %v3707
        %v3709 = vrot.slane %v3692, 4
        %v3710 = vsel %vm1320, 0.0, %v3709
        %v3711 = vrot.slane %v3696, 4
        %v3712 = vsel %vm1320, 0.0, %v3711
        %v3713 = vrot.slane %v3704, 4
        %v3714 = vsel %vm1320, 0.0, %v3713
        %v3715 = vrot.slane %v3708, 4
        %v3716 = vsel %vm1320, 0.0, %v3715
        %v3717 = vsel %vm1320, %v3711, %v3692
        %v3719 = vunpack.c.l.s4 1983009808
        %v3720 = vunpack.c.0.s8 %v3719
        %v3721 = vperm.slane %v3717, %v3720
        %v3722 = vrot.slane %v3712, 4
        %v3723 = vsel %vm1320, %v3722, %v3710
        %v3725 = vunpack.c.l.s4 1983009808
        %v3726 = vunpack.c.0.s8 %v3725
        %v3727 = vperm.slane %v3723, %v3726
        %v3728 = vsel %vm1320, %v3715, %v3704
        %v3730 = vunpack.c.l.s4 1983009808
        %v3731 = vunpack.c.0.s8 %v3730
        %v3732 = vperm.slane %v3728, %v3731
        %v3733 = vrot.slane %v3716, 4
        %v3734 = vsel %vm1320, %v3733, %v3714
        %v3736 = vunpack.c.l.s4 1983009808
        %v3737 = vunpack.c.0.s8 %v3736
        %v3738 = vperm.slane %v3734, %v3737
        %v3739 = vrot.slane %v3727, 4
        %v3740 = vsel %vm1320, %v3739, %v3721
        %v3741 = vrot.slane %v3721, 4
        %v3742 = vsel %vm1320, %v3727, %v3741
        %v3744 = vunpack.c.l.s4 1934713408
        %v3745 = vunpack.c.0.s8 %v3744
        %v3746 = vperm.slane %v3740, %v3745
        %v3748 = vunpack.c.l.s4 1934713408
        %v3749 = vunpack.c.0.s8 %v3748
        %v3750 = vperm.slane %v3742, %v3749
        %v3751 = vrot.slane %v3738, 4
        %v3752 = vsel %vm1320, %v3751, %v3732
        %v3753 = vrot.slane %v3732, 4
        %v3754 = vsel %vm1320, %v3738, %v3753
        %v3756 = vunpack.c.l.s4 1934713408
        %v3757 = vunpack.c.0.s8 %v3756
        %v3758 = vperm.slane %v3752, %v3757
        %v3760 = vunpack.c.l.s4 1934713408
        %v3761 = vunpack.c.0.s8 %v3760
        %v3762 = vperm.slane %v3754, %v3761
        %v3763 = vrot.slane %v3758, 4
        %v3764 = vsel %vm1320, %v3763, %v3746
        %v3765 = vrot.slane %v3746, 4
        %v3766 = vsel %vm1320, %v3758, %v3765
        %v3767 = vrot.slane %v3762, 4
        %v3768 = vsel %vm1320, %v3767, %v3750
        %v3769 = vrot.slane %v3750, 4
        %v3770 = vsel %vm1320, %v3762, %v3769
        %3772 = vrot.lane.b32.xlu0 %v3766, 32
        %v3773 = vpop.permute.xlu0 %3772
        %3776 = vrot.lane.b32.xlu0 %v3768, 64
        %v3777 = vpop.permute.xlu0 %3776
        %3780 = vrot.lane.b32.xlu0 %v3770, 96
        %v3781 = vpop.permute.xlu0 %3780
        %v3783 = vsel %vm1682, %v3764, %v3773
        %v3784 = vsel %vm2018, %v3783, %v3777
        %v3785 = vsel %vm2020, %v3784, %v3781
        %3787 = vrot.lane.b32.xlu0 %v2946, 96
        %v3788 = vpop.permute.xlu0 %3787
        %3790 = vrot.lane.b32.xlu0 %v2946, 64
        %v3791 = vpop.permute.xlu0 %3790
        %3793 = vrot.lane.b32.xlu0 %v2946, 32
        %v3794 = vpop.permute.xlu0 %3793
        %v3796 = vrot.slane %v3791, 4
        %v3797 = vsel %vm1320, %v3796, %v2946
        %v3798 = vrot.slane %v2946, 4
        %v3799 = vsel %vm1320, %v3791, %v3798
        %v3801 = vunpack.c.l.s4 1983009808
        %v3802 = vunpack.c.0.s8 %v3801
        %v3803 = vperm.slane %v3797, %v3802
        %v3805 = vunpack.c.l.s4 1983009808
        %v3806 = vunpack.c.0.s8 %v3805
        %v3807 = vperm.slane %v3799, %v3806
        %v3808 = vrot.slane %v3794, 4
        %v3809 = vsel %vm1320, %v3808, %v3788
        %v3810 = vrot.slane %v3788, 4
        %v3811 = vsel %vm1320, %v3794, %v3810
        %v3813 = vunpack.c.l.s4 1983009808
        %v3814 = vunpack.c.0.s8 %v3813
        %v3815 = vperm.slane %v3809, %v3814
        %v3817 = vunpack.c.l.s4 1983009808
        %v3818 = vunpack.c.0.s8 %v3817
        %v3819 = vperm.slane %v3811, %v3818
        %v3820 = vrot.slane %v3815, 4
        %v3821 = vsel %vm1320, %v3820, %v3803
        %v3822 = vrot.slane %v3803, 4
        %v3823 = vsel %vm1320, %v3815, %v3822
        %v3825 = vunpack.c.l.s4 1934713408
        %v3826 = vunpack.c.0.s8 %v3825
        %v3827 = vperm.slane %v3821, %v3826
        %v3829 = vunpack.c.l.s4 1934713408
        %v3830 = vunpack.c.0.s8 %v3829
        %v3831 = vperm.slane %v3823, %v3830
        %v3832 = vrot.slane %v3819, 4
        %v3833 = vsel %vm1320, %v3832, %v3807
        %v3834 = vrot.slane %v3807, 4
        %v3835 = vsel %vm1320, %v3819, %v3834
        %v3837 = vunpack.c.l.s4 1934713408
        %v3838 = vunpack.c.0.s8 %v3837
        %v3839 = vperm.slane %v3833, %v3838
        %v3841 = vunpack.c.l.s4 1934713408
        %v3842 = vunpack.c.0.s8 %v3841
        %v3843 = vperm.slane %v3835, %v3842
        %v3844 = vrot.slane %v3827, 4
        %v3845 = vsel %vm1320, 0.0, %v3844
        %v3846 = vrot.slane %v3831, 4
        %v3847 = vsel %vm1320, 0.0, %v3846
        %v3848 = vrot.slane %v3839, 4
        %v3849 = vsel %vm1320, 0.0, %v3848
        %v3850 = vrot.slane %v3843, 4
        %v3851 = vsel %vm1320, 0.0, %v3850
        %v3852 = vsel %vm1320, %v3846, %v3827
        %v3854 = vunpack.c.l.s4 1983009808
        %v3855 = vunpack.c.0.s8 %v3854
        %v3856 = vperm.slane %v3852, %v3855
        %v3857 = vrot.slane %v3847, 4
        %v3858 = vsel %vm1320, %v3857, %v3845
        %v3860 = vunpack.c.l.s4 1983009808
        %v3861 = vunpack.c.0.s8 %v3860
        %v3862 = vperm.slane %v3858, %v3861
        %v3863 = vsel %vm1320, %v3850, %v3839
        %v3865 = vunpack.c.l.s4 1983009808
        %v3866 = vunpack.c.0.s8 %v3865
        %v3867 = vperm.slane %v3863, %v3866
        %v3868 = vrot.slane %v3851, 4
        %v3869 = vsel %vm1320, %v3868, %v3849
        %v3871 = vunpack.c.l.s4 1983009808
        %v3872 = vunpack.c.0.s8 %v3871
        %v3873 = vperm.slane %v3869, %v3872
        %v3874 = vrot.slane %v3862, 4
        %v3875 = vsel %vm1320, %v3874, %v3856
        %v3876 = vrot.slane %v3856, 4
        %v3877 = vsel %vm1320, %v3862, %v3876
        %v3879 = vunpack.c.l.s4 1934713408
        %v3880 = vunpack.c.0.s8 %v3879
        %v3881 = vperm.slane %v3875, %v3880
        %v3883 = vunpack.c.l.s4 1934713408
        %v3884 = vunpack.c.0.s8 %v3883
        %v3885 = vperm.slane %v3877, %v3884
        %v3886 = vrot.slane %v3873, 4
        %v3887 = vsel %vm1320, %v3886, %v3867
        %v3888 = vrot.slane %v3867, 4
        %v3889 = vsel %vm1320, %v3873, %v3888
        %v3891 = vunpack.c.l.s4 1934713408
        %v3892 = vunpack.c.0.s8 %v3891
        %v3893 = vperm.slane %v3887, %v3892
        %v3895 = vunpack.c.l.s4 1934713408
        %v3896 = vunpack.c.0.s8 %v3895
        %v3897 = vperm.slane %v3889, %v3896
        %v3898 = vrot.slane %v3893, 4
        %v3899 = vsel %vm1320, %v3898, %v3881
        %v3900 = vrot.slane %v3881, 4
        %v3901 = vsel %vm1320, %v3893, %v3900
        %v3902 = vrot.slane %v3897, 4
        %v3903 = vsel %vm1320, %v3902, %v3885
        %v3904 = vrot.slane %v3885, 4
        %v3905 = vsel %vm1320, %v3897, %v3904
        %v3906 = vpack.c.bf16 %v3899, %v3899
        %v3907 = vpack.c.bf16 %v3901, %v3901
        %v3908 = vpack.c.bf16 %v3903, %v3903
        %v3909 = vpack.c.bf16 %v3905, %v3905
        %3911 = vrot.lane.b32.xlu0 %v3063, 96
        %v3912 = vpop.permute.xlu0 %3911
        %3914 = vrot.lane.b32.xlu0 %v3063, 64
        %v3915 = vpop.permute.xlu0 %3914
        %3917 = vrot.lane.b32.xlu0 %v3063, 32
        %v3918 = vpop.permute.xlu0 %3917
        %v3920 = vrot.slane %v3915, 4
        %v3921 = vsel %vm1320, %v3920, %v3063
        %v3922 = vrot.slane %v3063, 4
        %v3923 = vsel %vm1320, %v3915, %v3922
        %v3925 = vunpack.c.l.s4 1983009808
        %v3926 = vunpack.c.0.s8 %v3925
        %v3927 = vperm.slane %v3921, %v3926
        %v3929 = vunpack.c.l.s4 1983009808
        %v3930 = vunpack.c.0.s8 %v3929
        %v3931 = vperm.slane %v3923, %v3930
        %v3932 = vrot.slane %v3918, 4
        %v3933 = vsel %vm1320, %v3932, %v3912
        %v3934 = vrot.slane %v3912, 4
        %v3935 = vsel %vm1320, %v3918, %v3934
        %v3937 = vunpack.c.l.s4 1983009808
        %v3938 = vunpack.c.0.s8 %v3937
        %v3939 = vperm.slane %v3933, %v3938
        %v3941 = vunpack.c.l.s4 1983009808
        %v3942 = vunpack.c.0.s8 %v3941
        %v3943 = vperm.slane %v3935, %v3942
        %v3944 = vrot.slane %v3939, 4
        %v3945 = vsel %vm1320, %v3944, %v3927
        %v3946 = vrot.slane %v3927, 4
        %v3947 = vsel %vm1320, %v3939, %v3946
        %v3949 = vunpack.c.l.s4 1934713408
        %v3950 = vunpack.c.0.s8 %v3949
        %v3951 = vperm.slane %v3945, %v3950
        %v3953 = vunpack.c.l.s4 1934713408
        %v3954 = vunpack.c.0.s8 %v3953
        %v3955 = vperm.slane %v3947, %v3954
        %v3956 = vrot.slane %v3943, 4
        %v3957 = vsel %vm1320, %v3956, %v3931
        %v3958 = vrot.slane %v3931, 4
        %v3959 = vsel %vm1320, %v3943, %v3958
        %v3961 = vunpack.c.l.s4 1934713408
        %v3962 = vunpack.c.0.s8 %v3961
        %v3963 = vperm.slane %v3957, %v3962
        %v3965 = vunpack.c.l.s4 1934713408
        %v3966 = vunpack.c.0.s8 %v3965
        %v3967 = vperm.slane %v3959, %v3966
        %v3968 = vrot.slane %v3951, 4
        %v3969 = vsel %vm1320, 0.0, %v3968
        %v3970 = vrot.slane %v3955, 4
        %v3971 = vsel %vm1320, 0.0, %v3970
        %v3972 = vrot.slane %v3963, 4
        %v3973 = vsel %vm1320, 0.0, %v3972
        %v3974 = vrot.slane %v3967, 4
        %v3975 = vsel %vm1320, 0.0, %v3974
        %v3976 = vsel %vm1320, %v3970, %v3951
        %v3978 = vunpack.c.l.s4 1983009808
        %v3979 = vunpack.c.0.s8 %v3978
        %v3980 = vperm.slane %v3976, %v3979
        %v3981 = vrot.slane %v3971, 4
        %v3982 = vsel %vm1320, %v3981, %v3969
        %v3984 = vunpack.c.l.s4 1983009808
        %v3985 = vunpack.c.0.s8 %v3984
        %v3986 = vperm.slane %v3982, %v3985
        %v3987 = vsel %vm1320, %v3974, %v3963
        %v3989 = vunpack.c.l.s4 1983009808
        %v3990 = vunpack.c.0.s8 %v3989
        %v3991 = vperm.slane %v3987, %v3990
        %v3992 = vrot.slane %v3975, 4
        %v3993 = vsel %vm1320, %v3992, %v3973
        %v3995 = vunpack.c.l.s4 1983009808
        %v3996 = vunpack.c.0.s8 %v3995
        %v3997 = vperm.slane %v3993, %v3996
        %v3998 = vrot.slane %v3986, 4
        %v3999 = vsel %vm1320, %v3998, %v3980
        %v4000 = vrot.slane %v3980, 4
        %v4001 = vsel %vm1320, %v3986, %v4000
        %v4003 = vunpack.c.l.s4 1934713408
        %v4004 = vunpack.c.0.s8 %v4003
        %v4005 = vperm.slane %v3999, %v4004
        %v4007 = vunpack.c.l.s4 1934713408
        %v4008 = vunpack.c.0.s8 %v4007
        %v4009 = vperm.slane %v4001, %v4008
        %v4010 = vrot.slane %v3997, 4
        %v4011 = vsel %vm1320, %v4010, %v3991
        %v4012 = vrot.slane %v3991, 4
        %v4013 = vsel %vm1320, %v3997, %v4012
        %v4015 = vunpack.c.l.s4 1934713408
        %v4016 = vunpack.c.0.s8 %v4015
        %v4017 = vperm.slane %v4011, %v4016
        %v4019 = vunpack.c.l.s4 1934713408
        %v4020 = vunpack.c.0.s8 %v4019
        %v4021 = vperm.slane %v4013, %v4020
        %v4022 = vrot.slane %v4017, 4
        %v4023 = vsel %vm1320, %v4022, %v4005
        %v4024 = vrot.slane %v4005, 4
        %v4025 = vsel %vm1320, %v4017, %v4024
        %v4026 = vrot.slane %v4021, 4
        %v4027 = vsel %vm1320, %v4026, %v4009
        %v4028 = vrot.slane %v4009, 4
        %v4029 = vsel %vm1320, %v4021, %v4028
        %v4030 = vpack.c.bf16 %v4023, %v4023
        %v4031 = vpack.c.bf16 %v4025, %v4025
        %v4032 = vpack.c.bf16 %v4027, %v4027
        %v4033 = vpack.c.bf16 %v4029, %v4029
        %4035 = vrot.lane.b32.xlu0 %v3077, 96
        %v4036 = vpop.permute.xlu0 %4035
        %4038 = vrot.lane.b32.xlu0 %v3077, 64
        %v4039 = vpop.permute.xlu0 %4038
        %4041 = vrot.lane.b32.xlu0 %v3077, 32
        %v4042 = vpop.permute.xlu0 %4041
        %v4044 = vrot.slane %v4039, 4
        %v4045 = vsel %vm1320, %v4044, %v3077
        %v4046 = vrot.slane %v3077, 4
        %v4047 = vsel %vm1320, %v4039, %v4046
        %v4049 = vunpack.c.l.s4 1983009808
        %v4050 = vunpack.c.0.s8 %v4049
        %v4051 = vperm.slane %v4045, %v4050
        %v4053 = vunpack.c.l.s4 1983009808
        %v4054 = vunpack.c.0.s8 %v4053
        %v4055 = vperm.slane %v4047, %v4054
        %v4056 = vrot.slane %v4042, 4
        %v4057 = vsel %vm1320, %v4056, %v4036
        %v4058 = vrot.slane %v4036, 4
        %v4059 = vsel %vm1320, %v4042, %v4058
        %v4061 = vunpack.c.l.s4 1983009808
        %v4062 = vunpack.c.0.s8 %v4061
        %v4063 = vperm.slane %v4057, %v4062
        %v4065 = vunpack.c.l.s4 1983009808
        %v4066 = vunpack.c.0.s8 %v4065
        %v4067 = vperm.slane %v4059, %v4066
        %v4068 = vrot.slane %v4063, 4
        %v4069 = vsel %vm1320, %v4068, %v4051
        %v4070 = vrot.slane %v4051, 4
        %v4071 = vsel %vm1320, %v4063, %v4070
        %v4073 = vunpack.c.l.s4 1934713408
        %v4074 = vunpack.c.0.s8 %v4073
        %v4075 = vperm.slane %v4069, %v4074
        %v4077 = vunpack.c.l.s4 1934713408
        %v4078 = vunpack.c.0.s8 %v4077
        %v4079 = vperm.slane %v4071, %v4078
        %v4080 = vrot.slane %v4067, 4
        %v4081 = vsel %vm1320, %v4080, %v4055
        %v4082 = vrot.slane %v4055, 4
        %v4083 = vsel %vm1320, %v4067, %v4082
        %v4085 = vunpack.c.l.s4 1934713408
        %v4086 = vunpack.c.0.s8 %v4085
        %v4087 = vperm.slane %v4081, %v4086
        %v4089 = vunpack.c.l.s4 1934713408
        %v4090 = vunpack.c.0.s8 %v4089
        %v4091 = vperm.slane %v4083, %v4090
        %v4092 = vrot.slane %v4075, 4
        %v4093 = vsel %vm1320, 0.0, %v4092
        %v4094 = vrot.slane %v4079, 4
        %v4095 = vsel %vm1320, 0.0, %v4094
        %v4096 = vrot.slane %v4087, 4
        %v4097 = vsel %vm1320, 0.0, %v4096
        %v4098 = vrot.slane %v4091, 4
        %v4099 = vsel %vm1320, 0.0, %v4098
        %v4100 = vsel %vm1320, %v4094, %v4075
        %v4102 = vunpack.c.l.s4 1983009808
        %v4103 = vunpack.c.0.s8 %v4102
        %v4104 = vperm.slane %v4100, %v4103
        %v4105 = vrot.slane %v4095, 4
        %v4106 = vsel %vm1320, %v4105, %v4093
        %v4108 = vunpack.c.l.s4 1983009808
        %v4109 = vunpack.c.0.s8 %v4108
        %v4110 = vperm.slane %v4106, %v4109
        %v4111 = vsel %vm1320, %v4098, %v4087
        %v4113 = vunpack.c.l.s4 1983009808
        %v4114 = vunpack.c.0.s8 %v4113
        %v4115 = vperm.slane %v4111, %v4114
        %v4116 = vrot.slane %v4099, 4
        %v4117 = vsel %vm1320, %v4116, %v4097
        %v4119 = vunpack.c.l.s4 1983009808
        %v4120 = vunpack.c.0.s8 %v4119
        %v4121 = vperm.slane %v4117, %v4120
        %v4122 = vrot.slane %v4110, 4
        %v4123 = vsel %vm1320, %v4122, %v4104
        %v4124 = vrot.slane %v4104, 4
        %v4125 = vsel %vm1320, %v4110, %v4124
        %v4127 = vunpack.c.l.s4 1934713408
        %v4128 = vunpack.c.0.s8 %v4127
        %v4129 = vperm.slane %v4123, %v4128
        %v4131 = vunpack.c.l.s4 1934713408
        %v4132 = vunpack.c.0.s8 %v4131
        %v4133 = vperm.slane %v4125, %v4132
        %v4134 = vrot.slane %v4121, 4
        %v4135 = vsel %vm1320, %v4134, %v4115
        %v4136 = vrot.slane %v4115, 4
        %v4137 = vsel %vm1320, %v4121, %v4136
        %v4139 = vunpack.c.l.s4 1934713408
        %v4140 = vunpack.c.0.s8 %v4139
        %v4141 = vperm.slane %v4135, %v4140
        %v4143 = vunpack.c.l.s4 1934713408
        %v4144 = vunpack.c.0.s8 %v4143
        %v4145 = vperm.slane %v4137, %v4144
        %v4146 = vrot.slane %v4141, 4
        %v4147 = vsel %vm1320, %v4146, %v4129
        %v4148 = vrot.slane %v4129, 4
        %v4149 = vsel %vm1320, %v4141, %v4148
        %v4150 = vrot.slane %v4145, 4
        %v4151 = vsel %vm1320, %v4150, %v4133
        %v4152 = vrot.slane %v4133, 4
        %v4153 = vsel %vm1320, %v4145, %v4152
        %v4154 = vpack.c.bf16 %v4147, %v4147
        %v4155 = vpack.c.bf16 %v4149, %v4149
        %v4156 = vpack.c.bf16 %v4151, %v4151
        %v4157 = vpack.c.bf16 %v4153, %v4153
        %v4159 = vsel %vm1682, %v3906, 0
        %v4162 = vsel %vm1682, %v4030, 0
        %4164 = vmatpush.bf16.xpose.msra.mxu0 0
        %4165 = vmatpush.bf16.xpose.msra.mxu0 0
        %4166 = vmatpush.bf16.xpose.msra.mxu0 0
        %4167 = vmatpush.bf16.xpose.msra.mxu0 0
        %4168 = vmatpush.bf16.xpose.msra.mxu0 0
        %4169 = vmatpush.bf16.xpose.msra.mxu0 0
        %4170 = vmatpush.bf16.xpose.msra.mxu0 0
        %4171 = vmatpush.bf16.xpose.msra.mxu0 %v4162
        %4172 = vmatmul.bf16.gmra.mxu0 %v4159
        %v4173 = vpop.f32.mrf.mxu0
        %v4174 = vadd.f32 0.0, %v4173
        %v4175 = vpop.f32.mrf.mxu0
        %4176 = vdwg.mxu0
        %v4178 = vsel %vm1682, %v3907, 0
        %v4181 = vsel %vm1682, %v4031, 0
        %4183 = vmatpush.bf16.xpose.msra.mxu0 0
        %4184 = vmatpush.bf16.xpose.msra.mxu0 0
        %4185 = vmatpush.bf16.xpose.msra.mxu0 0
        %4186 = vmatpush.bf16.xpose.msra.mxu0 0
        %4187 = vmatpush.bf16.xpose.msra.mxu0 0
        %4188 = vmatpush.bf16.xpose.msra.mxu0 0
        %4189 = vmatpush.bf16.xpose.msra.mxu0 0
        %4190 = vmatpush.bf16.xpose.msra.mxu0 %v4181
        %4191 = vmatmul.bf16.gmra.mxu0 %v4178
        %v4192 = vpop.f32.mrf.mxu0
        %v4193 = vadd.f32 0.0, %v4192
        %v4194 = vpop.f32.mrf.mxu0
        %4195 = vdwg.mxu0
        %v4197 = vsel %vm1682, %v3908, 0
        %v4200 = vsel %vm1682, %v4032, 0
        %4202 = vmatpush.bf16.xpose.msra.mxu0 0
        %4203 = vmatpush.bf16.xpose.msra.mxu0 0
        %4204 = vmatpush.bf16.xpose.msra.mxu0 0
        %4205 = vmatpush.bf16.xpose.msra.mxu0 0
        %4206 = vmatpush.bf16.xpose.msra.mxu0 0
        %4207 = vmatpush.bf16.xpose.msra.mxu0 0
        %4208 = vmatpush.bf16.xpose.msra.mxu0 0
        %4209 = vmatpush.bf16.xpose.msra.mxu0 %v4200
        %4210 = vmatmul.bf16.gmra.mxu0 %v4197
        %v4211 = vpop.f32.mrf.mxu0
        %v4212 = vadd.f32 0.0, %v4211
        %v4213 = vpop.f32.mrf.mxu0
        %4214 = vdwg.mxu0
        %v4216 = vsel %vm1682, %v3909, 0
        %v4219 = vsel %vm1682, %v4033, 0
        %4221 = vmatpush.bf16.xpose.msra.mxu0 0
        %4222 = vmatpush.bf16.xpose.msra.mxu0 0
        %4223 = vmatpush.bf16.xpose.msra.mxu0 0
        %4224 = vmatpush.bf16.xpose.msra.mxu0 0
        %4225 = vmatpush.bf16.xpose.msra.mxu0 0
        %4226 = vmatpush.bf16.xpose.msra.mxu0 0
        %4227 = vmatpush.bf16.xpose.msra.mxu0 0
        %4228 = vmatpush.bf16.xpose.msra.mxu0 %v4219
        %4229 = vmatmul.bf16.gmra.mxu0 %v4216
        %v4230 = vpop.f32.mrf.mxu0
        %v4231 = vadd.f32 0.0, %v4230
        %v4232 = vpop.f32.mrf.mxu0
        %4233 = vdwg.mxu0
        %v4234 = vmul.f32 %v4174, 0.17677669
        %v4235 = vmul.f32 %v4193, 0.17677669
        %v4236 = vmul.f32 %v4212, 0.17677669
        %v4237 = vmul.f32 %v4231, 0.17677669
        %v4238 = vsel %vm3532, %v4234, -1e+30
        %v4239 = vsel %vm3532, %v4235, -1e+30
        %v4240 = vsel %vm3532, %v4236, -1e+30
        %v4241 = vsel %vm3532, %v4237, -1e+30
        %v4242 = vsel %vm1769, %v4238, -inf
        %4243 = vmax.xlane.f32.xlu0 %v4242
        %v4244 = vpop.xlane.xlu0 %4243
        %v4245 = vsel %vm1769, %v4239, -inf
        %4246 = vmax.xlane.f32.xlu0 %v4245
        %v4247 = vpop.xlane.xlu0 %4246
        %v4248 = vsel %vm1769, %v4240, -inf
        %4249 = vmax.xlane.f32.xlu0 %v4248
        %v4250 = vpop.xlane.xlu0 %4249
        %v4251 = vsel %vm1769, %v4241, -inf
        %4252 = vmax.xlane.f32.xlu0 %v4251
        %v4253 = vpop.xlane.xlu0 %4252
        %v4254 = vsub.f32 %v4238, %v4244
        %v4255 = vsub.f32 %v4239, %v4247
        %v4256 = vsub.f32 %v4240, %v4250
        %v4257 = vsub.f32 %v4241, %v4253
        %v4258 = vmul.f32 %v4254, 1.442695
        %v4259 = vpow.pop %v4258
        %v4260 = vmul.f32 %v4255, 1.442695
        %v4261 = vpow.pop %v4260
        %v4262 = vmul.f32 %v4256, 1.442695
        %v4263 = vpow.pop %v4262
        %v4264 = vmul.f32 %v4257, 1.442695
        %v4265 = vpow.pop %v4264
        %v4266 = vsel %vm1769, %v4259, 0.0
        %4267 = vadd.xlane.f32.xlu0 %v4266
        %v4268 = vpop.xlane.xlu0 %4267
        %v4269 = vsel %vm1769, %v4261, 0.0
        %4270 = vadd.xlane.f32.xlu0 %v4269
        %v4271 = vpop.xlane.xlu0 %4270
        %v4272 = vsel %vm1769, %v4263, 0.0
        %4273 = vadd.xlane.f32.xlu0 %v4272
        %v4274 = vpop.xlane.xlu0 %4273
        %v4275 = vsel %vm1769, %v4265, 0.0
        %4276 = vadd.xlane.f32.xlu0 %v4275
        %v4277 = vpop.xlane.xlu0 %4276
        %v4278 = vrcp.pop %v4268
        %v4279 = vrcp.pop %v4271
        %v4280 = vrcp.pop %v4274
        %v4281 = vrcp.pop %v4277
        %v4282 = vmul.f32 %v4259, %v4278
        %v4283 = vmul.f32 %v4261, %v4279
        %v4284 = vmul.f32 %v4263, %v4280
        %v4285 = vmul.f32 %v4265, %v4281
        %v4286 = vpack.c.bf16 %v4282, %v4282
        %v4287 = vpack.c.bf16 %v4283, %v4283
        %v4288 = vpack.c.bf16 %v4284, %v4284
        %v4289 = vpack.c.bf16 %v4285, %v4285
        %v4291 = vsel %vm1769, %v4286, 0
        %v4294 = vsel %vm1821, %v4154, 0
        %4296 = vmatpush.bf16.msra.mxu0 0
        %4297 = vmatpush.bf16.msra.mxu0 0
        %4298 = vmatpush.bf16.msra.mxu0 0
        %4299 = vmatpush.bf16.msra.mxu0 0
        %4300 = vmatpush.bf16.msra.mxu0 0
        %4301 = vmatpush.bf16.msra.mxu0 0
        %4302 = vmatpush.bf16.msra.mxu0 0
        %4303 = vmatpush.bf16.msra.mxu0 %v4294
        %4304 = vmatmul.bf16.gmra.mxu0 %v4291
        %v4305 = vpop.f32.mrf.mxu0
        %v4306 = vadd.f32 0.0, %v4305
        %v4307 = vpop.f32.mrf.mxu0
        %4308 = vdwg.mxu0
        %v4310 = vsel %vm1769, %v4287, 0
        %v4313 = vsel %vm1821, %v4155, 0
        %4315 = vmatpush.bf16.msra.mxu0 0
        %4316 = vmatpush.bf16.msra.mxu0 0
        %4317 = vmatpush.bf16.msra.mxu0 0
        %4318 = vmatpush.bf16.msra.mxu0 0
        %4319 = vmatpush.bf16.msra.mxu0 0
        %4320 = vmatpush.bf16.msra.mxu0 0
        %4321 = vmatpush.bf16.msra.mxu0 0
        %4322 = vmatpush.bf16.msra.mxu0 %v4313
        %4323 = vmatmul.bf16.gmra.mxu0 %v4310
        %v4324 = vpop.f32.mrf.mxu0
        %v4325 = vadd.f32 0.0, %v4324
        %v4326 = vpop.f32.mrf.mxu0
        %4327 = vdwg.mxu0
        %v4329 = vsel %vm1769, %v4288, 0
        %v4332 = vsel %vm1821, %v4156, 0
        %4334 = vmatpush.bf16.msra.mxu0 0
        %4335 = vmatpush.bf16.msra.mxu0 0
        %4336 = vmatpush.bf16.msra.mxu0 0
        %4337 = vmatpush.bf16.msra.mxu0 0
        %4338 = vmatpush.bf16.msra.mxu0 0
        %4339 = vmatpush.bf16.msra.mxu0 0
        %4340 = vmatpush.bf16.msra.mxu0 0
        %4341 = vmatpush.bf16.msra.mxu0 %v4332
        %4342 = vmatmul.bf16.gmra.mxu0 %v4329
        %v4343 = vpop.f32.mrf.mxu0
        %v4344 = vadd.f32 0.0, %v4343
        %v4345 = vpop.f32.mrf.mxu0
        %4346 = vdwg.mxu0
        %v4348 = vsel %vm1769, %v4289, 0
        %v4351 = vsel %vm1821, %v4157, 0
        %4353 = vmatpush.bf16.msra.mxu0 0
        %4354 = vmatpush.bf16.msra.mxu0 0
        %4355 = vmatpush.bf16.msra.mxu0 0
        %4356 = vmatpush.bf16.msra.mxu0 0
        %4357 = vmatpush.bf16.msra.mxu0 0
        %4358 = vmatpush.bf16.msra.mxu0 0
        %4359 = vmatpush.bf16.msra.mxu0 0
        %4360 = vmatpush.bf16.msra.mxu0 %v4351
        %4361 = vmatmul.bf16.gmra.mxu0 %v4348
        %v4362 = vpop.f32.mrf.mxu0
        %v4363 = vadd.f32 0.0, %v4362
        %v4364 = vpop.f32.mrf.mxu0
        %4365 = vdwg.mxu0
        %v4366 = vrot.slane %v4344, 4
        %v4367 = vsel %vm1320, %v4366, %v4306
        %v4368 = vrot.slane %v4306, 4
        %v4369 = vsel %vm1320, %v4344, %v4368
        %v4371 = vunpack.c.l.s4 1983009808
        %v4372 = vunpack.c.0.s8 %v4371
        %v4373 = vperm.slane %v4367, %v4372
        %v4375 = vunpack.c.l.s4 1983009808
        %v4376 = vunpack.c.0.s8 %v4375
        %v4377 = vperm.slane %v4369, %v4376
        %v4378 = vrot.slane %v4363, 4
        %v4379 = vsel %vm1320, %v4378, %v4325
        %v4380 = vrot.slane %v4325, 4
        %v4381 = vsel %vm1320, %v4363, %v4380
        %v4383 = vunpack.c.l.s4 1983009808
        %v4384 = vunpack.c.0.s8 %v4383
        %v4385 = vperm.slane %v4379, %v4384
        %v4387 = vunpack.c.l.s4 1983009808
        %v4388 = vunpack.c.0.s8 %v4387
        %v4389 = vperm.slane %v4381, %v4388
        %v4390 = vrot.slane %v4385, 4
        %v4391 = vsel %vm1320, %v4390, %v4373
        %v4392 = vrot.slane %v4373, 4
        %v4393 = vsel %vm1320, %v4385, %v4392
        %v4395 = vunpack.c.l.s4 1934713408
        %v4396 = vunpack.c.0.s8 %v4395
        %v4397 = vperm.slane %v4391, %v4396
        %v4399 = vunpack.c.l.s4 1934713408
        %v4400 = vunpack.c.0.s8 %v4399
        %v4401 = vperm.slane %v4393, %v4400
        %v4402 = vrot.slane %v4389, 4
        %v4403 = vsel %vm1320, %v4402, %v4377
        %v4404 = vrot.slane %v4377, 4
        %v4405 = vsel %vm1320, %v4389, %v4404
        %v4407 = vunpack.c.l.s4 1934713408
        %v4408 = vunpack.c.0.s8 %v4407
        %v4409 = vperm.slane %v4403, %v4408
        %v4411 = vunpack.c.l.s4 1934713408
        %v4412 = vunpack.c.0.s8 %v4411
        %v4413 = vperm.slane %v4405, %v4412
        %v4414 = vrot.slane %v4397, 4
        %v4415 = vsel %vm1320, 0.0, %v4414
        %v4416 = vrot.slane %v4401, 4
        %v4417 = vsel %vm1320, 0.0, %v4416
        %v4418 = vrot.slane %v4409, 4
        %v4419 = vsel %vm1320, 0.0, %v4418
        %v4420 = vrot.slane %v4413, 4
        %v4421 = vsel %vm1320, 0.0, %v4420
        %v4422 = vsel %vm1320, %v4416, %v4397
        %v4424 = vunpack.c.l.s4 1983009808
        %v4425 = vunpack.c.0.s8 %v4424
        %v4426 = vperm.slane %v4422, %v4425
        %v4427 = vrot.slane %v4417, 4
        %v4428 = vsel %vm1320, %v4427, %v4415
        %v4430 = vunpack.c.l.s4 1983009808
        %v4431 = vunpack.c.0.s8 %v4430
        %v4432 = vperm.slane %v4428, %v4431
        %v4433 = vsel %vm1320, %v4420, %v4409
        %v4435 = vunpack.c.l.s4 1983009808
        %v4436 = vunpack.c.0.s8 %v4435
        %v4437 = vperm.slane %v4433, %v4436
        %v4438 = vrot.slane %v4421, 4
        %v4439 = vsel %vm1320, %v4438, %v4419
        %v4441 = vunpack.c.l.s4 1983009808
        %v4442 = vunpack.c.0.s8 %v4441
        %v4443 = vperm.slane %v4439, %v4442
        %v4444 = vrot.slane %v4432, 4
        %v4445 = vsel %vm1320, %v4444, %v4426
        %v4446 = vrot.slane %v4426, 4
        %v4447 = vsel %vm1320, %v4432, %v4446
        %v4449 = vunpack.c.l.s4 1934713408
        %v4450 = vunpack.c.0.s8 %v4449
        %v4451 = vperm.slane %v4445, %v4450
        %v4453 = vunpack.c.l.s4 1934713408
        %v4454 = vunpack.c.0.s8 %v4453
        %v4455 = vperm.slane %v4447, %v4454
        %v4456 = vrot.slane %v4443, 4
        %v4457 = vsel %vm1320, %v4456, %v4437
        %v4458 = vrot.slane %v4437, 4
        %v4459 = vsel %vm1320, %v4443, %v4458
        %v4461 = vunpack.c.l.s4 1934713408
        %v4462 = vunpack.c.0.s8 %v4461
        %v4463 = vperm.slane %v4457, %v4462
        %v4465 = vunpack.c.l.s4 1934713408
        %v4466 = vunpack.c.0.s8 %v4465
        %v4467 = vperm.slane %v4459, %v4466
        %v4468 = vrot.slane %v4463, 4
        %v4469 = vsel %vm1320, %v4468, %v4451
        %v4470 = vrot.slane %v4451, 4
        %v4471 = vsel %vm1320, %v4463, %v4470
        %v4472 = vrot.slane %v4467, 4
        %v4473 = vsel %vm1320, %v4472, %v4455
        %v4474 = vrot.slane %v4455, 4
        %v4475 = vsel %vm1320, %v4467, %v4474
        %4477 = vrot.lane.b32.xlu0 %v4471, 32
        %v4478 = vpop.permute.xlu0 %4477
        %4481 = vrot.lane.b32.xlu0 %v4473, 64
        %v4482 = vpop.permute.xlu0 %4481
        %4485 = vrot.lane.b32.xlu0 %v4475, 96
        %v4486 = vpop.permute.xlu0 %4485
        %v4488 = vsel %vm1682, %v4469, %v4478
        %v4489 = vsel %vm2018, %v4488, %v4482
        %v4490 = vsel %vm2020, %v4489, %v4486
        %v4491 = vpack.c.bf16 %v4490, %v3785
        %v4492 = vld [vmem:[%s895] sm:$0xf]
        %v4493 = vld [vmem:[%s895 + $0x4] sm:$0xf]
        %v4494 = vld [vmem:[%s895 + $0x8] sm:$0xf]
        %v4495 = vld [vmem:[%s895 + $0xc] sm:$0xf]
        %v4496 = vld [vmem:[%s895 + $0x10] sm:$0xf]
        %v4497 = vld [vmem:[%s895 + $0x14] sm:$0xf]
        %v4498 = vld [vmem:[%s895 + $0x18] sm:$0xf]
        %v4499 = vld [vmem:[%s895 + $0x1c] sm:$0xf]
        %v4500 = vld [vmem:[%s895 + $0x20] sm:$0xf]
        %v4501 = vld [vmem:[%s895 + $0x24] sm:$0xf]
        %v4502 = vld [vmem:[%s895 + $0x28] sm:$0xf]
        %v4503 = vld [vmem:[%s895 + $0x2c] sm:$0xf]
        %v4504 = vld [vmem:[%s895 + $0x30] sm:$0xf]
        %v4505 = vld [vmem:[%s895 + $0x34] sm:$0xf]
        %v4506 = vld [vmem:[%s895 + $0x38] sm:$0xf]
        %v4507 = vld [vmem:[%s895 + $0x3c] sm:$0xf]
        %v4508 = vld [vmem:[%s1059] sm:$0x1]
        %v4510 = vperm.slane %v4508, 0
        %v4528 = vunpack.c.l.b16 %v4492
        %v4529 = vunpack.c.l.b16 %v4493
        %v4530 = vunpack.c.l.b16 %v4494
        %v4531 = vunpack.c.l.b16 %v4495
        %v4532 = vunpack.c.l.b16 %v4496
        %v4533 = vunpack.c.l.b16 %v4497
        %v4534 = vunpack.c.l.b16 %v4498
        %v4535 = vunpack.c.l.b16 %v4499
        %v4536 = vunpack.c.l.b16 %v4500
        %v4537 = vunpack.c.l.b16 %v4501
        %v4538 = vunpack.c.l.b16 %v4502
        %v4539 = vunpack.c.l.b16 %v4503
        %v4540 = vunpack.c.l.b16 %v4504
        %v4541 = vunpack.c.l.b16 %v4505
        %v4542 = vunpack.c.l.b16 %v4506
        %v4543 = vunpack.c.l.b16 %v4507
        %v4544 = vpack.c.b16 %v4529, %v4528
        %v4545 = vpack.c.b16 %v4531, %v4530
        %v4546 = vpack.c.b16 %v4533, %v4532
        %v4547 = vpack.c.b16 %v4535, %v4534
        %v4548 = vpack.c.b16 %v4537, %v4536
        %v4549 = vpack.c.b16 %v4539, %v4538
        %v4550 = vpack.c.b16 %v4541, %v4540
        %v4551 = vpack.c.b16 %v4543, %v4542
        %4560 = vmatpush.bf16.msra.mxu0 %v4551
        %4561 = vmatpush.bf16.msra.mxu0 %v4550
        %4562 = vmatpush.bf16.msra.mxu0 %v4549
        %4563 = vmatpush.bf16.msra.mxu0 %v4548
        %4564 = vmatpush.bf16.msra.mxu0 %v4547
        %4565 = vmatpush.bf16.msra.mxu0 %v4546
        %4566 = vmatpush.bf16.msra.mxu0 %v4545
        %4567 = vmatpush.bf16.msra.mxu0 %v4544
        %4568 = vmatmul.bf16.gmra.mxu0 %v4491
        %v4569 = vpop.f32.mrf.mxu0
        %v4570 = vadd.f32 %v4510, %v4569
        %v4571 = vpop.f32.mrf.mxu0
        %v4572 = vadd.f32 %v4510, %v4571
        %4573 = vdwg.mxu0
        %v4574 = vadd.f32 %v2863, %v4570
        %v4575 = vadd.f32 %v2864, %v4572
        %4576 = vadd.xlane.f32.xlu0 %v4574
        %v4577 = vpop.xlane.xlu0 %4576
        %4578 = vadd.xlane.f32.xlu0 %v4575
        %v4579 = vpop.xlane.xlu0 %4578
        %v4580 = vmul.f32 %v4577, %v2822
        %v4581 = vmul.f32 %v4579, %v2822
        %v4582 = vsub.f32 %v4574, %v4580
        %v4583 = vsub.f32 %v4575, %v4581
        %v4584 = vmul.f32 %v4582, %v4582
        %v4585 = vmul.f32 %v4583, %v4583
        %4586 = vadd.xlane.f32.xlu0 %v4584
        %v4587 = vpop.xlane.xlu0 %4586
        %4588 = vadd.xlane.f32.xlu0 %v4585
        %v4589 = vpop.xlane.xlu0 %4588
        %v4590 = vmul.f32 %v4587, %v2822
        %v4591 = vmul.f32 %v4589, %v2822
        %v4592 = vadd.f32 %v4590, 1e-05
        %v4593 = vadd.f32 %v4591, 1e-05
        %v4594 = vrsqrt.pop %v4592
        %v4595 = vmul.f32 %v4594, %v4592
        %v4596 = vmul.f32 %v4595, %v4594
        %v4597 = vmul.f32 0.5, %v4596
        %v4598 = vsub.f32 1.5, %v4597
        %v4599 = vmul.f32 %v4594, %v4598
        %vm4600 = vweird.f32 %v4592
        %vm4601 = vweird.f32 %v4594
        %vm4602 = vmor %vm4600, %vm4601
        %v4603 = vsel %vm4602, %v4594, %v4599
        %v4604 = vrsqrt.pop %v4593
        %v4605 = vmul.f32 %v4604, %v4593
        %v4606 = vmul.f32 %v4605, %v4604
        %v4607 = vmul.f32 0.5, %v4606
        %v4608 = vsub.f32 1.5, %v4607
        %v4609 = vmul.f32 %v4604, %v4608
        %vm4610 = vweird.f32 %v4593
        %vm4611 = vweird.f32 %v4604
        %vm4612 = vmor %vm4610, %vm4611
        %v4613 = vsel %vm4612, %v4604, %v4609
        %v4614 = vmul.f32 %v4582, %v4603
        %v4615 = vmul.f32 %v4583, %v4613
        %v4616 = vperm.slane %v1089, 1
        %v4617 = vmul.f32 %v4614, %v4616
        %v4618 = vmul.f32 %v4615, %v4616
        %v4619 = vperm.slane %v1090, 1
        %v4620 = vadd.f32 %v4617, %v4619
        %v4621 = vadd.f32 %v4618, %v4619
        %v4622 = vpack.c.bf16 %v4621, %v4620
        %v4623 = vld [vmem:[%s905] sm:$0xff]
        %v4624 = vld [vmem:[%s905 + $0x8] sm:$0xff]
        %v4625 = vld [vmem:[%s905 + $0x10] sm:$0xff]
        %v4626 = vld [vmem:[%s905 + $0x18] sm:$0xff]
        %v4627 = vld [vmem:[%s905 + $0x20] sm:$0xff]
        %v4628 = vld [vmem:[%s905 + $0x28] sm:$0xff]
        %v4629 = vld [vmem:[%s905 + $0x30] sm:$0xff]
        %v4630 = vld [vmem:[%s905 + $0x38] sm:$0xff]
        %v4631 = vld [vmem:[%s905 + $0x40] sm:$0xff]
        %v4632 = vld [vmem:[%s905 + $0x48] sm:$0xff]
        %v4633 = vld [vmem:[%s905 + $0x50] sm:$0xff]
        %v4634 = vld [vmem:[%s905 + $0x58] sm:$0xff]
        %v4635 = vld [vmem:[%s905 + $0x60] sm:$0xff]
        %v4636 = vld [vmem:[%s905 + $0x68] sm:$0xff]
        %v4637 = vld [vmem:[%s905 + $0x70] sm:$0xff]
        %v4638 = vld [vmem:[%s905 + $0x78] sm:$0xff]
        %v4639 = vld [vmem:[%s1063] sm:$0x3]
        %v4641 = vperm.slane %v4639, 0
        %v4642 = vperm.slane %v4639, 1
        %v4661 = vunpack.c.l.b16 %v4623
        %v4662 = vunpack.c.h.b16 %v4623
        %v4663 = vunpack.c.l.b16 %v4624
        %v4664 = vunpack.c.h.b16 %v4624
        %v4665 = vunpack.c.l.b16 %v4625
        %v4666 = vunpack.c.h.b16 %v4625
        %v4667 = vunpack.c.l.b16 %v4626
        %v4668 = vunpack.c.h.b16 %v4626
        %v4669 = vunpack.c.l.b16 %v4627
        %v4670 = vunpack.c.h.b16 %v4627
        %v4671 = vunpack.c.l.b16 %v4628
        %v4672 = vunpack.c.h.b16 %v4628
        %v4673 = vunpack.c.l.b16 %v4629
        %v4674 = vunpack.c.h.b16 %v4629
        %v4675 = vunpack.c.l.b16 %v4630
        %v4676 = vunpack.c.h.b16 %v4630
        %v4677 = vunpack.c.l.b16 %v4631
        %v4678 = vunpack.c.h.b16 %v4631
        %v4679 = vunpack.c.l.b16 %v4632
        %v4680 = vunpack.c.h.b16 %v4632
        %v4681 = vunpack.c.l.b16 %v4633
        %v4682 = vunpack.c.h.b16 %v4633
        %v4683 = vunpack.c.l.b16 %v4634
        %v4684 = vunpack.c.h.b16 %v4634
        %v4685 = vunpack.c.l.b16 %v4635
        %v4686 = vunpack.c.h.b16 %v4635
        %v4687 = vunpack.c.l.b16 %v4636
        %v4688 = vunpack.c.h.b16 %v4636
        %v4689 = vunpack.c.l.b16 %v4637
        %v4690 = vunpack.c.h.b16 %v4637
        %v4691 = vunpack.c.l.b16 %v4638
        %v4692 = vunpack.c.h.b16 %v4638
        %v4693 = vpack.c.b16 %v4663, %v4661
        %v4694 = vpack.c.b16 %v4664, %v4662
        %v4695 = vpack.c.b16 %v4667, %v4665
        %v4696 = vpack.c.b16 %v4668, %v4666
        %v4697 = vpack.c.b16 %v4671, %v4669
        %v4698 = vpack.c.b16 %v4672, %v4670
        %v4699 = vpack.c.b16 %v4675, %v4673
        %v4700 = vpack.c.b16 %v4676, %v4674
        %v4701 = vpack.c.b16 %v4679, %v4677
        %v4702 = vpack.c.b16 %v4680, %v4678
        %v4703 = vpack.c.b16 %v4683, %v4681
        %v4704 = vpack.c.b16 %v4684, %v4682
        %v4705 = vpack.c.b16 %v4687, %v4685
        %v4706 = vpack.c.b16 %v4688, %v4686
        %v4707 = vpack.c.b16 %v4691, %v4689
        %v4708 = vpack.c.b16 %v4692, %v4690
        %4725 = vmatpush.bf16.msra.mxu0 %v4707
        %4726 = vmatpush.bf16.msra.mxu0 %v4705
        %4727 = vmatpush.bf16.msra.mxu0 %v4703
        %4728 = vmatpush.bf16.msra.mxu0 %v4701
        %4729 = vmatpush.bf16.msra.mxu0 %v4699
        %4730 = vmatpush.bf16.msra.mxu0 %v4697
        %4731 = vmatpush.bf16.msra.mxu0 %v4695
        %4732 = vmatpush.bf16.msra.mxu0 %v4693
        %4733 = vmatmul.bf16.gmra.mxu0 %v4622
        %v4734 = vpop.f32.mrf.mxu0
        %v4735 = vadd.f32 %v4641, %v4734
        %v4736 = vpop.f32.mrf.mxu0
        %v4737 = vadd.f32 %v4641, %v4736
        %4738 = vdwg.mxu0
        %4739 = vmatpush.bf16.msra.mxu0 %v4708
        %4740 = vmatpush.bf16.msra.mxu0 %v4706
        %4741 = vmatpush.bf16.msra.mxu0 %v4704
        %4742 = vmatpush.bf16.msra.mxu0 %v4702
        %4743 = vmatpush.bf16.msra.mxu0 %v4700
        %4744 = vmatpush.bf16.msra.mxu0 %v4698
        %4745 = vmatpush.bf16.msra.mxu0 %v4696
        %4746 = vmatpush.bf16.msra.mxu0 %v4694
        %4747 = vmatmul.bf16.gmra.mxu0 %v4622
        %v4748 = vpop.f32.mrf.mxu0
        %v4749 = vadd.f32 %v4642, %v4748
        %v4750 = vpop.f32.mrf.mxu0
        %v4751 = vadd.f32 %v4642, %v4750
        %4752 = vdwg.mxu0
        %v4753 = vmax.f32 %v4735, 0.0
        %v4754 = vmax.f32 %v4749, 0.0
        %v4755 = vmax.f32 %v4737, 0.0
        %v4756 = vmax.f32 %v4751, 0.0
        %v4757 = vpack.c.bf16 %v4755, %v4753
        %v4758 = vpack.c.bf16 %v4756, %v4754
        %v4759 = vld [vmem:[%s915] sm:$0xf]
        %v4760 = vld [vmem:[%s915 + $0x4] sm:$0xf]
        %v4761 = vld [vmem:[%s915 + $0x8] sm:$0xf]
        %v4762 = vld [vmem:[%s915 + $0xc] sm:$0xf]
        %v4763 = vld [vmem:[%s915 + $0x10] sm:$0xf]
        %v4764 = vld [vmem:[%s915 + $0x14] sm:$0xf]
        %v4765 = vld [vmem:[%s915 + $0x18] sm:$0xf]
        %v4766 = vld [vmem:[%s915 + $0x1c] sm:$0xf]
        %v4767 = vld [vmem:[%s915 + $0x20] sm:$0xf]
        %v4768 = vld [vmem:[%s915 + $0x24] sm:$0xf]
        %v4769 = vld [vmem:[%s915 + $0x28] sm:$0xf]
        %v4770 = vld [vmem:[%s915 + $0x2c] sm:$0xf]
        %v4771 = vld [vmem:[%s915 + $0x30] sm:$0xf]
        %v4772 = vld [vmem:[%s915 + $0x34] sm:$0xf]
        %v4773 = vld [vmem:[%s915 + $0x38] sm:$0xf]
        %v4774 = vld [vmem:[%s915 + $0x3c] sm:$0xf]
        %v4775 = vld [vmem:[%s915 + $0x40] sm:$0xf]
        %v4776 = vld [vmem:[%s915 + $0x44] sm:$0xf]
        %v4777 = vld [vmem:[%s915 + $0x48] sm:$0xf]
        %v4778 = vld [vmem:[%s915 + $0x4c] sm:$0xf]
        %v4779 = vld [vmem:[%s915 + $0x50] sm:$0xf]
        %v4780 = vld [vmem:[%s915 + $0x54] sm:$0xf]
        %v4781 = vld [vmem:[%s915 + $0x58] sm:$0xf]
        %v4782 = vld [vmem:[%s915 + $0x5c] sm:$0xf]
        %v4783 = vld [vmem:[%s915 + $0x60] sm:$0xf]
        %v4784 = vld [vmem:[%s915 + $0x64] sm:$0xf]
        %v4785 = vld [vmem:[%s915 + $0x68] sm:$0xf]
        %v4786 = vld [vmem:[%s915 + $0x6c] sm:$0xf]
        %v4787 = vld [vmem:[%s915 + $0x70] sm:$0xf]
        %v4788 = vld [vmem:[%s915 + $0x74] sm:$0xf]
        %v4789 = vld [vmem:[%s915 + $0x78] sm:$0xf]
        %v4790 = vld [vmem:[%s915 + $0x7c] sm:$0xf]
        %v4791 = vld [vmem:[%s1066] sm:$0x1]
        %v4793 = vperm.slane %v4791, 0
        %v4827 = vunpack.c.l.b16 %v4759
        %v4828 = vunpack.c.l.b16 %v4760
        %v4829 = vunpack.c.l.b16 %v4761
        %v4830 = vunpack.c.l.b16 %v4762
        %v4831 = vunpack.c.l.b16 %v4763
        %v4832 = vunpack.c.l.b16 %v4764
        %v4833 = vunpack.c.l.b16 %v4765
        %v4834 = vunpack.c.l.b16 %v4766
        %v4835 = vunpack.c.l.b16 %v4767
        %v4836 = vunpack.c.l.b16 %v4768
        %v4837 = vunpack.c.l.b16 %v4769
        %v4838 = vunpack.c.l.b16 %v4770
        %v4839 = vunpack.c.l.b16 %v4771
        %v4840 = vunpack.c.l.b16 %v4772
        %v4841 = vunpack.c.l.b16 %v4773
        %v4842 = vunpack.c.l.b16 %v4774
        %v4843 = vunpack.c.l.b16 %v4775
        %v4844 = vunpack.c.l.b16 %v4776
        %v4845 = vunpack.c.l.b16 %v4777
        %v4846 = vunpack.c.l.b16 %v4778
        %v4847 = vunpack.c.l.b16 %v4779
        %v4848 = vunpack.c.l.b16 %v4780
        %v4849 = vunpack.c.l.b16 %v4781
        %v4850 = vunpack.c.l.b16 %v4782
        %v4851 = vunpack.c.l.b16 %v4783
        %v4852 = vunpack.c.l.b16 %v4784
        %v4853 = vunpack.c.l.b16 %v4785
        %v4854 = vunpack.c.l.b16 %v4786
        %v4855 = vunpack.c.l.b16 %v4787
        %v4856 = vunpack.c.l.b16 %v4788
        %v4857 = vunpack.c.l.b16 %v4789
        %v4858 = vunpack.c.l.b16 %v4790
        %v4859 = vpack.c.b16 %v4828, %v4827
        %v4860 = vpack.c.b16 %v4830, %v4829
        %v4861 = vpack.c.b16 %v4832, %v4831
        %v4862 = vpack.c.b16 %v4834, %v4833
        %v4863 = vpack.c.b16 %v4836, %v4835
        %v4864 = vpack.c.b16 %v4838, %v4837
        %v4865 = vpack.c.b16 %v4840, %v4839
        %v4866 = vpack.c.b16 %v4842, %v4841
        %v4867 = vpack.c.b16 %v4844, %v4843
        %v4868 = vpack.c.b16 %v4846, %v4845
        %v4869 = vpack.c.b16 %v4848, %v4847
        %v4870 = vpack.c.b16 %v4850, %v4849
        %v4871 = vpack.c.b16 %v4852, %v4851
        %v4872 = vpack.c.b16 %v4854, %v4853
        %v4873 = vpack.c.b16 %v4856, %v4855
        %v4874 = vpack.c.b16 %v4858, %v4857
        %4891 = vmatpush.bf16.msra.mxu0 %v4866
        %4892 = vmatpush.bf16.msra.mxu0 %v4865
        %4893 = vmatpush.bf16.msra.mxu0 %v4864
        %4894 = vmatpush.bf16.msra.mxu0 %v4863
        %4895 = vmatpush.bf16.msra.mxu0 %v4862
        %4896 = vmatpush.bf16.msra.mxu0 %v4861
        %4897 = vmatpush.bf16.msra.mxu0 %v4860
        %4898 = vmatpush.bf16.msra.mxu0 %v4859
        %4899 = vmatmul.bf16.gmra.mxu0 %v4757
        %v4900 = vpop.f32.mrf.mxu0
        %v4901 = vadd.f32 %v4793, %v4900
        %v4902 = vpop.f32.mrf.mxu0
        %v4903 = vadd.f32 %v4793, %v4902
        %4904 = vdwg.mxu0
        %4905 = vmatpush.bf16.msra.mxu0 %v4874
        %4906 = vmatpush.bf16.msra.mxu0 %v4873
        %4907 = vmatpush.bf16.msra.mxu0 %v4872
        %4908 = vmatpush.bf16.msra.mxu0 %v4871
        %4909 = vmatpush.bf16.msra.mxu0 %v4870
        %4910 = vmatpush.bf16.msra.mxu0 %v4869
        %4911 = vmatpush.bf16.msra.mxu0 %v4868
        %4912 = vmatpush.bf16.msra.mxu0 %v4867
        %4913 = vmatmul.bf16.gmra.mxu0 %v4758
        %v4914 = vpop.f32.mrf.mxu0
        %v4915 = vadd.f32 %v4901, %v4914
        %v4916 = vpop.f32.mrf.mxu0
        %v4917 = vadd.f32 %v4903, %v4916
        %4918 = vdwg.mxu0
        %v4919 = vadd.f32 %v4620, %v4915
        %v4920 = vadd.f32 %v4621, %v4917
        %4921 = vadd.xlane.f32.xlu0 %v4919
        %v4922 = vpop.xlane.xlu0 %4921
        %4923 = vadd.xlane.f32.xlu0 %v4920
        %v4924 = vpop.xlane.xlu0 %4923
        %v4925 = vmul.f32 %v4922, %v2822
        %v4926 = vmul.f32 %v4924, %v2822
        %v4927 = vsub.f32 %v4919, %v4925
        %v4928 = vsub.f32 %v4920, %v4926
        %v4929 = vmul.f32 %v4927, %v4927
        %v4930 = vmul.f32 %v4928, %v4928
        %4931 = vadd.xlane.f32.xlu0 %v4929
        %v4932 = vpop.xlane.xlu0 %4931
        %4933 = vadd.xlane.f32.xlu0 %v4930
        %v4934 = vpop.xlane.xlu0 %4933
        %v4935 = vmul.f32 %v4932, %v2822
        %v4936 = vmul.f32 %v4934, %v2822
        %v4937 = vadd.f32 %v4935, 1e-05
        %v4938 = vadd.f32 %v4936, 1e-05
        %v4939 = vrsqrt.pop %v4937
        %v4940 = vmul.f32 %v4939, %v4937
        %v4941 = vmul.f32 %v4940, %v4939
        %v4942 = vmul.f32 0.5, %v4941
        %v4943 = vsub.f32 1.5, %v4942
        %v4944 = vmul.f32 %v4939, %v4943
        %vm4945 = vweird.f32 %v4937
        %vm4946 = vweird.f32 %v4939
        %vm4947 = vmor %vm4945, %vm4946
        %v4948 = vsel %vm4947, %v4939, %v4944
        %v4949 = vrsqrt.pop %v4938
        %v4950 = vmul.f32 %v4949, %v4938
        %v4951 = vmul.f32 %v4950, %v4949
        %v4952 = vmul.f32 0.5, %v4951
        %v4953 = vsub.f32 1.5, %v4952
        %v4954 = vmul.f32 %v4949, %v4953
        %vm4955 = vweird.f32 %v4938
        %vm4956 = vweird.f32 %v4949
        %vm4957 = vmor %vm4955, %vm4956
        %v4958 = vsel %vm4957, %v4949, %v4954
        %v4959 = vmul.f32 %v4927, %v4948
        %v4960 = vmul.f32 %v4928, %v4958
        %v4961 = vperm.slane %v1089, 2
        %v4962 = vmul.f32 %v4959, %v4961
        %v4963 = vmul.f32 %v4960, %v4961
        %v4964 = vperm.slane %v1090, 2
        %v4965 = vadd.f32 %v4962, %v4964
        %v4966 = vadd.f32 %v4963, %v4964
        %4967 = vst [vmem:[#allocation2] sm:$0xff] %v4965
        %4968 = vst [vmem:[#allocation2 + $0x8] sm:$0xff] %v4966
        %p4969 = scmp.eq.s32.totalorder %s52, 1
        // Predicated region
        $region133: #{tpu_custom_call.1} parent=91 // pred_check
          %p4970 = pneg %p4969
        $region134: #{tpu_custom_call.1} parent=91 // pred_check_branch
          %4972 = sbr.rel (%p4970) target = $region136
        $region135: #{tpu_custom_call.1} parent=91 // pred_region
          %4973 = vst [vmem:[%s1040] sm:$0xff] %v4965
          %4974 = vst [vmem:[%s1040 + $0x8] sm:$0xff] %v4966
        $region136: #{tpu_custom_call.1} parent=91 // pred_fallthru
          _
        %s4975 = sand.u32 %s535, 1
        %s4976 = scalar_lea.sflag [#allocation5], %s4975
        %s4977 = sand.u32 %s535, 1
        %s4978 = smul.addr %s4977, 16
        %s4979 = scalar_lea.vmem [#allocation18], %s4978
        // Predicated region
        $region137: #{tpu_custom_call.1} parent=91 // pred_check
          %p4980 = pneg %p545
        $region138: #{tpu_custom_call.1} parent=91 // pred_check_branch
          %4982 = sbr.rel (%p4980) target = $region140
        $region139: #{tpu_custom_call.1} parent=91 // pred_region
          %s4983 = smul.u32 2, %s51
          %4985 = vsyncadd %s4976, 0
          %s4986 = smul.addr %s4983, 8
          %s4987 = scalar_lea.hbm %s18, %s4986
          %s4988 = sshll.u32 %s4979, 4
          %s4989 = int_to_ptr.vmem [resolvable:$true] %s4988
          %s4990 = sshll.u32 %s4987, 4
          %s4991 = int_to_ptr.hbm [resolvable:$true] %s4990
          %4996 = dma.vmem_to_hbm [thread:$0]  %s4989, 256, %s4991, %s4976, 128, 128, 8
        $region140: #{tpu_custom_call.1} parent=91 // pred_fallthru
          _
      $region92: #{tpu_custom_call.1} parent=5 // pred_fallthru
        _
      %p4997 = scmp.le.s32.totalorder 2, %s42
      // Predicated region
      $region141: #{tpu_custom_call.1} parent=5 // pred_check
        %p4998 = pneg %p4997
      $region142: #{tpu_custom_call.1} parent=5 // pred_check_branch
        %5000 = sbr.rel (%p4998) target = $region144
      $region143: #{tpu_custom_call.1} parent=5 // pred_region
        %s5001 = ssub.s32 %s42, 2
        // Predicated region
        $region145: #{tpu_custom_call.1} parent=143 // pred_check
          %p5002 = pneg %p551
        $region146: #{tpu_custom_call.1} parent=143 // pred_check_branch
          %5004 = sbr.rel (%p5002) target = $region148
        $region147: #{tpu_custom_call.1} parent=143 // pred_region
          %s5005 = sand.u32 %s536, 1
          %s5006 = scalar_lea.sflag [#allocation5], %s5005
          %s5007 = sand.u32 %s536, 1
          %s5008 = smul.addr %s5007, 16
          %s5009 = scalar_lea.vmem [#allocation18], %s5008
          %5011 = dma.done %s5006, 256
        $region148: #{tpu_custom_call.1} parent=143 // pred_fallthru
          _
      $region144: #{tpu_custom_call.1} parent=5 // pred_fallthru
        _
    $region6: #{tpu_custom_call.1} parent=1 // loop_footer
      %s46 = sadd.s32 1, %s42
    $region7: #{tpu_custom_call.1} parent=1 // loop_footer_branch
      %41 = sbr.rel target = $region3
    $region8: #{tpu_custom_call.1} parent=1 // loop_exit
      _
    %5012 = vsyncpa [#allocation4], 1
    %s5013 = scalar_lea.sflag [#allocation4], 1
    %5014 = vsyncpa %s5013, 1
    %5015 = vsyncpa [#allocation7], 1
    %s5016 = scalar_lea.sflag [#allocation7], 1
    %5017 = vsyncpa %s5016, 1
    %5018 = vsyncpa [#allocation10], 1
    %s5019 = scalar_lea.sflag [#allocation10], 1
    %5020 = vsyncpa %s5019, 1
    %5021 = vsyncpa [#allocation13], 1
    %s5022 = scalar_lea.sflag [#allocation13], 1
    %5023 = vsyncpa %s5022, 1
    %5024 = vsyncpa [#allocation16], 1
    %s5025 = scalar_lea.sflag [#allocation16], 1
    %5026 = vsyncpa %s5025, 1
    %5027 = vsyncpa [#allocation5], 1
    %s5028 = scalar_lea.sflag [#allocation5], 1
    %5029 = vsyncpa %s5028, 1

</llo_original>
